<compile_context>
chip_gen: v7x
topology: tpu7x:2x2x1
jax: 0.10.0
libtpu: 0.0.40
codegen_flags: <defaults>
</compile_context>

<pallas_src>
import math
from functools import partial

import jax
import jax.numpy as jnp
from jax import lax
from jax.experimental import pallas as pl
from jax.experimental.pallas import tpu as pltpu

EPSILON = 1e-6


def _mm(a, b):
    # bf16 MXU inputs, f32 accumulation.
    return jnp.dot(a.astype(jnp.bfloat16), b.astype(jnp.bfloat16),
                   preferred_element_type=jnp.float32)


def _silu(x):
    return x * jax.nn.sigmoid(x)


# -----------------------------------------------------------------------------
# Fused forward kernel.  All operands are full-array VMEM blocks.
# Layout: weights are torch-style (out, in) packed column-wise; activations are
# (features, edges) / (components, nodes) so edges/nodes ride the lane axis.
# -----------------------------------------------------------------------------
def _fused_forward_kernel(dims,
                          idx_ref,      # (3, Ep)  int32  : row, col, edge_type
                          row_e1_ref,   # (Ep, 1)  int32  : row (scatter layout)
                          data_ref,     # (R, Np)  f32    : node/pos/noise/std/anneal/batch
                          wH_ref,       # (H, C)   f32    : packed H-out weights (+biases)
                          wS_ref,       # (Hc,3H+1)f32    : score L1 weight|bias
                          w2_ref,       # (3, Hc+1)f32    : score L2 weight|bias
                          loss_ref):    # (1, 1)   f32
    D, H, Hc, T, G, Np, Ep, P0 = dims
    f32 = jnp.float32

    # ---- index rows -----------------------------------------------------------
    idx = idx_ref[...]
    row = idx[0:1]                                                  # (1,Ep)
    col = idx[1:2]
    etyp = idx[2:3]

    # ---- data block -----------------------------------------------------------
    data = data_ref[...]                                            # (R, Np)
    nodeT = data[0:D]                                               # (D,Np)
    posT = data[P0:P0 + 3]                                          # (3,Np)
    noiseT = data[P0 + 8:P0 + 11]                                   # (3,Np)
    stdT = data[P0 + 16:P0 + 17]                                    # (1,Np)
    annealT = data[P0 + 17:P0 + 18]                                 # (1,Np)
    batf = data[P0 + 18:P0 + 19]                                    # (1,Np) float batch id

    # ---- packed weights (static column offsets) --------------------------------
    wH = wH_ref[...]
    wf2pi = wH[:, 0:1]                                              # (H,1), already *2*pi
    o1 = 1
    wnb = wH[:, o1:o1 + D + 1]                                      # node_emb  [wn|bn]
    o2 = o1 + D + 1
    w2de = wH[:, o2:o2 + 2 * D + T + 1]                             # [w2d|edge_emb^T|b2d]
    o3 = o2 + 2 * D + T + 1
    wcb = wH[:, o3:o3 + 4 * H + 1]                                  # coff_mlp  [wc|bc]
    o4 = o3 + 4 * H + 1
    wp1b = wH[:, o4:o4 + 2 * H + 3]                                 # project L1 [w|b]
    o5 = o4 + 2 * H + 3
    wp2b = wH[:, o5:o5 + H + 1]                                     # project L2 [w|b]

    # ---- one-hot matrices: gathers / scatters run on the MXU -------------------
    iota_ne = lax.broadcasted_iota(jnp.int32, (Np, Ep), 0)
    row_oh = (iota_ne == row).astype(f32)                           # (Np,Ep) gather
    col_oh = (iota_ne == col).astype(f32)                           # (Np,Ep) gather
    typ_oh = (lax.broadcasted_iota(jnp.int32, (T, Ep), 0) == etyp).astype(f32)   # (T,Ep)
    row_oh_en = (lax.broadcasted_iota(jnp.int32, (Ep, Np), 1)
                 == row_e1_ref[...]).astype(f32)                    # (Ep,Np) scatter
    bat_oh = (lax.broadcasted_iota(jnp.int32, (G, Np), 0)
              == batf.astype(jnp.int32)).astype(f32)                # (G,Np) scatter_mean

    ones_n = jnp.ones((1, Np), f32)
    ones_e = jnp.ones((1, Ep), f32)

    # ---- VE-SDE perturbation: pos + std * noise --------------------------------
    pposT = posT + stdT * noiseT                                    # (3,Np)

    # ---- node embedding (single Linear), bias folded via ones row ---------------
    node_attrT = _mm(wnb, jnp.concatenate([nodeT, ones_n], axis=0)) # (H,Np)

    # ---- fused gathers: one matmul per one-hot ----------------------------------
    gsrc = jnp.concatenate([nodeT, node_attrT, pposT], axis=0)      # (D+H+3,Np)
    g_r = _mm(gsrc, row_oh)                                         # (D+H+3,Ep)
    g_c = _mm(gsrc, col_oh)
    x_rT, h_rT, p_rT = g_r[0:D], g_r[D:D + H], g_r[D + H:D + H + 3]
    x_cT, h_cT, p_cT = g_c[0:D], g_c[D:D + H], g_c[D + H:D + H + 3]

    # ---- coord2basis (component rows, edges on lanes, f32) ----------------------
    diff = p_rT - p_cT
    d0, d1, d2 = diff[0:1], diff[1:2], diff[2:3]
    a0, a1, a2 = p_rT[0:1], p_rT[1:2], p_rT[2:3]
    b0, b1, b2 = p_cT[0:1], p_cT[1:2], p_cT[2:3]
    radial = d0 * d0 + d1 * d1 + d2 * d2
    c0 = a1 * b2 - a2 * b1
    c1 = a2 * b0 - a0 * b2
    c2 = a0 * b1 - a1 * b0
    inv_n = lax.rsqrt(radial + EPSILON)
    d0, d1, d2 = d0 * inv_n, d1 * inv_n, d2 * inv_n
    inv_c = lax.rsqrt(c0 * c0 + c1 * c1 + c2 * c2 + EPSILON)
    c0, c1, c2 = c0 * inv_c, c1 * inv_c, c2 * inv_c
    v0 = d1 * c2 - d2 * c1
    v1 = d2 * c0 - d0 * c2
    v2 = d0 * c1 - d1 * c0

    # ---- frame-invariant coefficients -------------------------------------------
    ci0 = d0 * a0 + d1 * a1 + d2 * a2
    ci1 = jnp.abs(c0 * a0 + c1 * a1 + c2 * a2)
    ci2 = v0 * a0 + v1 * a1 + v2 * a2
    cj0 = d0 * b0 + d1 * b1 + d2 * b2
    cj1 = jnp.abs(c0 * b0 + c1 * b1 + c2 * b2)
    cj2 = v0 * b0 + v1 * b1 + v2 * b2

    mul_sum = ci0 * cj0 + ci1 * cj1 + ci2 * cj2
    p_cos = (mul_sum
             * lax.rsqrt(ci0 * ci0 + ci1 * ci1 + ci2 * ci2 + EPSILON)
             * lax.rsqrt(cj0 * cj0 + cj1 * cj1 + cj2 * cj2 + EPSILON))
    p_sin = jnp.sqrt(jnp.maximum(1.0 - p_cos * p_cos, 0.0))         # clamped: no NaN

    # ---- Gaussian Fourier embedding + coff_mlp (K = 4H+1 contraction) ----------
    def fourier_embed(ca, cb):
        pa = ca * wf2pi                                             # (H,Ep) outer product
        pb = cb * wf2pi
        feats = jnp.concatenate(
            [jnp.sin(pa), jnp.cos(pa), jnp.sin(pb), jnp.cos(pb), ones_e], axis=0)
        return _mm(wcb, feats)                                      # (H,Ep)

    emb_i = fourier_embed(ci0, ci2)
    emb_j = fourier_embed(cj0, cj2)

    # ---- edge_2D_emb + edge-type embedding: single fused matmul -----------------
    feat2d = jnp.concatenate([x_rT * x_cT, x_rT + x_cT, typ_oh, ones_e], axis=0)
    e2dT = _mm(w2de, feat2d)                                        # (H,Ep)

    # ---- project MLP: Linear(2H+2,H) -> SiLU -> Linear(H,H) ---------------------
    pact = jnp.concatenate([p_sin, p_cos, emb_i, emb_j, ones_e], axis=0)
    h1 = _silu(_mm(wp1b, pact))                                     # (H,Ep)
    e3dT = _mm(wp2b, jnp.concatenate([h1, ones_e], axis=0))
    edge_attrT = e2dT + e3dT                                        # (H,Ep)

    # ---- equivariant score readout ----------------------------------------------
    # TODO(synk): EquivariantScoreNetwork internals are not in the provided source;
    # this implements the standard edge-coefficient / basis-projection readout.
    sfeat = jnp.concatenate([h_rT, h_cT, edge_attrT, ones_e], axis=0)   # (3H+1,Ep)
    sh = _silu(_mm(wS_ref[...], sfeat))                                 # (Hc,Ep)
    coffT = _mm(w2_ref[...], jnp.concatenate([sh, ones_e], axis=0))     # (3,Ep)

    cf0, cf1, cf2 = coffT[0:1], coffT[1:2], coffT[2:3]
    dynT = jnp.concatenate([cf0 * d0 + cf1 * c0 + cf2 * v0,
                            cf0 * d1 + cf1 * c1 + cf2 * v1,
                            cf0 * d2 + cf1 * c2 + cf2 * v2], axis=0)    # (3,Ep)

    # ---- segment_sum(dyn, row) as an MXU one-hot matmul --------------------------
    scoresT = _mm(dynT, row_oh_en)                                      # (3,Np)

    # ---- loss (scatter_mean over batch + mean over graphs) -----------------------
    dS = scoresT - noiseT
    sq = dS[0:1] * dS[0:1] + dS[1:2] * dS[1:2] + dS[2:3] * dS[2:3]      # (1,Np)
    loss_pos = sq * annealT
    g_sum = jnp.sum(bat_oh * loss_pos, axis=1, keepdims=True)           # (G,1)
    g_cnt = jnp.maximum(jnp.sum(bat_oh, axis=1, keepdims=True), 1.0)    # (G,1)
    per_graph = g_sum / g_cnt
    loss_ref[...] = jnp.sum(per_graph, axis=0, keepdims=True) * (1.0 / G)


# -----------------------------------------------------------------------------
# Parameter init (deterministic, synthetic — no checkpoint loading).
# Weights are stored in torch nn.Linear layout (out, in); biases as (out, 1).
# -----------------------------------------------------------------------------
def init_params(key, emb_dim, hidden_dim, hidden_coff_dim=128, num_edge_types=100):
    ks = jax.random.split(key, 9)

    def lin(k, din, dout):
        kw, kb = jax.random.split(k)
        s = 1.0 / math.sqrt(din)
        w = jax.random.uniform(kw, (dout, din), jnp.float32, -s, s)
        b = jax.random.uniform(kb, (dout, 1), jnp.float32, -s, s)
        return w, b

    wn, bn = lin(ks[0], emb_dim, hidden_dim)
    w2d, b2d = lin(ks[1], 2 * emb_dim, hidden_dim)
    eembT = jax.random.normal(ks[2], (hidden_dim, num_edge_types), jnp.float32)
    wf = jax.random.normal(ks[3], (hidden_dim, 1), jnp.float32)      # scale=1, frozen
    wc, bc = lin(ks[4], 4 * hidden_dim, hidden_dim)
    wp1, bp1 = lin(ks[5], 2 * hidden_dim + 2, hidden_dim)
    wp2, bp2 = lin(ks[6], hidden_dim, hidden_dim)
    ws1, bs1 = lin(ks[7], 3 * hidden_dim, hidden_coff_dim)
    ws2, bs2 = lin(ks[8], hidden_coff_dim, 3)
    return {
        "node_emb_w": wn, "node_emb_b": bn,
        "edge_2D_emb_w": w2d, "edge_2D_emb_b": b2d,
        "edge_emb_T": eembT,                 # nn.Embedding(100,H) weight, transposed
        "fourier_W": wf,                     # GaussianFourierProjection.W as a column
        "coff_mlp_w": wc, "coff_mlp_b": bc,
        "proj1_w": wp1, "proj1_b": bp1,      # input cols ordered [sin, cos, emb_i, emb_j]
        "proj2_w": wp2, "proj2_b": bp2,
        "score1_w": ws1, "score1_b": bs1,    # input cols ordered [h_row, h_col, edge_attr]
        "score2_w": ws2, "score2_b": bs2,
    }


def _round_up(x, m):
    return -(-x // m) * m


# -----------------------------------------------------------------------------
# Forward pass: random-perturbation schedule in JAX (needs jax.random anyway),
# everything else in the single fused Pallas kernel.
# -----------------------------------------------------------------------------
@partial(jax.jit, static_argnames=("num_graphs", "anneal_power", "sigma_min",
                                   "sigma_max", "num_timesteps", "num_edge_types"))
def sde_model_forward(params, node_2D_repr, pos, batch, edge_index, edge_type, key,
                      num_graphs, anneal_power, sigma_min=0.1, sigma_max=1.0,
                      num_timesteps=1000, num_edge_types=100):
    N, D = node_2D_repr.shape
    E = edge_index.shape[1]
    H = params["node_emb_w"].shape[0]
    Hc = params["score1_w"].shape[0]
    T = num_edge_types
    G = num_graphs
    assert D % 8 == 0, "emb_dim must be a multiple of 8 for the packed data block"

    # lane-dense padded extents
    Np = _round_up(N, 128)
    Ep = _round_up(E, 128)

    # --- diffusion perturbation inputs (VE SDE, 'VE' branch) --------------------
    k_noise, k_t = jax.random.split(key)
    noiseT = jax.random.normal(k_noise, (3, N), jnp.float32)        # pos_noise (component-major)
    half = num_graphs // 2 + 1
    t_int = jax.random.randint(k_t, (half,), 0, num_timesteps)
    t_int = jnp.concatenate([t_int, num_timesteps - t_int - 1])[:num_graphs]
    t = t_int.astype(jnp.float32) / num_timesteps * (1.0 - EPSILON) + EPSILON
    t_pos = t[batch]                                                # (N,)
    std_pos = sigma_min * (sigma_max / sigma_min) ** t_pos          # VESDE marginal std
    anneal = jnp.ones_like(std_pos) if anneal_power == 0 else std_pos ** anneal_power

    # --- packed index block (padded edges point out-of-range -> zero one-hot) ----
    pad_e = Ep - E
    rowp = jnp.pad(edge_index[0].astype(jnp.int32), (0, pad_e), constant_values=Np)
    colp = jnp.pad(edge_index[1].astype(jnp.int32), (0, pad_e), constant_values=Np)
    etp = jnp.pad(edge_type.astype(jnp.int32), (0, pad_e), constant_values=0)
    idx = jnp.stack([rowp, colp, etp], axis=0)                      # (3,Ep)
    row_e1 = rowp.reshape(Ep, 1)                                    # (Ep,1)

    # --- packed data block (padded nodes masked out of the loss by batch=G) ------
    pad_n = Np - N
    P0 = _round_up(D, 8)
    R = _round_up(P0 + 19, 8)
    padn = lambda x: jnp.pad(x, ((0, 0), (0, pad_n)))
    data = jnp.concatenate([
        padn(node_2D_repr.T), jnp.zeros((P0 - D, Np), jnp.float32),
        padn(pos.T), jnp.zeros((5, Np), jnp.float32),
        padn(noiseT), jnp.zeros((5, Np), jnp.float32),
        padn(std_pos.reshape(1, N)),
        padn(anneal.reshape(1, N)),
        jnp.pad(batch.astype(jnp.float32).reshape(1, N), ((0, 0), (0, pad_n)),
                constant_values=float(G)),
        jnp.zeros((R - (P0 + 19), Np), jnp.float32),
    ], axis=0)                                                      # (R,Np)

    # --- packed weight blocks (biases as extra columns, matched by ones rows) ----
    wH = jnp.concatenate([
        params["fourier_W"] * (2.0 * math.pi),
        params["node_emb_w"], params["node_emb_b"],
        params["edge_2D_emb_w"], params["edge_emb_T"], params["edge_2D_emb_b"],
        params["coff_mlp_w"], params["coff_mlp_b"],
        params["proj1_w"], params["proj1_b"],
        params["proj2_w"], params["proj2_b"],
    ], axis=1)                                                      # (H, 3D+7H+T+8)
    wS = jnp.concatenate([params["score1_w"], params["score1_b"]], axis=1)   # (Hc,3H+1)
    w2 = jnp.concatenate([params["score2_w"], params["score2_b"]], axis=1)   # (3,Hc+1)

    vmem = pl.BlockSpec(memory_space=pltpu.MemorySpace.VMEM)
    kernel = partial(_fused_forward_kernel, (D, H, Hc, T, G, Np, Ep, P0))

    loss = pl.pallas_call(
        kernel,
        out_shape=jax.ShapeDtypeStruct((1, 1), jnp.float32),
        in_specs=[vmem] * 6,
        out_specs=vmem,
    )(idx, row_e1, data, wH, wS, w2)
    return {"position": loss[0, 0]}


if __name__ == "__main__":
    emb_dim, hidden_dim = 32, 32
    N, E, num_graphs = 16, 64, 2

    key = jax.random.PRNGKey(0)
    k1, k2, k3, k4, k5, k6 = jax.random.split(key, 6)

    node_2D_repr = jax.random.normal(k1, (N, emb_dim), jnp.float32)
    pos = jax.random.normal(k2, (N, 3), jnp.float32)
    batch = jnp.concatenate([jnp.zeros(N // 2, jnp.int32), jnp.ones(N // 2, jnp.int32)])

    # intra-graph random edges (first half of edges in graph 0, second half in graph 1)
    half_nodes = N // 2
    row0 = jax.random.randint(k3, (E,), 0, half_nodes)
    col0 = (row0 + jax.random.randint(k4, (E,), 1, half_nodes)) % half_nodes
    g_off = jnp.where(jnp.arange(E) < E // 2, 0, half_nodes).astype(jnp.int32)
    edge_index = jnp.stack([row0 + g_off, col0 + g_off]).astype(jnp.int32)
    edge_type = jax.random.randint(k5, (E,), 0, 100)

    params = init_params(jax.random.PRNGKey(42), emb_dim, hidden_dim)

    out = sde_model_forward(params, node_2D_repr, pos, batch, edge_index, edge_type, k6,
                            num_graphs=num_graphs, anneal_power=2.0)
    loss = jax.block_until_ready(out["position"])
    assert bool(jnp.isfinite(loss))
    print("KERNEL_OK")
</pallas_src>

<mosaic_0001>
module attributes {stable_mosaic.version = 11 : i64} {
  func.func @_fused_forward_kernel(%arg0: memref<3x128xi32, #tpu.memory_space<vmem>>, %arg1: memref<128x1xi32, #tpu.memory_space<vmem>>, %arg2: memref<56x128xf32, #tpu.memory_space<vmem>>, %arg3: memref<32x428xf32, #tpu.memory_space<vmem>>, %arg4: memref<128x97xf32, #tpu.memory_space<vmem>>, %arg5: memref<3x129xf32, #tpu.memory_space<vmem>>, %arg6: memref<1x1xf32, #tpu.memory_space<vmem>>) attributes {dimension_semantics = [], scalar_prefetch = 0 : i64, scratch_operands = 0 : i64, tpu.core_type = #tpu.core_type<tc>} {
    %c0 = arith.constant 0 : index
    %c0_0 = arith.constant 0 : index
    %0 = vector.load %arg0[%c0, %c0_0] : memref<3x128xi32, #tpu.memory_space<vmem>>, vector<3x128xi32>
    %1 = vector.extract_strided_slice %0 {offsets = [0, 0], sizes = [1, 128], strides = [1, 1]} : vector<3x128xi32> to vector<1x128xi32>
    %2 = vector.extract_strided_slice %0 {offsets = [1, 0], sizes = [1, 128], strides = [1, 1]} : vector<3x128xi32> to vector<1x128xi32>
    %3 = vector.extract_strided_slice %0 {offsets = [2, 0], sizes = [1, 128], strides = [1, 1]} : vector<3x128xi32> to vector<1x128xi32>
    %c0_1 = arith.constant 0 : index
    %c0_2 = arith.constant 0 : index
    %4 = vector.load %arg2[%c0_1, %c0_2] : memref<56x128xf32, #tpu.memory_space<vmem>>, vector<56x128xf32>
    %5 = vector.extract_strided_slice %4 {offsets = [0, 0], sizes = [32, 128], strides = [1, 1]} : vector<56x128xf32> to vector<32x128xf32>
    %6 = vector.extract_strided_slice %4 {offsets = [32, 0], sizes = [3, 128], strides = [1, 1]} : vector<56x128xf32> to vector<3x128xf32>
    %7 = vector.extract_strided_slice %4 {offsets = [40, 0], sizes = [3, 128], strides = [1, 1]} : vector<56x128xf32> to vector<3x128xf32>
    %8 = vector.extract_strided_slice %4 {offsets = [48, 0], sizes = [1, 128], strides = [1, 1]} : vector<56x128xf32> to vector<1x128xf32>
    %9 = vector.extract_strided_slice %4 {offsets = [49, 0], sizes = [1, 128], strides = [1, 1]} : vector<56x128xf32> to vector<1x128xf32>
    %10 = vector.extract_strided_slice %4 {offsets = [50, 0], sizes = [1, 128], strides = [1, 1]} : vector<56x128xf32> to vector<1x128xf32>
    %c0_3 = arith.constant 0 : index
    %c0_4 = arith.constant 0 : index
    %11 = vector.load %arg3[%c0_3, %c0_4] : memref<32x428xf32, #tpu.memory_space<vmem>>, vector<32x428xf32>
    %12 = vector.extract_strided_slice %11 {offsets = [0, 0], sizes = [32, 1], strides = [1, 1]} : vector<32x428xf32> to vector<32x1xf32>
    %13 = vector.extract_strided_slice %11 {offsets = [0, 1], sizes = [32, 33], strides = [1, 1]} : vector<32x428xf32> to vector<32x33xf32>
    %14 = vector.extract_strided_slice %11 {offsets = [0, 34], sizes = [32, 165], strides = [1, 1]} : vector<32x428xf32> to vector<32x165xf32>
    %15 = vector.extract_strided_slice %11 {offsets = [0, 199], sizes = [32, 129], strides = [1, 1]} : vector<32x428xf32> to vector<32x129xf32>
    %16 = vector.extract_strided_slice %11 {offsets = [0, 328], sizes = [32, 67], strides = [1, 1]} : vector<32x428xf32> to vector<32x67xf32>
    %17 = vector.extract_strided_slice %11 {offsets = [0, 395], sizes = [32, 33], strides = [1, 1]} : vector<32x428xf32> to vector<32x33xf32>
    %18 = tpu.iota {dimensions = array<i32: 0>} : vector<128x128xi32>
    %19 = vector.broadcast %1 : vector<1x128xi32> to vector<128x128xi32>
    %20 = arith.cmpi eq, %18, %19 : vector<128x128xi32>
    %21 = arith.extui %20 : vector<128x128xi1> to vector<128x128xi32>
    %22 = arith.sitofp %21 : vector<128x128xi32> to vector<128x128xf32>
    %23 = vector.broadcast %2 : vector<1x128xi32> to vector<128x128xi32>
    %24 = arith.cmpi eq, %18, %23 : vector<128x128xi32>
    %25 = arith.extui %24 : vector<128x128xi1> to vector<128x128xi32>
    %26 = arith.sitofp %25 : vector<128x128xi32> to vector<128x128xf32>
    %27 = tpu.iota {dimensions = array<i32: 0>} : vector<100x128xi32>
    %28 = vector.broadcast %3 : vector<1x128xi32> to vector<100x128xi32>
    %29 = arith.cmpi eq, %27, %28 : vector<100x128xi32>
    %30 = arith.extui %29 : vector<100x128xi1> to vector<100x128xi32>
    %31 = arith.sitofp %30 : vector<100x128xi32> to vector<100x128xf32>
    %32 = tpu.iota {dimensions = array<i32: 1>} : vector<128x128xi32>
    %c0_5 = arith.constant 0 : index
    %c0_6 = arith.constant 0 : index
    %33 = vector.load %arg1[%c0_5, %c0_6] : memref<128x1xi32, #tpu.memory_space<vmem>>, vector<128x1xi32>
    %34 = vector.broadcast %33 : vector<128x1xi32> to vector<128x128xi32>
    %35 = arith.cmpi eq, %32, %34 : vector<128x128xi32>
    %36 = arith.extui %35 : vector<128x128xi1> to vector<128x128xi32>
    %37 = arith.sitofp %36 : vector<128x128xi32> to vector<128x128xf32>
    %38 = tpu.iota {dimensions = array<i32: 0>} : vector<2x128xi32>
    %39 = arith.fptosi %10 : vector<1x128xf32> to vector<1x128xi32>
    %40 = vector.broadcast %39 : vector<1x128xi32> to vector<2x128xi32>
    %41 = arith.cmpi eq, %38, %40 : vector<2x128xi32>
    %42 = arith.extui %41 : vector<2x128xi1> to vector<2x128xi32>
    %43 = arith.sitofp %42 : vector<2x128xi32> to vector<2x128xf32>
    %cst = arith.constant 1.000000e+00 : f32
    %44 = vector.broadcast %cst : f32 to vector<1x128xf32>
    %cst_7 = arith.constant 1.000000e+00 : f32
    %45 = vector.broadcast %cst_7 : f32 to vector<1x128xf32>
    %46 = vector.broadcast %8 : vector<1x128xf32> to vector<3x128xf32>
    %47 = arith.mulf %46, %7 : vector<3x128xf32>
    %48 = arith.addf %6, %47 : vector<3x128xf32>
    %49 = tpu.concatenate %5, %44 in 0 : vector<32x128xf32>, vector<1x128xf32> -> vector<33x128xf32>
    %50 = arith.truncf %13 : vector<32x33xf32> to vector<32x33xbf16>
    %51 = arith.truncf %49 : vector<33x128xf32> to vector<33x128xbf16>
    %cst_8 = arith.constant dense<0.000000e+00> : vector<32x128xf32>
    %52 = tpu.matmul %50, %51, %cst_8 {dimension_numbers = #tpu.dot_dimension_numbers<[1], [0], [0], [1], [0, 0, 1, 1], [], []>} : vector<32x33xbf16>, vector<33x128xbf16>, vector<32x128xf32> -> vector<32x128xf32>
    %53 = tpu.concatenate %5, %52, %48 in 0 : vector<32x128xf32>, vector<32x128xf32>, vector<3x128xf32> -> vector<67x128xf32>
    %54 = arith.truncf %53 : vector<67x128xf32> to vector<67x128xbf16>
    %55 = arith.truncf %22 : vector<128x128xf32> to vector<128x128xbf16>
    %cst_9 = arith.constant dense<0.000000e+00> : vector<67x128xf32>
    %56 = tpu.matmul %54, %55, %cst_9 {dimension_numbers = #tpu.dot_dimension_numbers<[1], [0], [0], [1], [0, 0, 1, 1], [], []>} : vector<67x128xbf16>, vector<128x128xbf16>, vector<67x128xf32> -> vector<67x128xf32>
    %57 = arith.truncf %53 : vector<67x128xf32> to vector<67x128xbf16>
    %58 = arith.truncf %26 : vector<128x128xf32> to vector<128x128xbf16>
    %cst_10 = arith.constant dense<0.000000e+00> : vector<67x128xf32>
    %59 = tpu.matmul %57, %58, %cst_10 {dimension_numbers = #tpu.dot_dimension_numbers<[1], [0], [0], [1], [0, 0, 1, 1], [], []>} : vector<67x128xbf16>, vector<128x128xbf16>, vector<67x128xf32> -> vector<67x128xf32>
    %60 = vector.extract_strided_slice %56 {offsets = [0, 0], sizes = [32, 128], strides = [1, 1]} : vector<67x128xf32> to vector<32x128xf32>
    %61 = vector.extract_strided_slice %56 {offsets = [32, 0], sizes = [32, 128], strides = [1, 1]} : vector<67x128xf32> to vector<32x128xf32>
    %62 = vector.extract_strided_slice %56 {offsets = [64, 0], sizes = [3, 128], strides = [1, 1]} : vector<67x128xf32> to vector<3x128xf32>
    %63 = vector.extract_strided_slice %59 {offsets = [0, 0], sizes = [32, 128], strides = [1, 1]} : vector<67x128xf32> to vector<32x128xf32>
    %64 = vector.extract_strided_slice %59 {offsets = [32, 0], sizes = [32, 128], strides = [1, 1]} : vector<67x128xf32> to vector<32x128xf32>
    %65 = vector.extract_strided_slice %59 {offsets = [64, 0], sizes = [3, 128], strides = [1, 1]} : vector<67x128xf32> to vector<3x128xf32>
    %66 = arith.subf %62, %65 : vector<3x128xf32>
    %67 = vector.extract_strided_slice %66 {offsets = [0, 0], sizes = [1, 128], strides = [1, 1]} : vector<3x128xf32> to vector<1x128xf32>
    %68 = vector.extract_strided_slice %66 {offsets = [1, 0], sizes = [1, 128], strides = [1, 1]} : vector<3x128xf32> to vector<1x128xf32>
    %69 = vector.extract_strided_slice %66 {offsets = [2, 0], sizes = [1, 128], strides = [1, 1]} : vector<3x128xf32> to vector<1x128xf32>
    %70 = vector.extract_strided_slice %62 {offsets = [0, 0], sizes = [1, 128], strides = [1, 1]} : vector<3x128xf32> to vector<1x128xf32>
    %71 = vector.extract_strided_slice %62 {offsets = [1, 0], sizes = [1, 128], strides = [1, 1]} : vector<3x128xf32> to vector<1x128xf32>
    %72 = vector.extract_strided_slice %62 {offsets = [2, 0], sizes = [1, 128], strides = [1, 1]} : vector<3x128xf32> to vector<1x128xf32>
    %73 = vector.extract_strided_slice %65 {offsets = [0, 0], sizes = [1, 128], strides = [1, 1]} : vector<3x128xf32> to vector<1x128xf32>
    %74 = vector.extract_strided_slice %65 {offsets = [1, 0], sizes = [1, 128], strides = [1, 1]} : vector<3x128xf32> to vector<1x128xf32>
    %75 = vector.extract_strided_slice %65 {offsets = [2, 0], sizes = [1, 128], strides = [1, 1]} : vector<3x128xf32> to vector<1x128xf32>
    %76 = arith.mulf %67, %67 : vector<1x128xf32>
    %77 = arith.mulf %68, %68 : vector<1x128xf32>
    %78 = arith.addf %76, %77 : vector<1x128xf32>
    %79 = arith.mulf %69, %69 : vector<1x128xf32>
    %80 = arith.addf %78, %79 : vector<1x128xf32>
    %81 = arith.mulf %71, %75 : vector<1x128xf32>
    %82 = arith.mulf %72, %74 : vector<1x128xf32>
    %83 = arith.subf %81, %82 : vector<1x128xf32>
    %84 = arith.mulf %72, %73 : vector<1x128xf32>
    %85 = arith.mulf %70, %75 : vector<1x128xf32>
    %86 = arith.subf %84, %85 : vector<1x128xf32>
    %87 = arith.mulf %70, %74 : vector<1x128xf32>
    %88 = arith.mulf %71, %73 : vector<1x128xf32>
    %89 = arith.subf %87, %88 : vector<1x128xf32>
    %cst_11 = arith.constant 9.99999997E-7 : f32
    %90 = vector.broadcast %cst_11 : f32 to vector<1x128xf32>
    %91 = arith.addf %80, %90 : vector<1x128xf32>
    %92 = math.rsqrt %91 : vector<1x128xf32>
    %93 = arith.mulf %67, %92 : vector<1x128xf32>
    %94 = arith.mulf %68, %92 : vector<1x128xf32>
    %95 = arith.mulf %69, %92 : vector<1x128xf32>
    %96 = arith.mulf %83, %83 : vector<1x128xf32>
    %97 = arith.mulf %86, %86 : vector<1x128xf32>
    %98 = arith.addf %96, %97 : vector<1x128xf32>
    %99 = arith.mulf %89, %89 : vector<1x128xf32>
    %100 = arith.addf %98, %99 : vector<1x128xf32>
    %cst_12 = arith.constant 9.99999997E-7 : f32
    %101 = vector.broadcast %cst_12 : f32 to vector<1x128xf32>
    %102 = arith.addf %100, %101 : vector<1x128xf32>
    %103 = math.rsqrt %102 : vector<1x128xf32>
    %104 = arith.mulf %83, %103 : vector<1x128xf32>
    %105 = arith.mulf %86, %103 : vector<1x128xf32>
    %106 = arith.mulf %89, %103 : vector<1x128xf32>
    %107 = arith.mulf %94, %106 : vector<1x128xf32>
    %108 = arith.mulf %95, %105 : vector<1x128xf32>
    %109 = arith.subf %107, %108 : vector<1x128xf32>
    %110 = arith.mulf %95, %104 : vector<1x128xf32>
    %111 = arith.mulf %93, %106 : vector<1x128xf32>
    %112 = arith.subf %110, %111 : vector<1x128xf32>
    %113 = arith.mulf %93, %105 : vector<1x128xf32>
    %114 = arith.mulf %94, %104 : vector<1x128xf32>
    %115 = arith.subf %113, %114 : vector<1x128xf32>
    %116 = arith.mulf %93, %70 : vector<1x128xf32>
    %117 = arith.mulf %94, %71 : vector<1x128xf32>
    %118 = arith.addf %116, %117 : vector<1x128xf32>
    %119 = arith.mulf %95, %72 : vector<1x128xf32>
    %120 = arith.addf %118, %119 : vector<1x128xf32>
    %121 = arith.mulf %104, %70 : vector<1x128xf32>
    %122 = arith.mulf %105, %71 : vector<1x128xf32>
    %123 = arith.addf %121, %122 : vector<1x128xf32>
    %124 = arith.mulf %106, %72 : vector<1x128xf32>
    %125 = arith.addf %123, %124 : vector<1x128xf32>
    %126 = math.absf %125 : vector<1x128xf32>
    %127 = arith.mulf %109, %70 : vector<1x128xf32>
    %128 = arith.mulf %112, %71 : vector<1x128xf32>
    %129 = arith.addf %127, %128 : vector<1x128xf32>
    %130 = arith.mulf %115, %72 : vector<1x128xf32>
    %131 = arith.addf %129, %130 : vector<1x128xf32>
    %132 = arith.mulf %93, %73 : vector<1x128xf32>
    %133 = arith.mulf %94, %74 : vector<1x128xf32>
    %134 = arith.addf %132, %133 : vector<1x128xf32>
    %135 = arith.mulf %95, %75 : vector<1x128xf32>
    %136 = arith.addf %134, %135 : vector<1x128xf32>
    %137 = arith.mulf %104, %73 : vector<1x128xf32>
    %138 = arith.mulf %105, %74 : vector<1x128xf32>
    %139 = arith.addf %137, %138 : vector<1x128xf32>
    %140 = arith.mulf %106, %75 : vector<1x128xf32>
    %141 = arith.addf %139, %140 : vector<1x128xf32>
    %142 = math.absf %141 : vector<1x128xf32>
    %143 = arith.mulf %109, %73 : vector<1x128xf32>
    %144 = arith.mulf %112, %74 : vector<1x128xf32>
    %145 = arith.addf %143, %144 : vector<1x128xf32>
    %146 = arith.mulf %115, %75 : vector<1x128xf32>
    %147 = arith.addf %145, %146 : vector<1x128xf32>
    %148 = arith.mulf %120, %136 : vector<1x128xf32>
    %149 = arith.mulf %126, %142 : vector<1x128xf32>
    %150 = arith.addf %148, %149 : vector<1x128xf32>
    %151 = arith.mulf %131, %147 : vector<1x128xf32>
    %152 = arith.addf %150, %151 : vector<1x128xf32>
    %153 = arith.mulf %120, %120 : vector<1x128xf32>
    %154 = arith.mulf %126, %126 : vector<1x128xf32>
    %155 = arith.addf %153, %154 : vector<1x128xf32>
    %156 = arith.mulf %131, %131 : vector<1x128xf32>
    %157 = arith.addf %155, %156 : vector<1x128xf32>
    %cst_13 = arith.constant 9.99999997E-7 : f32
    %158 = vector.broadcast %cst_13 : f32 to vector<1x128xf32>
    %159 = arith.addf %157, %158 : vector<1x128xf32>
    %160 = math.rsqrt %159 : vector<1x128xf32>
    %161 = arith.mulf %152, %160 : vector<1x128xf32>
    %162 = arith.mulf %136, %136 : vector<1x128xf32>
    %163 = arith.mulf %142, %142 : vector<1x128xf32>
    %164 = arith.addf %162, %163 : vector<1x128xf32>
    %165 = arith.mulf %147, %147 : vector<1x128xf32>
    %166 = arith.addf %164, %165 : vector<1x128xf32>
    %cst_14 = arith.constant 9.99999997E-7 : f32
    %167 = vector.broadcast %cst_14 : f32 to vector<1x128xf32>
    %168 = arith.addf %166, %167 : vector<1x128xf32>
    %169 = math.rsqrt %168 : vector<1x128xf32>
    %170 = arith.mulf %161, %169 : vector<1x128xf32>
    %171 = arith.mulf %170, %170 : vector<1x128xf32>
    %cst_15 = arith.constant 1.000000e+00 : f32
    %172 = vector.broadcast %cst_15 : f32 to vector<1x128xf32>
    %173 = arith.subf %172, %171 : vector<1x128xf32>
    %cst_16 = arith.constant 0.000000e+00 : f32
    %174 = vector.broadcast %cst_16 : f32 to vector<1x128xf32>
    %175 = arith.maximumf %173, %174 : vector<1x128xf32>
    %176 = math.sqrt %175 : vector<1x128xf32>
    %177 = vector.broadcast %120 : vector<1x128xf32> to vector<32x128xf32>
    %178 = vector.broadcast %12 : vector<32x1xf32> to vector<32x128xf32>
    %179 = arith.mulf %177, %178 : vector<32x128xf32>
    %180 = vector.broadcast %131 : vector<1x128xf32> to vector<32x128xf32>
    %181 = vector.broadcast %12 : vector<32x1xf32> to vector<32x128xf32>
    %182 = arith.mulf %180, %181 : vector<32x128xf32>
    %183 = math.sin %179 : vector<32x128xf32>
    %184 = math.cos %179 : vector<32x128xf32>
    %185 = math.sin %182 : vector<32x128xf32>
    %186 = math.cos %182 : vector<32x128xf32>
    %187 = tpu.concatenate %183, %184, %185, %186, %45 in 0 : vector<32x128xf32>, vector<32x128xf32>, vector<32x128xf32>, vector<32x128xf32>, vector<1x128xf32> -> vector<129x128xf32>
    %188 = arith.truncf %15 : vector<32x129xf32> to vector<32x129xbf16>
    %189 = arith.truncf %187 : vector<129x128xf32> to vector<129x128xbf16>
    %cst_17 = arith.constant dense<0.000000e+00> : vector<32x128xf32>
    %190 = tpu.matmul %188, %189, %cst_17 {dimension_numbers = #tpu.dot_dimension_numbers<[1], [0], [0], [1], [0, 0, 1, 1], [], []>} : vector<32x129xbf16>, vector<129x128xbf16>, vector<32x128xf32> -> vector<32x128xf32>
    %191 = vector.broadcast %136 : vector<1x128xf32> to vector<32x128xf32>
    %192 = vector.broadcast %12 : vector<32x1xf32> to vector<32x128xf32>
    %193 = arith.mulf %191, %192 : vector<32x128xf32>
    %194 = vector.broadcast %147 : vector<1x128xf32> to vector<32x128xf32>
    %195 = vector.broadcast %12 : vector<32x1xf32> to vector<32x128xf32>
    %196 = arith.mulf %194, %195 : vector<32x128xf32>
    %197 = math.sin %193 : vector<32x128xf32>
    %198 = math.cos %193 : vector<32x128xf32>
    %199 = math.sin %196 : vector<32x128xf32>
    %200 = math.cos %196 : vector<32x128xf32>
    %201 = tpu.concatenate %197, %198, %199, %200, %45 in 0 : vector<32x128xf32>, vector<32x128xf32>, vector<32x128xf32>, vector<32x128xf32>, vector<1x128xf32> -> vector<129x128xf32>
    %202 = arith.truncf %15 : vector<32x129xf32> to vector<32x129xbf16>
    %203 = arith.truncf %201 : vector<129x128xf32> to vector<129x128xbf16>
    %cst_18 = arith.constant dense<0.000000e+00> : vector<32x128xf32>
    %204 = tpu.matmul %202, %203, %cst_18 {dimension_numbers = #tpu.dot_dimension_numbers<[1], [0], [0], [1], [0, 0, 1, 1], [], []>} : vector<32x129xbf16>, vector<129x128xbf16>, vector<32x128xf32> -> vector<32x128xf32>
    %205 = arith.mulf %60, %63 : vector<32x128xf32>
    %206 = arith.addf %60, %63 : vector<32x128xf32>
    %207 = tpu.concatenate %205, %206, %31, %45 in 0 : vector<32x128xf32>, vector<32x128xf32>, vector<100x128xf32>, vector<1x128xf32> -> vector<165x128xf32>
    %208 = arith.truncf %14 : vector<32x165xf32> to vector<32x165xbf16>
    %209 = arith.truncf %207 : vector<165x128xf32> to vector<165x128xbf16>
    %cst_19 = arith.constant dense<0.000000e+00> : vector<32x128xf32>
    %210 = tpu.matmul %208, %209, %cst_19 {dimension_numbers = #tpu.dot_dimension_numbers<[1], [0], [0], [1], [0, 0, 1, 1], [], []>} : vector<32x165xbf16>, vector<165x128xbf16>, vector<32x128xf32> -> vector<32x128xf32>
    %211 = tpu.concatenate %176, %170, %190, %204, %45 in 0 : vector<1x128xf32>, vector<1x128xf32>, vector<32x128xf32>, vector<32x128xf32>, vector<1x128xf32> -> vector<67x128xf32>
    %212 = arith.truncf %16 : vector<32x67xf32> to vector<32x67xbf16>
    %213 = arith.truncf %211 : vector<67x128xf32> to vector<67x128xbf16>
    %cst_20 = arith.constant dense<0.000000e+00> : vector<32x128xf32>
    %214 = tpu.matmul %212, %213, %cst_20 {dimension_numbers = #tpu.dot_dimension_numbers<[1], [0], [0], [1], [0, 0, 1, 1], [], []>} : vector<32x67xbf16>, vector<67x128xbf16>, vector<32x128xf32> -> vector<32x128xf32>
    %215 = arith.negf %214 : vector<32x128xf32>
    %216 = math.exp %215 : vector<32x128xf32>
    %cst_21 = arith.constant 1.000000e+00 : f32
    %217 = vector.broadcast %cst_21 : f32 to vector<32x128xf32>
    %218 = arith.addf %217, %216 : vector<32x128xf32>
    %219 = arith.divf %217, %218 : vector<32x128xf32>
    %220 = arith.mulf %214, %219 : vector<32x128xf32>
    %221 = tpu.concatenate %220, %45 in 0 : vector<32x128xf32>, vector<1x128xf32> -> vector<33x128xf32>
    %222 = arith.truncf %17 : vector<32x33xf32> to vector<32x33xbf16>
    %223 = arith.truncf %221 : vector<33x128xf32> to vector<33x128xbf16>
    %cst_22 = arith.constant dense<0.000000e+00> : vector<32x128xf32>
    %224 = tpu.matmul %222, %223, %cst_22 {dimension_numbers = #tpu.dot_dimension_numbers<[1], [0], [0], [1], [0, 0, 1, 1], [], []>} : vector<32x33xbf16>, vector<33x128xbf16>, vector<32x128xf32> -> vector<32x128xf32>
    %225 = arith.addf %210, %224 : vector<32x128xf32>
    %226 = tpu.concatenate %61, %64, %225, %45 in 0 : vector<32x128xf32>, vector<32x128xf32>, vector<32x128xf32>, vector<1x128xf32> -> vector<97x128xf32>
    %c0_23 = arith.constant 0 : index
    %c0_24 = arith.constant 0 : index
    %227 = vector.load %arg4[%c0_23, %c0_24] : memref<128x97xf32, #tpu.memory_space<vmem>>, vector<128x97xf32>
    %228 = arith.truncf %227 : vector<128x97xf32> to vector<128x97xbf16>
    %229 = arith.truncf %226 : vector<97x128xf32> to vector<97x128xbf16>
    %cst_25 = arith.constant dense<0.000000e+00> : vector<128x128xf32>
    %230 = tpu.matmul %228, %229, %cst_25 {dimension_numbers = #tpu.dot_dimension_numbers<[1], [0], [0], [1], [0, 0, 1, 1], [], []>} : vector<128x97xbf16>, vector<97x128xbf16>, vector<128x128xf32> -> vector<128x128xf32>
    %231 = arith.negf %230 : vector<128x128xf32>
    %232 = math.exp %231 : vector<128x128xf32>
    %cst_26 = arith.constant 1.000000e+00 : f32
    %233 = vector.broadcast %cst_26 : f32 to vector<128x128xf32>
    %234 = arith.addf %233, %232 : vector<128x128xf32>
    %235 = arith.divf %233, %234 : vector<128x128xf32>
    %236 = arith.mulf %230, %235 : vector<128x128xf32>
    %c0_27 = arith.constant 0 : index
    %c0_28 = arith.constant 0 : index
    %237 = vector.load %arg5[%c0_27, %c0_28] : memref<3x129xf32, #tpu.memory_space<vmem>>, vector<3x129xf32>
    %238 = tpu.concatenate %236, %45 in 0 : vector<128x128xf32>, vector<1x128xf32> -> vector<129x128xf32>
    %239 = arith.truncf %237 : vector<3x129xf32> to vector<3x129xbf16>
    %240 = arith.truncf %238 : vector<129x128xf32> to vector<129x128xbf16>
    %cst_29 = arith.constant dense<0.000000e+00> : vector<3x128xf32>
    %241 = tpu.matmul %239, %240, %cst_29 {dimension_numbers = #tpu.dot_dimension_numbers<[1], [0], [0], [1], [0, 0, 1, 1], [], []>} : vector<3x129xbf16>, vector<129x128xbf16>, vector<3x128xf32> -> vector<3x128xf32>
    %242 = vector.extract_strided_slice %241 {offsets = [0, 0], sizes = [1, 128], strides = [1, 1]} : vector<3x128xf32> to vector<1x128xf32>
    %243 = vector.extract_strided_slice %241 {offsets = [1, 0], sizes = [1, 128], strides = [1, 1]} : vector<3x128xf32> to vector<1x128xf32>
    %244 = vector.extract_strided_slice %241 {offsets = [2, 0], sizes = [1, 128], strides = [1, 1]} : vector<3x128xf32> to vector<1x128xf32>
    %245 = arith.mulf %242, %93 : vector<1x128xf32>
    %246 = arith.mulf %243, %104 : vector<1x128xf32>
    %247 = arith.addf %245, %246 : vector<1x128xf32>
    %248 = arith.mulf %244, %109 : vector<1x128xf32>
    %249 = arith.addf %247, %248 : vector<1x128xf32>
    %250 = arith.mulf %242, %94 : vector<1x128xf32>
    %251 = arith.mulf %243, %105 : vector<1x128xf32>
    %252 = arith.addf %250, %251 : vector<1x128xf32>
    %253 = arith.mulf %244, %112 : vector<1x128xf32>
    %254 = arith.addf %252, %253 : vector<1x128xf32>
    %255 = arith.mulf %242, %95 : vector<1x128xf32>
    %256 = arith.mulf %243, %106 : vector<1x128xf32>
    %257 = arith.addf %255, %256 : vector<1x128xf32>
    %258 = arith.mulf %244, %115 : vector<1x128xf32>
    %259 = arith.addf %257, %258 : vector<1x128xf32>
    %260 = tpu.concatenate %249, %254, %259 in 0 : vector<1x128xf32>, vector<1x128xf32>, vector<1x128xf32> -> vector<3x128xf32>
    %261 = arith.truncf %260 : vector<3x128xf32> to vector<3x128xbf16>
    %262 = arith.truncf %37 : vector<128x128xf32> to vector<128x128xbf16>
    %cst_30 = arith.constant dense<0.000000e+00> : vector<3x128xf32>
    %263 = tpu.matmul %261, %262, %cst_30 {dimension_numbers = #tpu.dot_dimension_numbers<[1], [0], [0], [1], [0, 0, 1, 1], [], []>} : vector<3x128xbf16>, vector<128x128xbf16>, vector<3x128xf32> -> vector<3x128xf32>
    %264 = arith.subf %263, %7 : vector<3x128xf32>
    %265 = vector.extract_strided_slice %264 {offsets = [0, 0], sizes = [1, 128], strides = [1, 1]} : vector<3x128xf32> to vector<1x128xf32>
    %266 = vector.extract_strided_slice %264 {offsets = [0, 0], sizes = [1, 128], strides = [1, 1]} : vector<3x128xf32> to vector<1x128xf32>
    %267 = arith.mulf %265, %266 : vector<1x128xf32>
    %268 = vector.extract_strided_slice %264 {offsets = [1, 0], sizes = [1, 128], strides = [1, 1]} : vector<3x128xf32> to vector<1x128xf32>
    %269 = vector.extract_strided_slice %264 {offsets = [1, 0], sizes = [1, 128], strides = [1, 1]} : vector<3x128xf32> to vector<1x128xf32>
    %270 = arith.mulf %268, %269 : vector<1x128xf32>
    %271 = arith.addf %267, %270 : vector<1x128xf32>
    %272 = vector.extract_strided_slice %264 {offsets = [2, 0], sizes = [1, 128], strides = [1, 1]} : vector<3x128xf32> to vector<1x128xf32>
    %273 = vector.extract_strided_slice %264 {offsets = [2, 0], sizes = [1, 128], strides = [1, 1]} : vector<3x128xf32> to vector<1x128xf32>
    %274 = arith.mulf %272, %273 : vector<1x128xf32>
    %275 = arith.addf %271, %274 : vector<1x128xf32>
    %276 = arith.mulf %275, %9 : vector<1x128xf32>
    %277 = vector.broadcast %276 : vector<1x128xf32> to vector<2x128xf32>
    %278 = arith.mulf %43, %277 : vector<2x128xf32>
    %cst_31 = arith.constant dense<0.000000e+00> : vector<2xf32>
    %279 = vector.multi_reduction <add>, %278, %cst_31 [1] : vector<2x128xf32> to vector<2xf32>
    %280 = vector.shape_cast %279 : vector<2xf32> to vector<2x1xf32>
    %cst_32 = arith.constant dense<0.000000e+00> : vector<2xf32>
    %281 = vector.multi_reduction <add>, %43, %cst_32 [1] : vector<2x128xf32> to vector<2xf32>
    %282 = vector.shape_cast %281 : vector<2xf32> to vector<2x1xf32>
    %cst_33 = arith.constant 1.000000e+00 : f32
    %283 = vector.broadcast %cst_33 : f32 to vector<2x1xf32>
    %284 = arith.maximumf %282, %283 : vector<2x1xf32>
    %285 = arith.divf %280, %284 : vector<2x1xf32>
    %cst_34 = arith.constant dense<0.000000e+00> : vector<1xf32>
    %286 = vector.multi_reduction <add>, %285, %cst_34 [0] : vector<2x1xf32> to vector<1xf32>
    %287 = vector.shape_cast %286 : vector<1xf32> to vector<1x1xf32>
    %cst_35 = arith.constant 5.000000e-01 : f32
    %288 = vector.broadcast %cst_35 : f32 to vector<1x1xf32>
    %289 = arith.mulf %287, %288 : vector<1x1xf32>
    %c0_36 = arith.constant 0 : index
    %c0_37 = arith.constant 0 : index
    %290 = vector.load %arg6[%c0_36, %c0_37] : memref<1x1xf32, #tpu.memory_space<vmem>>, vector<1x1xf32>
    tpu.vector_store %arg6[%c0_36, %c0_37], %289 {strides = array<i32>} : memref<1x1xf32, #tpu.memory_space<vmem>>, vector<1x1xf32>,
    return
  }
}

</mosaic_0001>

<llo_original>
// kernel: sde_model_forward.1
$region0: #{sde_model_forward.1}
  #allocation0 [shape = 'u32[]', space=smem, size = 0x4, offset = 0x4, fixed_abs, tag = 'smem constant byte address 0x4 - core index']
  #allocation1 [shape = 'u32[144,128]{1,0:T(1,128)}', space=vmem, size = 0x12000, scoped, tag = 'internal scratch']
  %s0 = inlined_call_operand.vmem [shape: s32[3,128], index: 0, kind: input, shape index: {}]
  %s1 = inlined_call_operand.vmem [shape: s32[128,1], index: 1, kind: input, shape index: {}]
  %s2 = inlined_call_operand.vmem [shape: f32[56,128], index: 2, kind: input, shape index: {}]
  %s3 = inlined_call_operand.vmem [shape: f32[32,428], index: 3, kind: input, shape index: {}]
  %s4 = inlined_call_operand.vmem [shape: f32[128,97], index: 4, kind: input, shape index: {}]
  %s5 = inlined_call_operand.vmem [shape: f32[3,129], index: 5, kind: input, shape index: {}]
  %s6 = inlined_call_operand.hbm [shape: f32[1,1], index: 6, kind: output, shape index: {}]
  %s7 = sld [smem:[#allocation0]]
  $region34: #{sde_model_forward.1} parent=0
    _
  %s9 = ssub.s32 1, %s7
  %s10 = scalar_select 0, %s9, %s7
  $region1: #{sde_model_forward.1} parent=0
    #allocation2 [shape = 'u8[512]{0}', space=vmem, size = 0x400, scoped, tag = 'output window, operand 0, single buffered']
    #allocation3 [shape = 's32[1]{0}', space=sflag, size = 0x4, scoped, tag = 'scoped memory for sde_model_forward.1']
    %11 = vsyncpa [#allocation3], 0
    // Predicated region
    $region2: #{sde_model_forward.1} parent=1 // pred_check
      _
    $region3: #{sde_model_forward.1} parent=1 // pred_check_branch
      %13 = sbr.rel (0) target = $region5
    $region4: #{sde_model_forward.1} parent=1 // pred_region
      _
    $region5: #{sde_model_forward.1} parent=1 // pred_fallthru
      _
    // Predicated region
    $region6: #{sde_model_forward.1} parent=1 // pred_check
      _
    $region7: #{sde_model_forward.1} parent=1 // pred_check_branch
      %15 = sbr.rel (0) target = $region9
    $region8: #{sde_model_forward.1} parent=1 // pred_region
      _
    $region9: #{sde_model_forward.1} parent=1 // pred_fallthru
      _
    // Predicated region
    $region10: #{sde_model_forward.1} parent=1 // pred_check
      _
    $region11: #{sde_model_forward.1} parent=1 // pred_check_branch
      %17 = sbr.rel (0) target = $region13
    $region12: #{sde_model_forward.1} parent=1 // pred_region
      _
    $region13: #{sde_model_forward.1} parent=1 // pred_fallthru
      _
    // Predicated region
    $region14: #{sde_model_forward.1} parent=1 // pred_check
      _
    $region15: #{sde_model_forward.1} parent=1 // pred_check_branch
      %19 = sbr.rel (0) target = $region17
    $region16: #{sde_model_forward.1} parent=1 // pred_region
      _
    $region17: #{sde_model_forward.1} parent=1 // pred_fallthru
      _
    // Predicated region
    $region18: #{sde_model_forward.1} parent=1 // pred_check
      _
    $region19: #{sde_model_forward.1} parent=1 // pred_check_branch
      %21 = sbr.rel (0) target = $region21
    $region20: #{sde_model_forward.1} parent=1 // pred_region
      _
    $region21: #{sde_model_forward.1} parent=1 // pred_fallthru
      _
    // Predicated region
    $region22: #{sde_model_forward.1} parent=1 // pred_check
      _
    $region23: #{sde_model_forward.1} parent=1 // pred_check_branch
      %23 = sbr.rel (0) target = $region25
    $region24: #{sde_model_forward.1} parent=1 // pred_region
      _
    $region25: #{sde_model_forward.1} parent=1 // pred_fallthru
      _
    %v25 = vld [vmem:[%s0] sm:$0x7]
    %v26 = vld [vmem:[%s2] sm:$0xff]
    %v27 = vld [vmem:[%s2 + $0x8] sm:$0xff]
    %v28 = vld [vmem:[%s2 + $0x10] sm:$0xff]
    %v29 = vld [vmem:[%s2 + $0x18] sm:$0xff]
    %v30 = vld [vmem:[%s2 + $0x20] sm:$0xff]
    %v31 = vld [vmem:[%s2 + $0x28] sm:$0xff]
    %v32 = vld [vmem:[%s2 + $0x30] sm:$0xff]
    %v33 = vld [vmem:[%s3] sm:$0xff]
    %v34 = vld [vmem:[%s3 + $0x8] sm:$0xff]
    %v35 = vld [vmem:[%s3 + $0x10] sm:$0xff]
    %v36 = vld [vmem:[%s3 + $0x18] sm:$0xff]
    %v37 = vld [vmem:[%s3 + $0x20] sm:$0xff]
    %v38 = vld [vmem:[%s3 + $0x28] sm:$0xff]
    %v39 = vld [vmem:[%s3 + $0x30] sm:$0xff]
    %v40 = vld [vmem:[%s3 + $0x38] sm:$0xff]
    %v41 = vld [vmem:[%s3 + $0x40] sm:$0xff]
    %v42 = vld [vmem:[%s3 + $0x48] sm:$0xff]
    %v43 = vld [vmem:[%s3 + $0x50] sm:$0xff]
    %v44 = vld [vmem:[%s3 + $0x58] sm:$0xff]
    %v45 = vld [vmem:[%s3 + $0x60] sm:$0xff]
    %v46 = vld [vmem:[%s3 + $0x68] sm:$0xff]
    %v47 = vld [vmem:[%s3 + $0x70] sm:$0xff]
    %v48 = vld [vmem:[%s3 + $0x78] sm:$0xff]
    %v49 = vlaneseq
    %v50 = vshrl.u32 %v49, 7
    %v51 = vadd.s32 %v50, 8
    %v52 = vadd.s32 %v50, 16
    %v53 = vadd.s32 %v50, 24
    %v54 = vadd.s32 %v50, 32
    %v55 = vadd.s32 %v50, 40
    %v56 = vadd.s32 %v50, 48
    %v57 = vadd.s32 %v50, 56
    %v58 = vadd.s32 %v50, 64
    %v59 = vadd.s32 %v50, 72
    %v60 = vadd.s32 %v50, 80
    %v61 = vadd.s32 %v50, 88
    %v62 = vadd.s32 %v50, 96
    %v63 = vadd.s32 %v50, 104
    %v64 = vadd.s32 %v50, 112
    %v65 = vadd.s32 %v50, 120
    %v66 = vlaneseq
    %v67 = vshrl.u32 %v66, 7
    %v68 = vsub.s32 0, %v67
    %v69 = vrot.slane %v25, %v68
    %vm70 = vcmp.eq.s32.totalorder %v50, %v69
    %vm71 = vcmp.eq.s32.totalorder %v51, %v69
    %vm72 = vcmp.eq.s32.totalorder %v52, %v69
    %vm73 = vcmp.eq.s32.totalorder %v53, %v69
    %vm74 = vcmp.eq.s32.totalorder %v54, %v69
    %vm75 = vcmp.eq.s32.totalorder %v55, %v69
    %vm76 = vcmp.eq.s32.totalorder %v56, %v69
    %vm77 = vcmp.eq.s32.totalorder %v57, %v69
    %vm78 = vcmp.eq.s32.totalorder %v58, %v69
    %vm79 = vcmp.eq.s32.totalorder %v59, %v69
    %vm80 = vcmp.eq.s32.totalorder %v60, %v69
    %vm81 = vcmp.eq.s32.totalorder %v61, %v69
    %vm82 = vcmp.eq.s32.totalorder %v62, %v69
    %vm83 = vcmp.eq.s32.totalorder %v63, %v69
    %vm84 = vcmp.eq.s32.totalorder %v64, %v69
    %vm85 = vcmp.eq.s32.totalorder %v65, %v69
    %v86 = vlaneseq
    %v87 = vshrl.u32 %v86, 7
    %v88 = vsub.s32 1, %v87
    %v89 = vrot.slane %v25, %v88
    %vm90 = vcmp.eq.s32.totalorder %v50, %v89
    %vm91 = vcmp.eq.s32.totalorder %v51, %v89
    %vm92 = vcmp.eq.s32.totalorder %v52, %v89
    %vm93 = vcmp.eq.s32.totalorder %v53, %v89
    %vm94 = vcmp.eq.s32.totalorder %v54, %v89
    %vm95 = vcmp.eq.s32.totalorder %v55, %v89
    %vm96 = vcmp.eq.s32.totalorder %v56, %v89
    %vm97 = vcmp.eq.s32.totalorder %v57, %v89
    %vm98 = vcmp.eq.s32.totalorder %v58, %v89
    %vm99 = vcmp.eq.s32.totalorder %v59, %v89
    %vm100 = vcmp.eq.s32.totalorder %v60, %v89
    %vm101 = vcmp.eq.s32.totalorder %v61, %v89
    %vm102 = vcmp.eq.s32.totalorder %v62, %v89
    %vm103 = vcmp.eq.s32.totalorder %v63, %v89
    %vm104 = vcmp.eq.s32.totalorder %v64, %v89
    %vm105 = vcmp.eq.s32.totalorder %v65, %v89
    %v106 = vlaneseq
    %v107 = vshrl.u32 %v106, 7
    %v108 = vsub.s32 2, %v107
    %v109 = vrot.slane %v25, %v108
    %vm110 = vcmp.eq.s32.totalorder %v50, %v109
    %vm111 = vcmp.eq.s32.totalorder %v51, %v109
    %vm112 = vcmp.eq.s32.totalorder %v52, %v109
    %vm113 = vcmp.eq.s32.totalorder %v53, %v109
    %vm114 = vcmp.eq.s32.totalorder %v54, %v109
    %vm115 = vcmp.eq.s32.totalorder %v55, %v109
    %vm116 = vcmp.eq.s32.totalorder %v56, %v109
    %vm117 = vcmp.eq.s32.totalorder %v57, %v109
    %vm118 = vcmp.eq.s32.totalorder %v58, %v109
    %vm119 = vcmp.eq.s32.totalorder %v59, %v109
    %vm120 = vcmp.eq.s32.totalorder %v60, %v109
    %vm121 = vcmp.eq.s32.totalorder %v61, %v109
    %vm122 = vcmp.eq.s32.totalorder %v62, %v109
    %v123 = vsel %vm110, 1, 0
    %v124 = vsel %vm111, 1, 0
    %v125 = vsel %vm112, 1, 0
    %v126 = vsel %vm113, 1, 0
    %v127 = vsel %vm114, 1, 0
    %v128 = vsel %vm115, 1, 0
    %v129 = vsel %vm116, 1, 0
    %v130 = vsel %vm117, 1, 0
    %v131 = vsel %vm118, 1, 0
    %v132 = vsel %vm119, 1, 0
    %v133 = vsel %vm120, 1, 0
    %v134 = vsel %vm121, 1, 0
    %v135 = vsel %vm122, 1, 0
    %v136 = vcvt.s32.f32 %v123
    %v137 = vcvt.s32.f32 %v124
    %v138 = vcvt.s32.f32 %v125
    %v139 = vcvt.s32.f32 %v126
    %v140 = vcvt.s32.f32 %v127
    %v141 = vcvt.s32.f32 %v128
    %v142 = vcvt.s32.f32 %v129
    %v143 = vcvt.s32.f32 %v130
    %v144 = vcvt.s32.f32 %v131
    %v145 = vcvt.s32.f32 %v132
    %v146 = vcvt.s32.f32 %v133
    %v147 = vcvt.s32.f32 %v134
    %v148 = vcvt.s32.f32 %v135
    %v149 = vlaneseq
    %v150 = vand.u32 %v149, 127
    %v151 = vld [vmem:[%s1] sm:$0xff]
    %v152 = vld [vmem:[%s1 + $0x8] sm:$0xff]
    %v153 = vld [vmem:[%s1 + $0x10] sm:$0xff]
    %v154 = vld [vmem:[%s1 + $0x18] sm:$0xff]
    %v155 = vld [vmem:[%s1 + $0x20] sm:$0xff]
    %v156 = vld [vmem:[%s1 + $0x28] sm:$0xff]
    %v157 = vld [vmem:[%s1 + $0x30] sm:$0xff]
    %v158 = vld [vmem:[%s1 + $0x38] sm:$0xff]
    %v159 = vld [vmem:[%s1 + $0x40] sm:$0xff]
    %v160 = vld [vmem:[%s1 + $0x48] sm:$0xff]
    %v161 = vld [vmem:[%s1 + $0x50] sm:$0xff]
    %v162 = vld [vmem:[%s1 + $0x58] sm:$0xff]
    %v163 = vld [vmem:[%s1 + $0x60] sm:$0xff]
    %v164 = vld [vmem:[%s1 + $0x68] sm:$0xff]
    %v165 = vld [vmem:[%s1 + $0x70] sm:$0xff]
    %v166 = vld [vmem:[%s1 + $0x78] sm:$0xff]
    %167 = vset.pattern.permute.xlu0 0
    %168 = vperm.xlu0 %167, %v151
    %v169 = vpop.permute.xlu0 %168
    %170 = vset.pattern.permute.xlu0 0
    %171 = vperm.xlu0 %170, %v152
    %v172 = vpop.permute.xlu0 %171
    %173 = vset.pattern.permute.xlu0 0
    %174 = vperm.xlu0 %173, %v153
    %v175 = vpop.permute.xlu0 %174
    %176 = vset.pattern.permute.xlu0 0
    %177 = vperm.xlu0 %176, %v154
    %v178 = vpop.permute.xlu0 %177
    %179 = vset.pattern.permute.xlu0 0
    %180 = vperm.xlu0 %179, %v155
    %v181 = vpop.permute.xlu0 %180
    %182 = vset.pattern.permute.xlu0 0
    %183 = vperm.xlu0 %182, %v156
    %v184 = vpop.permute.xlu0 %183
    %185 = vset.pattern.permute.xlu0 0
    %186 = vperm.xlu0 %185, %v157
    %v187 = vpop.permute.xlu0 %186
    %188 = vset.pattern.permute.xlu0 0
    %189 = vperm.xlu0 %188, %v158
    %v190 = vpop.permute.xlu0 %189
    %191 = vset.pattern.permute.xlu0 0
    %192 = vperm.xlu0 %191, %v159
    %v193 = vpop.permute.xlu0 %192
    %194 = vset.pattern.permute.xlu0 0
    %195 = vperm.xlu0 %194, %v160
    %v196 = vpop.permute.xlu0 %195
    %197 = vset.pattern.permute.xlu0 0
    %198 = vperm.xlu0 %197, %v161
    %v199 = vpop.permute.xlu0 %198
    %200 = vset.pattern.permute.xlu0 0
    %201 = vperm.xlu0 %200, %v162
    %v202 = vpop.permute.xlu0 %201
    %203 = vset.pattern.permute.xlu0 0
    %204 = vperm.xlu0 %203, %v163
    %v205 = vpop.permute.xlu0 %204
    %206 = vset.pattern.permute.xlu0 0
    %207 = vperm.xlu0 %206, %v164
    %v208 = vpop.permute.xlu0 %207
    %209 = vset.pattern.permute.xlu0 0
    %210 = vperm.xlu0 %209, %v165
    %v211 = vpop.permute.xlu0 %210
    %212 = vset.pattern.permute.xlu0 0
    %213 = vperm.xlu0 %212, %v166
    %v214 = vpop.permute.xlu0 %213
    %vm215 = vcmp.eq.s32.totalorder %v150, %v169
    %vm216 = vcmp.eq.s32.totalorder %v150, %v172
    %vm217 = vcmp.eq.s32.totalorder %v150, %v175
    %vm218 = vcmp.eq.s32.totalorder %v150, %v178
    %vm219 = vcmp.eq.s32.totalorder %v150, %v181
    %vm220 = vcmp.eq.s32.totalorder %v150, %v184
    %vm221 = vcmp.eq.s32.totalorder %v150, %v187
    %vm222 = vcmp.eq.s32.totalorder %v150, %v190
    %vm223 = vcmp.eq.s32.totalorder %v150, %v193
    %vm224 = vcmp.eq.s32.totalorder %v150, %v196
    %vm225 = vcmp.eq.s32.totalorder %v150, %v199
    %vm226 = vcmp.eq.s32.totalorder %v150, %v202
    %vm227 = vcmp.eq.s32.totalorder %v150, %v205
    %vm228 = vcmp.eq.s32.totalorder %v150, %v208
    %vm229 = vcmp.eq.s32.totalorder %v150, %v211
    %vm230 = vcmp.eq.s32.totalorder %v150, %v214
    %v231 = vcvt.f32.s32.to.zero.pseudo %v32
    %v232 = vlaneseq
    %v233 = vshrl.u32 %v232, 7
    %v234 = vsub.s32 2, %v233
    %v235 = vrot.slane %v231, %v234
    %vm236 = vcmp.eq.s32.totalorder %v50, %v235
    %v237 = vsel %vm236, 1, 0
    %v238 = vcvt.s32.f32 %v237
    %v239 = vlaneseq
    %v240 = vshrl.u32 %v239, 7
    %v241 = vsub.s32 0, %v240
    %v242 = vrot.slane %v32, %v241
    %v243 = vmul.f32 %v242, %v31
    %v244 = vadd.f32 %v30, %v243
    %v245 = vpack.c.bf16 %v37, %v33
    %v246 = vpack.c.bf16 %v45, %v41
    %v247 = vpack.c.bf16 %v27, %v26
    %v248 = vpack.c.bf16 %v29, %v28
    %v249 = vpack.c.bf16 1.0, 1.0
    %252 = vrot.lane.b32.xlu0 %v245, 127
    %v253 = vpop.permute.xlu0 %252
    %254 = vrot.lane.b32.xlu0 %v246, 127
    %v255 = vpop.permute.xlu0 %254
    %vm256 = vcmask 269312
    %v258 = vsel %vm256, %v253, 0
    %v261 = vsel %vm256, %v255, 0
    %vm263 = vcmask 1040384
    %v264 = vsel 0, 4294967295, 65535
    %v265 = vsel %vm263, %v264, 0
    %v267 = vand.u32 %v249, %v265
    %269 = vmatprep.subr.bf16.mxu0 0
    %270 = vmatpush1.bf16.msra.mxu0 %v247
    %271 = vmatprep.subr.bf16.mxu0 0
    %272 = vmatpush1.bf16.msra.mxu0 %v248
    %273 = vmatprep.subr.bf16.mxu0 0
    %274 = vmatpush1.bf16.msra.mxu0 %v267
    %275 = vmatprep.subr.bf16.mxu0 0
    %276 = vmatpush1.bf16.msra.mxu0 0
    %277 = vmatprep.subr.bf16.mxu0 0
    %278 = vmatpush1.bf16.msra.mxu0 0
    %279 = vmatprep.subr.bf16.mxu0 0
    %280 = vmatpush1.bf16.msra.mxu0 0
    %281 = vmatprep.subr.bf16.mxu0 0
    %282 = vmatpush1.bf16.msra.mxu0 0
    %283 = vmatprep.subr.bf16.mxu0 0
    %284 = vmatpush1.bf16.msra.mxu0 0
    %285 = vmatprep.subr.bf16.mxu0 0
    %286 = vmatpush1.bf16.msra.mxu0 0
    %287 = vmatprep.subr.bf16.mxu0 0
    %288 = vmatpush1.bf16.msra.mxu0 0
    %289 = vmatprep.subr.bf16.mxu0 0
    %290 = vmatpush1.bf16.msra.mxu0 0
    %291 = vmatprep.subr.bf16.mxu0 0
    %292 = vmatpush1.bf16.msra.mxu0 0
    %293 = vmatprep.subr.bf16.mxu0 0
    %294 = vmatpush1.bf16.msra.mxu0 0
    %295 = vmatprep.subr.bf16.mxu0 0
    %296 = vmatpush1.bf16.msra.mxu0 0
    %297 = vmatprep.subr.bf16.mxu0 0
    %298 = vmatpush1.bf16.msra.mxu0 0
    %299 = vmatprep.subr.bf16.mxu0 0
    %300 = vmatpush1.bf16.msra.mxu0 0
    %301 = vmatprep.mubr.bf16.mxu0 0
    %302 = vmatmul.mubr.bf16.gmra.mrb[0].mxu0 %v258
    %v303 = vpop.f32.mrb[0].mxu0
    %v304 = vadd.f32 0.0, %v303
    %v305 = vpop.f32.mrb[0].mxu0
    %v306 = vpop.f32.mrb[0].mxu0
    %v307 = vadd.f32 0.0, %v306
    %v308 = vpop.f32.mrb[0].mxu0
    %309 = vmatprep.mubr.bf16.mxu0 0
    %310 = vmatmul.mubr.bf16.gmra.mrb[0].mxu0 %v261
    %v311 = vpop.f32.mrb[0].mxu0
    %v312 = vadd.f32 0.0, %v311
    %v313 = vpop.f32.mrb[0].mxu0
    %v314 = vpop.f32.mrb[0].mxu0
    %v315 = vadd.f32 0.0, %v314
    %v316 = vpop.f32.mrb[0].mxu0
    %317 = vdwg.mxu0
    %v318 = vpack.c.bf16 %v307, %v304
    %v319 = vpack.c.bf16 %v315, %v312
    %v320 = vpack.c.bf16 %v244, %v244
    %v321 = vsel %vm70, 1, 0
    %v322 = vsel %vm71, 1, 0
    %v323 = vsel %vm72, 1, 0
    %v324 = vsel %vm73, 1, 0
    %v325 = vsel %vm74, 1, 0
    %v326 = vsel %vm75, 1, 0
    %v327 = vsel %vm76, 1, 0
    %v328 = vsel %vm77, 1, 0
    %v329 = vsel %vm78, 1, 0
    %v330 = vsel %vm79, 1, 0
    %v331 = vsel %vm80, 1, 0
    %v332 = vsel %vm81, 1, 0
    %v333 = vsel %vm82, 1, 0
    %v334 = vsel %vm83, 1, 0
    %v335 = vsel %vm84, 1, 0
    %v336 = vsel %vm85, 1, 0
    %v337 = vcvt.s32.f32 %v321
    %v338 = vcvt.s32.f32 %v322
    %v339 = vcvt.s32.f32 %v323
    %v340 = vcvt.s32.f32 %v324
    %v341 = vcvt.s32.f32 %v325
    %v342 = vcvt.s32.f32 %v326
    %v343 = vcvt.s32.f32 %v327
    %v344 = vcvt.s32.f32 %v328
    %v345 = vcvt.s32.f32 %v329
    %v346 = vcvt.s32.f32 %v330
    %v347 = vcvt.s32.f32 %v331
    %v348 = vcvt.s32.f32 %v332
    %v349 = vcvt.s32.f32 %v333
    %v350 = vcvt.s32.f32 %v334
    %v351 = vcvt.s32.f32 %v335
    %v352 = vcvt.s32.f32 %v336
    %v353 = vpack.c.bf16 %v338, %v337
    %v354 = vpack.c.bf16 %v340, %v339
    %v355 = vpack.c.bf16 %v342, %v341
    %v356 = vpack.c.bf16 %v344, %v343
    %v357 = vpack.c.bf16 %v346, %v345
    %v358 = vpack.c.bf16 %v348, %v347
    %v359 = vpack.c.bf16 %v350, %v349
    %v360 = vpack.c.bf16 %v352, %v351
    %361 = vmatprep.subr.bf16.mxu0 0
    %362 = vmatpush1.bf16.msra.mxu0 %v353
    %363 = vmatprep.subr.bf16.mxu0 0
    %364 = vmatpush1.bf16.msra.mxu0 %v354
    %365 = vmatprep.subr.bf16.mxu0 0
    %366 = vmatpush1.bf16.msra.mxu0 %v355
    %367 = vmatprep.subr.bf16.mxu0 0
    %368 = vmatpush1.bf16.msra.mxu0 %v356
    %369 = vmatprep.subr.bf16.mxu0 0
    %370 = vmatpush1.bf16.msra.mxu0 %v357
    %371 = vmatprep.subr.bf16.mxu0 0
    %372 = vmatpush1.bf16.msra.mxu0 %v358
    %373 = vmatprep.subr.bf16.mxu0 0
    %374 = vmatpush1.bf16.msra.mxu0 %v359
    %375 = vmatprep.subr.bf16.mxu0 0
    %376 = vmatpush1.bf16.msra.mxu0 %v360
    %377 = vmatprep.subr.bf16.mxu0 0
    %378 = vmatpush1.bf16.msra.mxu0 0
    %379 = vmatprep.subr.bf16.mxu0 0
    %380 = vmatpush1.bf16.msra.mxu0 0
    %381 = vmatprep.subr.bf16.mxu0 0
    %382 = vmatpush1.bf16.msra.mxu0 0
    %383 = vmatprep.subr.bf16.mxu0 0
    %384 = vmatpush1.bf16.msra.mxu0 0
    %385 = vmatprep.subr.bf16.mxu0 0
    %386 = vmatpush1.bf16.msra.mxu0 0
    %387 = vmatprep.subr.bf16.mxu0 0
    %388 = vmatpush1.bf16.msra.mxu0 0
    %389 = vmatprep.subr.bf16.mxu0 0
    %390 = vmatpush1.bf16.msra.mxu0 0
    %391 = vmatprep.subr.bf16.mxu0 0
    %392 = vmatpush1.bf16.msra.mxu0 0
    %393 = vmatprep.mubr.bf16.mxu0 0
    %394 = vmatmul.mubr.bf16.gmra.mrb[0].mxu0 %v247
    %v395 = vpop.f32.mrb[0].mxu0
    %v396 = vadd.f32 0.0, %v395
    %v397 = vpop.f32.mrb[0].mxu0
    %v398 = vpop.f32.mrb[0].mxu0
    %v399 = vadd.f32 0.0, %v398
    %v400 = vpop.f32.mrb[0].mxu0
    %401 = vmatprep.mubr.bf16.mxu0 0
    %402 = vmatmul.mubr.bf16.gmra.mrb[0].mxu0 %v248
    %v403 = vpop.f32.mrb[0].mxu0
    %v404 = vadd.f32 0.0, %v403
    %v405 = vpop.f32.mrb[0].mxu0
    %v406 = vpop.f32.mrb[0].mxu0
    %v407 = vadd.f32 0.0, %v406
    %v408 = vpop.f32.mrb[0].mxu0
    %409 = vmatprep.mubr.bf16.mxu0 0
    %410 = vmatmul.mubr.bf16.gmra.mrb[0].mxu0 %v318
    %v411 = vpop.f32.mrb[0].mxu0
    %v412 = vadd.f32 0.0, %v411
    %v413 = vpop.f32.mrb[0].mxu0
    %v414 = vpop.f32.mrb[0].mxu0
    %v415 = vadd.f32 0.0, %v414
    %v416 = vpop.f32.mrb[0].mxu0
    %417 = vmatprep.mubr.bf16.mxu0 0
    %418 = vmatmul.mubr.bf16.gmra.mrb[0].mxu0 %v319
    %v419 = vpop.f32.mrb[0].mxu0
    %v420 = vadd.f32 0.0, %v419
    %v421 = vpop.f32.mrb[0].mxu0
    %v422 = vpop.f32.mrb[0].mxu0
    %v423 = vadd.f32 0.0, %v422
    %v424 = vpop.f32.mrb[0].mxu0
    %425 = vmatprep.mubr.bf16.mxu0 0
    %426 = vmatmul.mubr.bf16.gmra.mrb[0].mxu0 %v320
    %v427 = vpop.f32.mrb[0].mxu0
    %v428 = vadd.f32 0.0, %v427
    %v429 = vpop.f32.mrb[0].mxu0
    %v430 = vpop.f32.mrb[0].mxu0
    %v431 = vpop.f32.mrb[0].mxu0
    %432 = vdwg.mxu0
    %v433 = vsel %vm90, 1, 0
    %v434 = vsel %vm91, 1, 0
    %v435 = vsel %vm92, 1, 0
    %v436 = vsel %vm93, 1, 0
    %v437 = vsel %vm94, 1, 0
    %v438 = vsel %vm95, 1, 0
    %v439 = vsel %vm96, 1, 0
    %v440 = vsel %vm97, 1, 0
    %v441 = vsel %vm98, 1, 0
    %v442 = vsel %vm99, 1, 0
    %v443 = vsel %vm100, 1, 0
    %v444 = vsel %vm101, 1, 0
    %v445 = vsel %vm102, 1, 0
    %v446 = vsel %vm103, 1, 0
    %v447 = vsel %vm104, 1, 0
    %v448 = vsel %vm105, 1, 0
    %v449 = vcvt.s32.f32 %v433
    %v450 = vcvt.s32.f32 %v434
    %v451 = vcvt.s32.f32 %v435
    %v452 = vcvt.s32.f32 %v436
    %v453 = vcvt.s32.f32 %v437
    %v454 = vcvt.s32.f32 %v438
    %v455 = vcvt.s32.f32 %v439
    %v456 = vcvt.s32.f32 %v440
    %v457 = vcvt.s32.f32 %v441
    %v458 = vcvt.s32.f32 %v442
    %v459 = vcvt.s32.f32 %v443
    %v460 = vcvt.s32.f32 %v444
    %v461 = vcvt.s32.f32 %v445
    %v462 = vcvt.s32.f32 %v446
    %v463 = vcvt.s32.f32 %v447
    %v464 = vcvt.s32.f32 %v448
    %v465 = vpack.c.bf16 %v450, %v449
    %v466 = vpack.c.bf16 %v452, %v451
    %v467 = vpack.c.bf16 %v454, %v453
    %v468 = vpack.c.bf16 %v456, %v455
    %v469 = vpack.c.bf16 %v458, %v457
    %v470 = vpack.c.bf16 %v460, %v459
    %v471 = vpack.c.bf16 %v462, %v461
    %v472 = vpack.c.bf16 %v464, %v463
    %473 = vmatprep.subr.bf16.mxu0 0
    %474 = vmatpush1.bf16.msra.mxu0 %v465
    %475 = vmatprep.subr.bf16.mxu0 0
    %476 = vmatpush1.bf16.msra.mxu0 %v466
    %477 = vmatprep.subr.bf16.mxu0 0
    %478 = vmatpush1.bf16.msra.mxu0 %v467
    %479 = vmatprep.subr.bf16.mxu0 0
    %480 = vmatpush1.bf16.msra.mxu0 %v468
    %481 = vmatprep.subr.bf16.mxu0 0
    %482 = vmatpush1.bf16.msra.mxu0 %v469
    %483 = vmatprep.subr.bf16.mxu0 0
    %484 = vmatpush1.bf16.msra.mxu0 %v470
    %485 = vmatprep.subr.bf16.mxu0 0
    %486 = vmatpush1.bf16.msra.mxu0 %v471
    %487 = vmatprep.subr.bf16.mxu0 0
    %488 = vmatpush1.bf16.msra.mxu0 %v472
    %489 = vmatprep.subr.bf16.mxu0 0
    %490 = vmatpush1.bf16.msra.mxu0 0
    %491 = vmatprep.subr.bf16.mxu0 0
    %492 = vmatpush1.bf16.msra.mxu0 0
    %493 = vmatprep.subr.bf16.mxu0 0
    %494 = vmatpush1.bf16.msra.mxu0 0
    %495 = vmatprep.subr.bf16.mxu0 0
    %496 = vmatpush1.bf16.msra.mxu0 0
    %497 = vmatprep.subr.bf16.mxu0 0
    %498 = vmatpush1.bf16.msra.mxu0 0
    %499 = vmatprep.subr.bf16.mxu0 0
    %500 = vmatpush1.bf16.msra.mxu0 0
    %501 = vmatprep.subr.bf16.mxu0 0
    %502 = vmatpush1.bf16.msra.mxu0 0
    %503 = vmatprep.subr.bf16.mxu0 0
    %504 = vmatpush1.bf16.msra.mxu0 0
    %505 = vmatprep.mubr.bf16.mxu0 0
    %506 = vmatmul.mubr.bf16.gmra.mrb[0].mxu0 %v247
    %v507 = vpop.f32.mrb[0].mxu0
    %v508 = vadd.f32 0.0, %v507
    %v509 = vpop.f32.mrb[0].mxu0
    %v510 = vpop.f32.mrb[0].mxu0
    %v511 = vadd.f32 0.0, %v510
    %v512 = vpop.f32.mrb[0].mxu0
    %513 = vmatprep.mubr.bf16.mxu0 0
    %514 = vmatmul.mubr.bf16.gmra.mrb[0].mxu0 %v248
    %v515 = vpop.f32.mrb[0].mxu0
    %v516 = vadd.f32 0.0, %v515
    %v517 = vpop.f32.mrb[0].mxu0
    %v518 = vpop.f32.mrb[0].mxu0
    %v519 = vadd.f32 0.0, %v518
    %v520 = vpop.f32.mrb[0].mxu0
    %521 = vmatprep.mubr.bf16.mxu0 0
    %522 = vmatmul.mubr.bf16.gmra.mrb[0].mxu0 %v318
    %v523 = vpop.f32.mrb[0].mxu0
    %v524 = vadd.f32 0.0, %v523
    %v525 = vpop.f32.mrb[0].mxu0
    %v526 = vpop.f32.mrb[0].mxu0
    %v527 = vadd.f32 0.0, %v526
    %v528 = vpop.f32.mrb[0].mxu0
    %529 = vmatprep.mubr.bf16.mxu0 0
    %530 = vmatmul.mubr.bf16.gmra.mrb[0].mxu0 %v319
    %v531 = vpop.f32.mrb[0].mxu0
    %v532 = vadd.f32 0.0, %v531
    %v533 = vpop.f32.mrb[0].mxu0
    %v534 = vpop.f32.mrb[0].mxu0
    %v535 = vadd.f32 0.0, %v534
    %v536 = vpop.f32.mrb[0].mxu0
    %537 = vmatprep.mubr.bf16.mxu0 0
    %538 = vmatmul.mubr.bf16.gmra.mrb[0].mxu0 %v320
    %v539 = vpop.f32.mrb[0].mxu0
    %v540 = vadd.f32 0.0, %v539
    %v541 = vpop.f32.mrb[0].mxu0
    %v542 = vpop.f32.mrb[0].mxu0
    %v543 = vpop.f32.mrb[0].mxu0
    %544 = vdwg.mxu0
    %v545 = vsub.f32 %v428, %v540
    %v546 = vmul.f32 %v545, %v545
    %v548 = vrot.slane %v546, 1
    %v550 = vadd.f32 %v546, %v548
    %v551 = vrot.slane %v546, 2
    %v553 = vadd.f32 %v550, %v551
    %v555 = vrot.slane %v540, 1
    %v557 = vmul.f32 %v428, %v555
    %v558 = vrot.slane %v540, 7
    %v560 = vmul.f32 %v428, %v558
    %v562 = vrot.slane %v560, 1
    %v564 = vsub.f32 %v557, %v562
    %v565 = vrot.slane %v540, 6
    %v567 = vmul.f32 %v428, %v565
    %v568 = vrot.slane %v540, 2
    %v570 = vmul.f32 %v428, %v568
    %v572 = vrot.slane %v570, 6
    %v574 = vsub.f32 %v567, %v572
    %v575 = vadd.f32 %v553, 1e-06
    %v576 = vrsqrt.pop %v575
    %v577 = vmul.f32 %v545, %v576
    %v579 = vrot.slane %v576, 7
    %v581 = vmul.f32 %v545, %v579
    %v582 = vrot.slane %v576, 6
    %v584 = vmul.f32 %v545, %v582
    %v585 = vmul.f32 %v564, %v564
    %v586 = vmul.f32 %v574, %v574
    %v588 = vrot.slane %v586, 1
    %v590 = vadd.f32 %v585, %v588
    %v592 = vrot.slane %v585, 7
    %v594 = vadd.f32 %v590, %v592
    %v595 = vadd.f32 %v594, 1e-06
    %v596 = vrsqrt.pop %v595
    %v597 = vmul.f32 %v564, %v596
    %v599 = vrot.slane %v596, 7
    %v601 = vmul.f32 %v574, %v599
    %v602 = vrot.slane %v596, 1
    %v604 = vmul.f32 %v564, %v602
    %v606 = vrot.slane %v604, 7
    %v608 = vmul.f32 %v581, %v606
    %v609 = vmul.f32 %v584, %v601
    %v611 = vrot.slane %v609, 1
    %v613 = vsub.f32 %v608, %v611
    %v615 = vrot.slane %v597, 7
    %v617 = vmul.f32 %v584, %v615
    %v618 = vmul.f32 %v577, %v604
    %v620 = vrot.slane %v618, 6
    %v622 = vsub.f32 %v617, %v620
    %v624 = vrot.slane %v601, 2
    %v626 = vmul.f32 %v577, %v624
    %v627 = vmul.f32 %v581, %v597
    %v629 = vrot.slane %v627, 1
    %v631 = vsub.f32 %v626, %v629
    %v632 = vmul.f32 %v577, %v428
    %v633 = vmul.f32 %v581, %v428
    %v635 = vrot.slane %v633, 1
    %v637 = vadd.f32 %v632, %v635
    %v638 = vmul.f32 %v584, %v428
    %v640 = vrot.slane %v638, 2
    %v642 = vadd.f32 %v637, %v640
    %v644 = vrot.slane %v428, 7
    %v646 = vmul.f32 %v597, %v644
    %v647 = vmul.f32 %v601, %v644
    %v649 = vrot.slane %v647, 1
    %v651 = vadd.f32 %v646, %v649
    %v652 = vrot.slane %v428, 2
    %v654 = vmul.f32 %v604, %v652
    %v656 = vrot.slane %v654, 7
    %v658 = vadd.f32 %v651, %v656
    %v659 = vand.u32 2147483647, %v658
    %v660 = vmul.f32 %v613, %v644
    %v661 = vmul.f32 %v622, %v644
    %v663 = vrot.slane %v661, 1
    %v665 = vadd.f32 %v660, %v663
    %v666 = vmul.f32 %v631, %v652
    %v668 = vrot.slane %v666, 7
    %v670 = vadd.f32 %v665, %v668
    %v671 = vmul.f32 %v577, %v540
    %v672 = vmul.f32 %v581, %v540
    %v674 = vrot.slane %v672, 1
    %v676 = vadd.f32 %v671, %v674
    %v677 = vmul.f32 %v584, %v540
    %v679 = vrot.slane %v677, 2
    %v681 = vadd.f32 %v676, %v679
    %v682 = vmul.f32 %v597, %v558
    %v683 = vmul.f32 %v601, %v558
    %v685 = vrot.slane %v683, 1
    %v687 = vadd.f32 %v682, %v685
    %v688 = vmul.f32 %v604, %v568
    %v690 = vrot.slane %v688, 7
    %v692 = vadd.f32 %v687, %v690
    %v693 = vand.u32 2147483647, %v692
    %v694 = vmul.f32 %v613, %v558
    %v695 = vmul.f32 %v622, %v558
    %v697 = vrot.slane %v695, 1
    %v699 = vadd.f32 %v694, %v697
    %v700 = vmul.f32 %v631, %v568
    %v702 = vrot.slane %v700, 7
    %v704 = vadd.f32 %v699, %v702
    %v705 = vmul.f32 %v642, %v681
    %v706 = vmul.f32 %v659, %v693
    %v708 = vrot.slane %v706, 1
    %v710 = vadd.f32 %v705, %v708
    %v711 = vmul.f32 %v670, %v704
    %v713 = vrot.slane %v711, 1
    %v715 = vadd.f32 %v710, %v713
    %v716 = vmul.f32 %v642, %v642
    %v717 = vmul.f32 %v659, %v659
    %v719 = vrot.slane %v717, 1
    %v721 = vadd.f32 %v716, %v719
    %v722 = vmul.f32 %v670, %v670
    %v724 = vrot.slane %v722, 1
    %v726 = vadd.f32 %v721, %v724
    %v727 = vadd.f32 %v726, 1e-06
    %v728 = vrsqrt.pop %v727
    %v729 = vmul.f32 %v715, %v728
    %v730 = vmul.f32 %v681, %v681
    %v731 = vmul.f32 %v693, %v693
    %v733 = vrot.slane %v731, 1
    %v735 = vadd.f32 %v730, %v733
    %v736 = vmul.f32 %v704, %v704
    %v738 = vrot.slane %v736, 1
    %v740 = vadd.f32 %v735, %v738
    %v741 = vadd.f32 %v740, 1e-06
    %v742 = vrsqrt.pop %v741
    %v743 = vmul.f32 %v729, %v742
    %v744 = vmul.f32 %v743, %v743
    %v745 = vsub.f32 1.0, %v744
    %v746 = vmax.f32 %v745, 0.0
    %v747 = vrsqrt.pop %v746
    %v748 = vmul.f32 %v746, %v747
    %vm749 = vcmp.eq.f32.partialorder %v746, inf
    %v750 = vsel %vm749, %v746, %v748
    %vm751 = vcmp.eq.f32.partialorder %v746, 0.0
    %v752 = vand.u32 %v746, 2147483648
    %v753 = vsel %vm751, %v752, %v750
    %v754 = vlaneseq
    %v755 = vshrl.u32 %v754, 7
    %v756 = vsub.s32 0, %v755
    %v757 = vrot.slane %v642, %v756
    %759 = vset.pattern.permute.xlu0 0
    %760 = vperm.xlu0 %759, %v33
    %v761 = vpop.permute.xlu0 %760
    %764 = vset.pattern.permute.xlu0 0
    %765 = vperm.xlu0 %764, %v37
    %v766 = vpop.permute.xlu0 %765
    %769 = vset.pattern.permute.xlu0 0
    %770 = vperm.xlu0 %769, %v41
    %v771 = vpop.permute.xlu0 %770
    %774 = vset.pattern.permute.xlu0 0
    %775 = vperm.xlu0 %774, %v45
    %v776 = vpop.permute.xlu0 %775
    %v778 = vmul.f32 %v757, %v761
    %v779 = vmul.f32 %v757, %v766
    %v780 = vmul.f32 %v757, %v771
    %v781 = vmul.f32 %v757, %v776
    %v782 = vlaneseq
    %v783 = vshrl.u32 %v782, 7
    %v784 = vsub.s32 1, %v783
    %v785 = vrot.slane %v670, %v784
    %v786 = vmul.f32 %v785, %v761
    %v787 = vmul.f32 %v785, %v766
    %v788 = vmul.f32 %v785, %v771
    %v789 = vmul.f32 %v785, %v776
    %v790 = vand.u32 2147483647, %v778
    %vm791 = vcmp.le.f32.partialorder %v790, 0.7853982
    %vm792 = vcmp.lt.s32.totalorder %v778, 0
    %v793 = vand.u32 %v778, 2139095040
    %v794 = vshrl.u32 %v793, 23
    %v795 = vsub.s32 %v794, 127
    %v796 = vand.u32 2147483647, %v778
    %v797 = vand.u32 %v796, 8388607
    %v798 = vor.u32 %v797, 8388608
    %v799 = vsub.s32 0, %v798
    %v800 = vadd.s32 %v795, 1
    %vm801 = vcmp.gt.s32.totalorder %v800, 0
    %v802 = vsel %vm801, %v800, 0
    %v803 = vshrl.u32 %v802, 5
    %v804 = vand.u32 %v802, 31
    %v805 = vsub.s32 32, %v804
    %v806 = vshrl.u32 683565275, %v805
    %v807 = vshll.u32 683565275, %v804
    %v808 = vshrl.u32 2475754826, %v805
    %v809 = vor.u32 %v807, %v808
    %v810 = vshll.u32 2475754826, %v804
    %v811 = vshrl.u32 2131351028, %v805
    %v812 = vor.u32 %v810, %v811
    %v813 = vshll.u32 2131351028, %v804
    %v814 = vshrl.u32 2102212464, %v805
    %v815 = vor.u32 %v813, %v814
    %v816 = vshll.u32 2102212464, %v804
    %v817 = vshrl.u32 920167782, %v805
    %v818 = vor.u32 %v816, %v817
    %v819 = vshll.u32 920167782, %v804
    %v820 = vshrl.u32 1326507024, %v805
    %v821 = vor.u32 %v819, %v820
    %vm822 = vcmp.lt.s32.totalorder %v803, 1
    %vm823 = vcmp.lt.s32.totalorder %v803, 2
    %vm824 = vcmp.lt.s32.totalorder %v803, 3
    %vm825 = vcmp.lt.s32.totalorder %v803, 4
    %v826 = vsel %vm822, %v806, %v809
    %v827 = vsel %vm825, %v815, 2102212464
    %v828 = vsel %vm824, %v812, %v827
    %v829 = vsel %vm823, %v826, %v828
    %v830 = vsel %vm822, %v809, %v812
    %v831 = vsel %vm825, %v818, 920167782
    %v832 = vsel %vm824, %v815, %v831
    %v833 = vsel %vm823, %v830, %v832
    %v834 = vsel %vm822, %v812, %v815
    %v835 = vsel %vm825, %v821, 1326507024
    %v836 = vsel %vm824, %v818, %v835
    %v837 = vsel %vm823, %v834, %v836
    %v838 = vshll.u32 %v798, 8
    %v839 = vmul.u32.u64.compose %v838, %v837
    %v840 = vextract.low.u32 %v839
    %v841 = vextract.high.u32 %v839
    %v842 = vmul.u32.u64.compose %v838, %v833
    %v843 = vextract.low.u32 %v842
    %v844 = vextract.high.u32 %v842
    %v845 = vmul.u32 %v838, %v829
    %v846 = vadd.s32 %v841, %v843
    %vm847 = vc.u32 %v841, %v843
    %v848 = vadd.s32 %v844, 1
    %v849 = vsel %vm847, %v848, %v844
    %v850 = vadd.s32 %v845, %v849
    %v851 = vadd.s32 %v850, 536870912
    %v852 = vshrl.u32 %v851, 30
    %v853 = vshll.u32 %v852, 30
    %v854 = vsub.s32 %v850, %v853
    %vm855 = vcmp.lt.s32.totalorder %v854, 0
    %v856 = vsub.s32 0, %v854
    %v857 = vsel %vm855, %v856, %v854
    %v858 = vclz %v857
    %v859 = vsub.s32 %v858, 2
    %vm860 = vcmp.gt.s32.totalorder 0, %v859
    %v861 = vsel %vm860, 0, %v859
    %v862 = vsub.s32 32, %v861
    %v863 = vshll.u32 %v854, %v861
    %v864 = vshrl.u32 %v846, %v862
    %v865 = vor.u32 %v863, %v864
    %v866 = vsub.s32 4294967266, %v861
    %v867 = vadd.s32 %v866, 127
    %v868 = vshll.u32 %v867, 23
    %v869 = vor.u32 4788187, %v868
    %v870 = vand.u32 2147483647, %v869
    %v872 = vcvt.s32.f32 %v865
    %v873 = vmul.f32 %v872, %v870
    %v874 = vxor.u32 %v873, 2147483648
    %v875 = vsel %vm792, %v874, %v873
    %v876 = vsub.s32 4, %v852
    %v877 = vsel %vm792, %v876, %v852
    %v878 = vsel %vm791, %v778, %v875
    %v879 = vsel %vm791, 0, %v877
    %v880 = vcosq.f32.pop %v878
    %v881 = vsinq.f32.pop %v878
    %vm882 = vweird.f32 %v778
    %v883 = vadd.s32 %v879, 3
    %v884 = vand.u32 %v883, 3
    %vm885 = vcmp.lt.s32.totalorder %v884, 2
    %vm886 = vcmp.eq.s32.totalorder %v884, 0
    %v887 = vxor.u32 %v881, 2147483648
    %v888 = vsel %vm886, %v880, %v887
    %vm889 = vcmp.eq.s32.totalorder %v884, 2
    %v890 = vxor.u32 %v880, 2147483648
    %v891 = vsel %vm889, %v890, %v881
    %v892 = vsel %vm885, %v888, %v891
    %v893 = vsel %vm882, nan, %v892
    %v894 = vand.u32 2147483647, %v779
    %vm895 = vcmp.le.f32.partialorder %v894, 0.7853982
    %vm896 = vcmp.lt.s32.totalorder %v779, 0
    %v897 = vand.u32 %v779, 2139095040
    %v898 = vshrl.u32 %v897, 23
    %v899 = vsub.s32 %v898, 127
    %v900 = vand.u32 2147483647, %v779
    %v901 = vand.u32 %v900, 8388607
    %v902 = vor.u32 %v901, 8388608
    %v903 = vsub.s32 0, %v902
    %v904 = vadd.s32 %v899, 1
    %vm905 = vcmp.gt.s32.totalorder %v904, 0
    %v906 = vsel %vm905, %v904, 0
    %v907 = vshrl.u32 %v906, 5
    %v908 = vand.u32 %v906, 31
    %v909 = vsub.s32 32, %v908
    %v910 = vshrl.u32 683565275, %v909
    %v911 = vshll.u32 683565275, %v908
    %v912 = vshrl.u32 2475754826, %v909
    %v913 = vor.u32 %v911, %v912
    %v914 = vshll.u32 2475754826, %v908
    %v915 = vshrl.u32 2131351028, %v909
    %v916 = vor.u32 %v914, %v915
    %v917 = vshll.u32 2131351028, %v908
    %v918 = vshrl.u32 2102212464, %v909
    %v919 = vor.u32 %v917, %v918
    %v920 = vshll.u32 2102212464, %v908
    %v921 = vshrl.u32 920167782, %v909
    %v922 = vor.u32 %v920, %v921
    %v923 = vshll.u32 920167782, %v908
    %v924 = vshrl.u32 1326507024, %v909
    %v925 = vor.u32 %v923, %v924
    %vm926 = vcmp.lt.s32.totalorder %v907, 1
    %vm927 = vcmp.lt.s32.totalorder %v907, 2
    %vm928 = vcmp.lt.s32.totalorder %v907, 3
    %vm929 = vcmp.lt.s32.totalorder %v907, 4
    %v930 = vsel %vm926, %v910, %v913
    %v931 = vsel %vm929, %v919, 2102212464
    %v932 = vsel %vm928, %v916, %v931
    %v933 = vsel %vm927, %v930, %v932
    %v934 = vsel %vm926, %v913, %v916
    %v935 = vsel %vm929, %v922, 920167782
    %v936 = vsel %vm928, %v919, %v935
    %v937 = vsel %vm927, %v934, %v936
    %v938 = vsel %vm926, %v916, %v919
    %v939 = vsel %vm929, %v925, 1326507024
    %v940 = vsel %vm928, %v922, %v939
    %v941 = vsel %vm927, %v938, %v940
    %v942 = vshll.u32 %v902, 8
    %v943 = vmul.u32.u64.compose %v942, %v941
    %v944 = vextract.low.u32 %v943
    %v945 = vextract.high.u32 %v943
    %v946 = vmul.u32.u64.compose %v942, %v937
    %v947 = vextract.low.u32 %v946
    %v948 = vextract.high.u32 %v946
    %v949 = vmul.u32 %v942, %v933
    %v950 = vadd.s32 %v945, %v947
    %vm951 = vc.u32 %v945, %v947
    %v952 = vadd.s32 %v948, 1
    %v953 = vsel %vm951, %v952, %v948
    %v954 = vadd.s32 %v949, %v953
    %v955 = vadd.s32 %v954, 536870912
    %v956 = vshrl.u32 %v955, 30
    %v957 = vshll.u32 %v956, 30
    %v958 = vsub.s32 %v954, %v957
    %vm959 = vcmp.lt.s32.totalorder %v958, 0
    %v960 = vsub.s32 0, %v958
    %v961 = vsel %vm959, %v960, %v958
    %v962 = vclz %v961
    %v963 = vsub.s32 %v962, 2
    %vm964 = vcmp.gt.s32.totalorder 0, %v963
    %v965 = vsel %vm964, 0, %v963
    %v966 = vsub.s32 32, %v965
    %v967 = vshll.u32 %v958, %v965
    %v968 = vshrl.u32 %v950, %v966
    %v969 = vor.u32 %v967, %v968
    %v970 = vsub.s32 4294967266, %v965
    %v971 = vadd.s32 %v970, 127
    %v972 = vshll.u32 %v971, 23
    %v973 = vor.u32 4788187, %v972
    %v974 = vand.u32 2147483647, %v973
    %v976 = vcvt.s32.f32 %v969
    %v977 = vmul.f32 %v976, %v974
    %v978 = vxor.u32 %v977, 2147483648
    %v979 = vsel %vm896, %v978, %v977
    %v980 = vsub.s32 4, %v956
    %v981 = vsel %vm896, %v980, %v956
    %v982 = vsel %vm895, %v779, %v979
    %v983 = vsel %vm895, 0, %v981
    %v984 = vcosq.f32.pop %v982
    %v985 = vsinq.f32.pop %v982
    %vm986 = vweird.f32 %v779
    %v987 = vadd.s32 %v983, 3
    %v988 = vand.u32 %v987, 3
    %vm989 = vcmp.lt.s32.totalorder %v988, 2
    %vm990 = vcmp.eq.s32.totalorder %v988, 0
    %v991 = vxor.u32 %v985, 2147483648
    %v992 = vsel %vm990, %v984, %v991
    %vm993 = vcmp.eq.s32.totalorder %v988, 2
    %v994 = vxor.u32 %v984, 2147483648
    %v995 = vsel %vm993, %v994, %v985
    %v996 = vsel %vm989, %v992, %v995
    %v997 = vsel %vm986, nan, %v996
    %v998 = vand.u32 2147483647, %v780
    %vm999 = vcmp.le.f32.partialorder %v998, 0.7853982
    %vm1000 = vcmp.lt.s32.totalorder %v780, 0
    %v1001 = vand.u32 %v780, 2139095040
    %v1002 = vshrl.u32 %v1001, 23
    %v1003 = vsub.s32 %v1002, 127
    %v1004 = vand.u32 2147483647, %v780
    %v1005 = vand.u32 %v1004, 8388607
    %v1006 = vor.u32 %v1005, 8388608
    %v1007 = vsub.s32 0, %v1006
    %v1008 = vadd.s32 %v1003, 1
    %vm1009 = vcmp.gt.s32.totalorder %v1008, 0
    %v1010 = vsel %vm1009, %v1008, 0
    %v1011 = vshrl.u32 %v1010, 5
    %v1012 = vand.u32 %v1010, 31
    %v1013 = vsub.s32 32, %v1012
    %v1014 = vshrl.u32 683565275, %v1013
    %v1015 = vshll.u32 683565275, %v1012
    %v1016 = vshrl.u32 2475754826, %v1013
    %v1017 = vor.u32 %v1015, %v1016
    %v1018 = vshll.u32 2475754826, %v1012
    %v1019 = vshrl.u32 2131351028, %v1013
    %v1020 = vor.u32 %v1018, %v1019
    %v1021 = vshll.u32 2131351028, %v1012
    %v1022 = vshrl.u32 2102212464, %v1013
    %v1023 = vor.u32 %v1021, %v1022
    %v1024 = vshll.u32 2102212464, %v1012
    %v1025 = vshrl.u32 920167782, %v1013
    %v1026 = vor.u32 %v1024, %v1025
    %v1027 = vshll.u32 920167782, %v1012
    %v1028 = vshrl.u32 1326507024, %v1013
    %v1029 = vor.u32 %v1027, %v1028
    %vm1030 = vcmp.lt.s32.totalorder %v1011, 1
    %vm1031 = vcmp.lt.s32.totalorder %v1011, 2
    %vm1032 = vcmp.lt.s32.totalorder %v1011, 3
    %vm1033 = vcmp.lt.s32.totalorder %v1011, 4
    %v1034 = vsel %vm1030, %v1014, %v1017
    %v1035 = vsel %vm1033, %v1023, 2102212464
    %v1036 = vsel %vm1032, %v1020, %v1035
    %v1037 = vsel %vm1031, %v1034, %v1036
    %v1038 = vsel %vm1030, %v1017, %v1020
    %v1039 = vsel %vm1033, %v1026, 920167782
    %v1040 = vsel %vm1032, %v1023, %v1039
    %v1041 = vsel %vm1031, %v1038, %v1040
    %v1042 = vsel %vm1030, %v1020, %v1023
    %v1043 = vsel %vm1033, %v1029, 1326507024
    %v1044 = vsel %vm1032, %v1026, %v1043
    %v1045 = vsel %vm1031, %v1042, %v1044
    %v1046 = vshll.u32 %v1006, 8
    %v1047 = vmul.u32.u64.compose %v1046, %v1045
    %v1048 = vextract.low.u32 %v1047
    %v1049 = vextract.high.u32 %v1047
    %v1050 = vmul.u32.u64.compose %v1046, %v1041
    %v1051 = vextract.low.u32 %v1050
    %v1052 = vextract.high.u32 %v1050
    %v1053 = vmul.u32 %v1046, %v1037
    %v1054 = vadd.s32 %v1049, %v1051
    %vm1055 = vc.u32 %v1049, %v1051
    %v1056 = vadd.s32 %v1052, 1
    %v1057 = vsel %vm1055, %v1056, %v1052
    %v1058 = vadd.s32 %v1053, %v1057
    %v1059 = vadd.s32 %v1058, 536870912
    %v1060 = vshrl.u32 %v1059, 30
    %v1061 = vshll.u32 %v1060, 30
    %v1062 = vsub.s32 %v1058, %v1061
    %vm1063 = vcmp.lt.s32.totalorder %v1062, 0
    %v1064 = vsub.s32 0, %v1062
    %v1065 = vsel %vm1063, %v1064, %v1062
    %v1066 = vclz %v1065
    %v1067 = vsub.s32 %v1066, 2
    %vm1068 = vcmp.gt.s32.totalorder 0, %v1067
    %v1069 = vsel %vm1068, 0, %v1067
    %v1070 = vsub.s32 32, %v1069
    %v1071 = vshll.u32 %v1062, %v1069
    %v1072 = vshrl.u32 %v1054, %v1070
    %v1073 = vor.u32 %v1071, %v1072
    %v1074 = vsub.s32 4294967266, %v1069
    %v1075 = vadd.s32 %v1074, 127
    %v1076 = vshll.u32 %v1075, 23
    %v1077 = vor.u32 4788187, %v1076
    %v1078 = vand.u32 2147483647, %v1077
    %v1080 = vcvt.s32.f32 %v1073
    %v1081 = vmul.f32 %v1080, %v1078
    %v1082 = vxor.u32 %v1081, 2147483648
    %v1083 = vsel %vm1000, %v1082, %v1081
    %v1084 = vsub.s32 4, %v1060
    %v1085 = vsel %vm1000, %v1084, %v1060
    %v1086 = vsel %vm999, %v780, %v1083
    %v1087 = vsel %vm999, 0, %v1085
    %v1088 = vcosq.f32.pop %v1086
    %v1089 = vsinq.f32.pop %v1086
    %vm1090 = vweird.f32 %v780
    %v1091 = vadd.s32 %v1087, 3
    %v1092 = vand.u32 %v1091, 3
    %vm1093 = vcmp.lt.s32.totalorder %v1092, 2
    %vm1094 = vcmp.eq.s32.totalorder %v1092, 0
    %v1095 = vxor.u32 %v1089, 2147483648
    %v1096 = vsel %vm1094, %v1088, %v1095
    %vm1097 = vcmp.eq.s32.totalorder %v1092, 2
    %v1098 = vxor.u32 %v1088, 2147483648
    %v1099 = vsel %vm1097, %v1098, %v1089
    %v1100 = vsel %vm1093, %v1096, %v1099
    %v1101 = vsel %vm1090, nan, %v1100
    %v1102 = vand.u32 2147483647, %v781
    %vm1103 = vcmp.le.f32.partialorder %v1102, 0.7853982
    %vm1104 = vcmp.lt.s32.totalorder %v781, 0
    %v1105 = vand.u32 %v781, 2139095040
    %v1106 = vshrl.u32 %v1105, 23
    %v1107 = vsub.s32 %v1106, 127
    %v1108 = vand.u32 2147483647, %v781
    %v1109 = vand.u32 %v1108, 8388607
    %v1110 = vor.u32 %v1109, 8388608
    %v1111 = vsub.s32 0, %v1110
    %v1112 = vadd.s32 %v1107, 1
    %vm1113 = vcmp.gt.s32.totalorder %v1112, 0
    %v1114 = vsel %vm1113, %v1112, 0
    %v1115 = vshrl.u32 %v1114, 5
    %v1116 = vand.u32 %v1114, 31
    %v1117 = vsub.s32 32, %v1116
    %v1118 = vshrl.u32 683565275, %v1117
    %v1119 = vshll.u32 683565275, %v1116
    %v1120 = vshrl.u32 2475754826, %v1117
    %v1121 = vor.u32 %v1119, %v1120
    %v1122 = vshll.u32 2475754826, %v1116
    %v1123 = vshrl.u32 2131351028, %v1117
    %v1124 = vor.u32 %v1122, %v1123
    %v1125 = vshll.u32 2131351028, %v1116
    %v1126 = vshrl.u32 2102212464, %v1117
    %v1127 = vor.u32 %v1125, %v1126
    %v1128 = vshll.u32 2102212464, %v1116
    %v1129 = vshrl.u32 920167782, %v1117
    %v1130 = vor.u32 %v1128, %v1129
    %v1131 = vshll.u32 920167782, %v1116
    %v1132 = vshrl.u32 1326507024, %v1117
    %v1133 = vor.u32 %v1131, %v1132
    %vm1134 = vcmp.lt.s32.totalorder %v1115, 1
    %vm1135 = vcmp.lt.s32.totalorder %v1115, 2
    %vm1136 = vcmp.lt.s32.totalorder %v1115, 3
    %vm1137 = vcmp.lt.s32.totalorder %v1115, 4
    %v1138 = vsel %vm1134, %v1118, %v1121
    %v1139 = vsel %vm1137, %v1127, 2102212464
    %v1140 = vsel %vm1136, %v1124, %v1139
    %v1141 = vsel %vm1135, %v1138, %v1140
    %v1142 = vsel %vm1134, %v1121, %v1124
    %v1143 = vsel %vm1137, %v1130, 920167782
    %v1144 = vsel %vm1136, %v1127, %v1143
    %v1145 = vsel %vm1135, %v1142, %v1144
    %v1146 = vsel %vm1134, %v1124, %v1127
    %v1147 = vsel %vm1137, %v1133, 1326507024
    %v1148 = vsel %vm1136, %v1130, %v1147
    %v1149 = vsel %vm1135, %v1146, %v1148
    %v1150 = vshll.u32 %v1110, 8
    %v1151 = vmul.u32.u64.compose %v1150, %v1149
    %v1152 = vextract.low.u32 %v1151
    %v1153 = vextract.high.u32 %v1151
    %v1154 = vmul.u32.u64.compose %v1150, %v1145
    %v1155 = vextract.low.u32 %v1154
    %v1156 = vextract.high.u32 %v1154
    %v1157 = vmul.u32 %v1150, %v1141
    %v1158 = vadd.s32 %v1153, %v1155
    %vm1159 = vc.u32 %v1153, %v1155
    %v1160 = vadd.s32 %v1156, 1
    %v1161 = vsel %vm1159, %v1160, %v1156
    %v1162 = vadd.s32 %v1157, %v1161
    %v1163 = vadd.s32 %v1162, 536870912
    %v1164 = vshrl.u32 %v1163, 30
    %v1165 = vshll.u32 %v1164, 30
    %v1166 = vsub.s32 %v1162, %v1165
    %vm1167 = vcmp.lt.s32.totalorder %v1166, 0
    %v1168 = vsub.s32 0, %v1166
    %v1169 = vsel %vm1167, %v1168, %v1166
    %v1170 = vclz %v1169
    %v1171 = vsub.s32 %v1170, 2
    %vm1172 = vcmp.gt.s32.totalorder 0, %v1171
    %v1173 = vsel %vm1172, 0, %v1171
    %v1174 = vsub.s32 32, %v1173
    %v1175 = vshll.u32 %v1166, %v1173
    %v1176 = vshrl.u32 %v1158, %v1174
    %v1177 = vor.u32 %v1175, %v1176
    %v1178 = vsub.s32 4294967266, %v1173
    %v1179 = vadd.s32 %v1178, 127
    %v1180 = vshll.u32 %v1179, 23
    %v1181 = vor.u32 4788187, %v1180
    %v1182 = vand.u32 2147483647, %v1181
    %v1184 = vcvt.s32.f32 %v1177
    %v1185 = vmul.f32 %v1184, %v1182
    %v1186 = vxor.u32 %v1185, 2147483648
    %v1187 = vsel %vm1104, %v1186, %v1185
    %v1188 = vsub.s32 4, %v1164
    %v1189 = vsel %vm1104, %v1188, %v1164
    %v1190 = vsel %vm1103, %v781, %v1187
    %v1191 = vsel %vm1103, 0, %v1189
    %v1192 = vcosq.f32.pop %v1190
    %v1193 = vsinq.f32.pop %v1190
    %vm1194 = vweird.f32 %v781
    %v1195 = vadd.s32 %v1191, 3
    %v1196 = vand.u32 %v1195, 3
    %vm1197 = vcmp.lt.s32.totalorder %v1196, 2
    %vm1198 = vcmp.eq.s32.totalorder %v1196, 0
    %v1199 = vxor.u32 %v1193, 2147483648
    %v1200 = vsel %vm1198, %v1192, %v1199
    %vm1201 = vcmp.eq.s32.totalorder %v1196, 2
    %v1202 = vxor.u32 %v1192, 2147483648
    %v1203 = vsel %vm1201, %v1202, %v1193
    %v1204 = vsel %vm1197, %v1200, %v1203
    %v1205 = vsel %vm1194, nan, %v1204
    %v1206 = vand.u32 2147483647, %v778
    %vm1207 = vcmp.le.f32.partialorder %v1206, 0.7853982
    %vm1208 = vcmp.lt.s32.totalorder %v778, 0
    %v1209 = vand.u32 %v778, 2139095040
    %v1210 = vshrl.u32 %v1209, 23
    %v1211 = vsub.s32 %v1210, 127
    %v1212 = vand.u32 2147483647, %v778
    %v1213 = vand.u32 %v1212, 8388607
    %v1214 = vor.u32 %v1213, 8388608
    %v1215 = vsub.s32 0, %v1214
    %v1216 = vadd.s32 %v1211, 1
    %vm1217 = vcmp.gt.s32.totalorder %v1216, 0
    %v1218 = vsel %vm1217, %v1216, 0
    %v1219 = vshrl.u32 %v1218, 5
    %v1220 = vand.u32 %v1218, 31
    %v1221 = vsub.s32 32, %v1220
    %v1222 = vshrl.u32 683565275, %v1221
    %v1223 = vshll.u32 683565275, %v1220
    %v1224 = vshrl.u32 2475754826, %v1221
    %v1225 = vor.u32 %v1223, %v1224
    %v1226 = vshll.u32 2475754826, %v1220
    %v1227 = vshrl.u32 2131351028, %v1221
    %v1228 = vor.u32 %v1226, %v1227
    %v1229 = vshll.u32 2131351028, %v1220
    %v1230 = vshrl.u32 2102212464, %v1221
    %v1231 = vor.u32 %v1229, %v1230
    %v1232 = vshll.u32 2102212464, %v1220
    %v1233 = vshrl.u32 920167782, %v1221
    %v1234 = vor.u32 %v1232, %v1233
    %v1235 = vshll.u32 920167782, %v1220
    %v1236 = vshrl.u32 1326507024, %v1221
    %v1237 = vor.u32 %v1235, %v1236
    %vm1238 = vcmp.lt.s32.totalorder %v1219, 1
    %vm1239 = vcmp.lt.s32.totalorder %v1219, 2
    %vm1240 = vcmp.lt.s32.totalorder %v1219, 3
    %vm1241 = vcmp.lt.s32.totalorder %v1219, 4
    %v1242 = vsel %vm1238, %v1222, %v1225
    %v1243 = vsel %vm1241, %v1231, 2102212464
    %v1244 = vsel %vm1240, %v1228, %v1243
    %v1245 = vsel %vm1239, %v1242, %v1244
    %v1246 = vsel %vm1238, %v1225, %v1228
    %v1247 = vsel %vm1241, %v1234, 920167782
    %v1248 = vsel %vm1240, %v1231, %v1247
    %v1249 = vsel %vm1239, %v1246, %v1248
    %v1250 = vsel %vm1238, %v1228, %v1231
    %v1251 = vsel %vm1241, %v1237, 1326507024
    %v1252 = vsel %vm1240, %v1234, %v1251
    %v1253 = vsel %vm1239, %v1250, %v1252
    %v1254 = vshll.u32 %v1214, 8
    %v1255 = vmul.u32.u64.compose %v1254, %v1253
    %v1256 = vextract.low.u32 %v1255
    %v1257 = vextract.high.u32 %v1255
    %v1258 = vmul.u32.u64.compose %v1254, %v1249
    %v1259 = vextract.low.u32 %v1258
    %v1260 = vextract.high.u32 %v1258
    %v1261 = vmul.u32 %v1254, %v1245
    %v1262 = vadd.s32 %v1257, %v1259
    %vm1263 = vc.u32 %v1257, %v1259
    %v1264 = vadd.s32 %v1260, 1
    %v1265 = vsel %vm1263, %v1264, %v1260
    %v1266 = vadd.s32 %v1261, %v1265
    %v1267 = vadd.s32 %v1266, 536870912
    %v1268 = vshrl.u32 %v1267, 30
    %v1269 = vshll.u32 %v1268, 30
    %v1270 = vsub.s32 %v1266, %v1269
    %vm1271 = vcmp.lt.s32.totalorder %v1270, 0
    %v1272 = vsub.s32 0, %v1270
    %v1273 = vsel %vm1271, %v1272, %v1270
    %v1274 = vclz %v1273
    %v1275 = vsub.s32 %v1274, 2
    %vm1276 = vcmp.gt.s32.totalorder 0, %v1275
    %v1277 = vsel %vm1276, 0, %v1275
    %v1278 = vsub.s32 32, %v1277
    %v1279 = vshll.u32 %v1270, %v1277
    %v1280 = vshrl.u32 %v1262, %v1278
    %v1281 = vor.u32 %v1279, %v1280
    %v1282 = vsub.s32 4294967266, %v1277
    %v1283 = vadd.s32 %v1282, 127
    %v1284 = vshll.u32 %v1283, 23
    %v1285 = vor.u32 4788187, %v1284
    %v1286 = vand.u32 2147483647, %v1285
    %v1288 = vcvt.s32.f32 %v1281
    %v1289 = vmul.f32 %v1288, %v1286
    %v1290 = vxor.u32 %v1289, 2147483648
    %v1291 = vsel %vm1208, %v1290, %v1289
    %v1292 = vsub.s32 4, %v1268
    %v1293 = vsel %vm1208, %v1292, %v1268
    %v1294 = vsel %vm1207, %v778, %v1291
    %v1295 = vsel %vm1207, 0, %v1293
    %v1296 = vcosq.f32.pop %v1294
    %v1297 = vsinq.f32.pop %v1294
    %vm1298 = vweird.f32 %v778
    %v1299 = vand.u32 %v1295, 3
    %vm1300 = vcmp.lt.s32.totalorder %v1299, 2
    %vm1301 = vcmp.eq.s32.totalorder %v1299, 0
    %v1302 = vxor.u32 %v1297, 2147483648
    %v1303 = vsel %vm1301, %v1296, %v1302
    %vm1304 = vcmp.eq.s32.totalorder %v1299, 2
    %v1305 = vxor.u32 %v1296, 2147483648
    %v1306 = vsel %vm1304, %v1305, %v1297
    %v1307 = vsel %vm1300, %v1303, %v1306
    %v1308 = vsel %vm1298, nan, %v1307
    %v1309 = vand.u32 2147483647, %v779
    %vm1310 = vcmp.le.f32.partialorder %v1309, 0.7853982
    %vm1311 = vcmp.lt.s32.totalorder %v779, 0
    %v1312 = vand.u32 %v779, 2139095040
    %v1313 = vshrl.u32 %v1312, 23
    %v1314 = vsub.s32 %v1313, 127
    %v1315 = vand.u32 2147483647, %v779
    %v1316 = vand.u32 %v1315, 8388607
    %v1317 = vor.u32 %v1316, 8388608
    %v1318 = vsub.s32 0, %v1317
    %v1319 = vadd.s32 %v1314, 1
    %vm1320 = vcmp.gt.s32.totalorder %v1319, 0
    %v1321 = vsel %vm1320, %v1319, 0
    %v1322 = vshrl.u32 %v1321, 5
    %v1323 = vand.u32 %v1321, 31
    %v1324 = vsub.s32 32, %v1323
    %v1325 = vshrl.u32 683565275, %v1324
    %v1326 = vshll.u32 683565275, %v1323
    %v1327 = vshrl.u32 2475754826, %v1324
    %v1328 = vor.u32 %v1326, %v1327
    %v1329 = vshll.u32 2475754826, %v1323
    %v1330 = vshrl.u32 2131351028, %v1324
    %v1331 = vor.u32 %v1329, %v1330
    %v1332 = vshll.u32 2131351028, %v1323
    %v1333 = vshrl.u32 2102212464, %v1324
    %v1334 = vor.u32 %v1332, %v1333
    %v1335 = vshll.u32 2102212464, %v1323
    %v1336 = vshrl.u32 920167782, %v1324
    %v1337 = vor.u32 %v1335, %v1336
    %v1338 = vshll.u32 920167782, %v1323
    %v1339 = vshrl.u32 1326507024, %v1324
    %v1340 = vor.u32 %v1338, %v1339
    %vm1341 = vcmp.lt.s32.totalorder %v1322, 1
    %vm1342 = vcmp.lt.s32.totalorder %v1322, 2
    %vm1343 = vcmp.lt.s32.totalorder %v1322, 3
    %vm1344 = vcmp.lt.s32.totalorder %v1322, 4
    %v1345 = vsel %vm1341, %v1325, %v1328
    %v1346 = vsel %vm1344, %v1334, 2102212464
    %v1347 = vsel %vm1343, %v1331, %v1346
    %v1348 = vsel %vm1342, %v1345, %v1347
    %v1349 = vsel %vm1341, %v1328, %v1331
    %v1350 = vsel %vm1344, %v1337, 920167782
    %v1351 = vsel %vm1343, %v1334, %v1350
    %v1352 = vsel %vm1342, %v1349, %v1351
    %v1353 = vsel %vm1341, %v1331, %v1334
    %v1354 = vsel %vm1344, %v1340, 1326507024
    %v1355 = vsel %vm1343, %v1337, %v1354
    %v1356 = vsel %vm1342, %v1353, %v1355
    %v1357 = vshll.u32 %v1317, 8
    %v1358 = vmul.u32.u64.compose %v1357, %v1356
    %v1359 = vextract.low.u32 %v1358
    %v1360 = vextract.high.u32 %v1358
    %v1361 = vmul.u32.u64.compose %v1357, %v1352
    %v1362 = vextract.low.u32 %v1361
    %v1363 = vextract.high.u32 %v1361
    %v1364 = vmul.u32 %v1357, %v1348
    %v1365 = vadd.s32 %v1360, %v1362
    %vm1366 = vc.u32 %v1360, %v1362
    %v1367 = vadd.s32 %v1363, 1
    %v1368 = vsel %vm1366, %v1367, %v1363
    %v1369 = vadd.s32 %v1364, %v1368
    %v1370 = vadd.s32 %v1369, 536870912
    %v1371 = vshrl.u32 %v1370, 30
    %v1372 = vshll.u32 %v1371, 30
    %v1373 = vsub.s32 %v1369, %v1372
    %vm1374 = vcmp.lt.s32.totalorder %v1373, 0
    %v1375 = vsub.s32 0, %v1373
    %v1376 = vsel %vm1374, %v1375, %v1373
    %v1377 = vclz %v1376
    %v1378 = vsub.s32 %v1377, 2
    %vm1379 = vcmp.gt.s32.totalorder 0, %v1378
    %v1380 = vsel %vm1379, 0, %v1378
    %v1381 = vsub.s32 32, %v1380
    %v1382 = vshll.u32 %v1373, %v1380
    %v1383 = vshrl.u32 %v1365, %v1381
    %v1384 = vor.u32 %v1382, %v1383
    %v1385 = vsub.s32 4294967266, %v1380
    %v1386 = vadd.s32 %v1385, 127
    %v1387 = vshll.u32 %v1386, 23
    %v1388 = vor.u32 4788187, %v1387
    %v1389 = vand.u32 2147483647, %v1388
    %v1391 = vcvt.s32.f32 %v1384
    %v1392 = vmul.f32 %v1391, %v1389
    %v1393 = vxor.u32 %v1392, 2147483648
    %v1394 = vsel %vm1311, %v1393, %v1392
    %v1395 = vsub.s32 4, %v1371
    %v1396 = vsel %vm1311, %v1395, %v1371
    %v1397 = vsel %vm1310, %v779, %v1394
    %v1398 = vsel %vm1310, 0, %v1396
    %v1399 = vcosq.f32.pop %v1397
    %v1400 = vsinq.f32.pop %v1397
    %vm1401 = vweird.f32 %v779
    %v1402 = vand.u32 %v1398, 3
    %vm1403 = vcmp.lt.s32.totalorder %v1402, 2
    %vm1404 = vcmp.eq.s32.totalorder %v1402, 0
    %v1405 = vxor.u32 %v1400, 2147483648
    %v1406 = vsel %vm1404, %v1399, %v1405
    %vm1407 = vcmp.eq.s32.totalorder %v1402, 2
    %v1408 = vxor.u32 %v1399, 2147483648
    %v1409 = vsel %vm1407, %v1408, %v1400
    %v1410 = vsel %vm1403, %v1406, %v1409
    %v1411 = vsel %vm1401, nan, %v1410
    %v1412 = vand.u32 2147483647, %v780
    %vm1413 = vcmp.le.f32.partialorder %v1412, 0.7853982
    %vm1414 = vcmp.lt.s32.totalorder %v780, 0
    %v1415 = vand.u32 %v780, 2139095040
    %v1416 = vshrl.u32 %v1415, 23
    %v1417 = vsub.s32 %v1416, 127
    %v1418 = vand.u32 2147483647, %v780
    %v1419 = vand.u32 %v1418, 8388607
    %v1420 = vor.u32 %v1419, 8388608
    %v1421 = vsub.s32 0, %v1420
    %v1422 = vadd.s32 %v1417, 1
    %vm1423 = vcmp.gt.s32.totalorder %v1422, 0
    %v1424 = vsel %vm1423, %v1422, 0
    %v1425 = vshrl.u32 %v1424, 5
    %v1426 = vand.u32 %v1424, 31
    %v1427 = vsub.s32 32, %v1426
    %v1428 = vshrl.u32 683565275, %v1427
    %v1429 = vshll.u32 683565275, %v1426
    %v1430 = vshrl.u32 2475754826, %v1427
    %v1431 = vor.u32 %v1429, %v1430
    %v1432 = vshll.u32 2475754826, %v1426
    %v1433 = vshrl.u32 2131351028, %v1427
    %v1434 = vor.u32 %v1432, %v1433
    %v1435 = vshll.u32 2131351028, %v1426
    %v1436 = vshrl.u32 2102212464, %v1427
    %v1437 = vor.u32 %v1435, %v1436
    %v1438 = vshll.u32 2102212464, %v1426
    %v1439 = vshrl.u32 920167782, %v1427
    %v1440 = vor.u32 %v1438, %v1439
    %v1441 = vshll.u32 920167782, %v1426
    %v1442 = vshrl.u32 1326507024, %v1427
    %v1443 = vor.u32 %v1441, %v1442
    %vm1444 = vcmp.lt.s32.totalorder %v1425, 1
    %vm1445 = vcmp.lt.s32.totalorder %v1425, 2
    %vm1446 = vcmp.lt.s32.totalorder %v1425, 3
    %vm1447 = vcmp.lt.s32.totalorder %v1425, 4
    %v1448 = vsel %vm1444, %v1428, %v1431
    %v1449 = vsel %vm1447, %v1437, 2102212464
    %v1450 = vsel %vm1446, %v1434, %v1449
    %v1451 = vsel %vm1445, %v1448, %v1450
    %v1452 = vsel %vm1444, %v1431, %v1434
    %v1453 = vsel %vm1447, %v1440, 920167782
    %v1454 = vsel %vm1446, %v1437, %v1453
    %v1455 = vsel %vm1445, %v1452, %v1454
    %v1456 = vsel %vm1444, %v1434, %v1437
    %v1457 = vsel %vm1447, %v1443, 1326507024
    %v1458 = vsel %vm1446, %v1440, %v1457
    %v1459 = vsel %vm1445, %v1456, %v1458
    %v1460 = vshll.u32 %v1420, 8
    %v1461 = vmul.u32.u64.compose %v1460, %v1459
    %v1462 = vextract.low.u32 %v1461
    %v1463 = vextract.high.u32 %v1461
    %v1464 = vmul.u32.u64.compose %v1460, %v1455
    %v1465 = vextract.low.u32 %v1464
    %v1466 = vextract.high.u32 %v1464
    %v1467 = vmul.u32 %v1460, %v1451
    %v1468 = vadd.s32 %v1463, %v1465
    %vm1469 = vc.u32 %v1463, %v1465
    %v1470 = vadd.s32 %v1466, 1
    %v1471 = vsel %vm1469, %v1470, %v1466
    %v1472 = vadd.s32 %v1467, %v1471
    %v1473 = vadd.s32 %v1472, 536870912
    %v1474 = vshrl.u32 %v1473, 30
    %v1475 = vshll.u32 %v1474, 30
    %v1476 = vsub.s32 %v1472, %v1475
    %vm1477 = vcmp.lt.s32.totalorder %v1476, 0
    %v1478 = vsub.s32 0, %v1476
    %v1479 = vsel %vm1477, %v1478, %v1476
    %v1480 = vclz %v1479
    %v1481 = vsub.s32 %v1480, 2
    %vm1482 = vcmp.gt.s32.totalorder 0, %v1481
    %v1483 = vsel %vm1482, 0, %v1481
    %v1484 = vsub.s32 32, %v1483
    %v1485 = vshll.u32 %v1476, %v1483
    %v1486 = vshrl.u32 %v1468, %v1484
    %v1487 = vor.u32 %v1485, %v1486
    %v1488 = vsub.s32 4294967266, %v1483
    %v1489 = vadd.s32 %v1488, 127
    %v1490 = vshll.u32 %v1489, 23
    %v1491 = vor.u32 4788187, %v1490
    %v1492 = vand.u32 2147483647, %v1491
    %v1494 = vcvt.s32.f32 %v1487
    %v1495 = vmul.f32 %v1494, %v1492
    %v1496 = vxor.u32 %v1495, 2147483648
    %v1497 = vsel %vm1414, %v1496, %v1495
    %v1498 = vsub.s32 4, %v1474
    %v1499 = vsel %vm1414, %v1498, %v1474
    %v1500 = vsel %vm1413, %v780, %v1497
    %v1501 = vsel %vm1413, 0, %v1499
    %v1502 = vcosq.f32.pop %v1500
    %v1503 = vsinq.f32.pop %v1500
    %vm1504 = vweird.f32 %v780
    %v1505 = vand.u32 %v1501, 3
    %vm1506 = vcmp.lt.s32.totalorder %v1505, 2
    %vm1507 = vcmp.eq.s32.totalorder %v1505, 0
    %v1508 = vxor.u32 %v1503, 2147483648
    %v1509 = vsel %vm1507, %v1502, %v1508
    %vm1510 = vcmp.eq.s32.totalorder %v1505, 2
    %v1511 = vxor.u32 %v1502, 2147483648
    %v1512 = vsel %vm1510, %v1511, %v1503
    %v1513 = vsel %vm1506, %v1509, %v1512
    %v1514 = vsel %vm1504, nan, %v1513
    %v1515 = vand.u32 2147483647, %v781
    %vm1516 = vcmp.le.f32.partialorder %v1515, 0.7853982
    %vm1517 = vcmp.lt.s32.totalorder %v781, 0
    %v1518 = vand.u32 %v781, 2139095040
    %v1519 = vshrl.u32 %v1518, 23
    %v1520 = vsub.s32 %v1519, 127
    %v1521 = vand.u32 2147483647, %v781
    %v1522 = vand.u32 %v1521, 8388607
    %v1523 = vor.u32 %v1522, 8388608
    %v1524 = vsub.s32 0, %v1523
    %v1525 = vadd.s32 %v1520, 1
    %vm1526 = vcmp.gt.s32.totalorder %v1525, 0
    %v1527 = vsel %vm1526, %v1525, 0
    %v1528 = vshrl.u32 %v1527, 5
    %v1529 = vand.u32 %v1527, 31
    %v1530 = vsub.s32 32, %v1529
    %v1531 = vshrl.u32 683565275, %v1530
    %v1532 = vshll.u32 683565275, %v1529
    %v1533 = vshrl.u32 2475754826, %v1530
    %v1534 = vor.u32 %v1532, %v1533
    %v1535 = vshll.u32 2475754826, %v1529
    %v1536 = vshrl.u32 2131351028, %v1530
    %v1537 = vor.u32 %v1535, %v1536
    %v1538 = vshll.u32 2131351028, %v1529
    %v1539 = vshrl.u32 2102212464, %v1530
    %v1540 = vor.u32 %v1538, %v1539
    %v1541 = vshll.u32 2102212464, %v1529
    %v1542 = vshrl.u32 920167782, %v1530
    %v1543 = vor.u32 %v1541, %v1542
    %v1544 = vshll.u32 920167782, %v1529
    %v1545 = vshrl.u32 1326507024, %v1530
    %v1546 = vor.u32 %v1544, %v1545
    %vm1547 = vcmp.lt.s32.totalorder %v1528, 1
    %vm1548 = vcmp.lt.s32.totalorder %v1528, 2
    %vm1549 = vcmp.lt.s32.totalorder %v1528, 3
    %vm1550 = vcmp.lt.s32.totalorder %v1528, 4
    %v1551 = vsel %vm1547, %v1531, %v1534
    %v1552 = vsel %vm1550, %v1540, 2102212464
    %v1553 = vsel %vm1549, %v1537, %v1552
    %v1554 = vsel %vm1548, %v1551, %v1553
    %v1555 = vsel %vm1547, %v1534, %v1537
    %v1556 = vsel %vm1550, %v1543, 920167782
    %v1557 = vsel %vm1549, %v1540, %v1556
    %v1558 = vsel %vm1548, %v1555, %v1557
    %v1559 = vsel %vm1547, %v1537, %v1540
    %v1560 = vsel %vm1550, %v1546, 1326507024
    %v1561 = vsel %vm1549, %v1543, %v1560
    %v1562 = vsel %vm1548, %v1559, %v1561
    %v1563 = vshll.u32 %v1523, 8
    %v1564 = vmul.u32.u64.compose %v1563, %v1562
    %v1565 = vextract.low.u32 %v1564
    %v1566 = vextract.high.u32 %v1564
    %v1567 = vmul.u32.u64.compose %v1563, %v1558
    %v1568 = vextract.low.u32 %v1567
    %v1569 = vextract.high.u32 %v1567
    %v1570 = vmul.u32 %v1563, %v1554
    %v1571 = vadd.s32 %v1566, %v1568
    %vm1572 = vc.u32 %v1566, %v1568
    %v1573 = vadd.s32 %v1569, 1
    %v1574 = vsel %vm1572, %v1573, %v1569
    %v1575 = vadd.s32 %v1570, %v1574
    %v1576 = vadd.s32 %v1575, 536870912
    %v1577 = vshrl.u32 %v1576, 30
    %v1578 = vshll.u32 %v1577, 30
    %v1579 = vsub.s32 %v1575, %v1578
    %vm1580 = vcmp.lt.s32.totalorder %v1579, 0
    %v1581 = vsub.s32 0, %v1579
    %v1582 = vsel %vm1580, %v1581, %v1579
    %v1583 = vclz %v1582
    %v1584 = vsub.s32 %v1583, 2
    %vm1585 = vcmp.gt.s32.totalorder 0, %v1584
    %v1586 = vsel %vm1585, 0, %v1584
    %v1587 = vsub.s32 32, %v1586
    %v1588 = vshll.u32 %v1579, %v1586
    %v1589 = vshrl.u32 %v1571, %v1587
    %v1590 = vor.u32 %v1588, %v1589
    %v1591 = vsub.s32 4294967266, %v1586
    %v1592 = vadd.s32 %v1591, 127
    %v1593 = vshll.u32 %v1592, 23
    %v1594 = vor.u32 4788187, %v1593
    %v1595 = vand.u32 2147483647, %v1594
    %v1597 = vcvt.s32.f32 %v1590
    %v1598 = vmul.f32 %v1597, %v1595
    %v1599 = vxor.u32 %v1598, 2147483648
    %v1600 = vsel %vm1517, %v1599, %v1598
    %v1601 = vsub.s32 4, %v1577
    %v1602 = vsel %vm1517, %v1601, %v1577
    %v1603 = vsel %vm1516, %v781, %v1600
    %v1604 = vsel %vm1516, 0, %v1602
    %v1605 = vcosq.f32.pop %v1603
    %v1606 = vsinq.f32.pop %v1603
    %vm1607 = vweird.f32 %v781
    %v1608 = vand.u32 %v1604, 3
    %vm1609 = vcmp.lt.s32.totalorder %v1608, 2
    %vm1610 = vcmp.eq.s32.totalorder %v1608, 0
    %v1611 = vxor.u32 %v1606, 2147483648
    %v1612 = vsel %vm1610, %v1605, %v1611
    %vm1613 = vcmp.eq.s32.totalorder %v1608, 2
    %v1614 = vxor.u32 %v1605, 2147483648
    %v1615 = vsel %vm1613, %v1614, %v1606
    %v1616 = vsel %vm1609, %v1612, %v1615
    %v1617 = vsel %vm1607, nan, %v1616
    %v1618 = vand.u32 2147483647, %v786
    %vm1619 = vcmp.le.f32.partialorder %v1618, 0.7853982
    %vm1620 = vcmp.lt.s32.totalorder %v786, 0
    %v1621 = vand.u32 %v786, 2139095040
    %v1622 = vshrl.u32 %v1621, 23
    %v1623 = vsub.s32 %v1622, 127
    %v1624 = vand.u32 2147483647, %v786
    %v1625 = vand.u32 %v1624, 8388607
    %v1626 = vor.u32 %v1625, 8388608
    %v1627 = vsub.s32 0, %v1626
    %v1628 = vadd.s32 %v1623, 1
    %vm1629 = vcmp.gt.s32.totalorder %v1628, 0
    %v1630 = vsel %vm1629, %v1628, 0
    %v1631 = vshrl.u32 %v1630, 5
    %v1632 = vand.u32 %v1630, 31
    %v1633 = vsub.s32 32, %v1632
    %v1634 = vshrl.u32 683565275, %v1633
    %v1635 = vshll.u32 683565275, %v1632
    %v1636 = vshrl.u32 2475754826, %v1633
    %v1637 = vor.u32 %v1635, %v1636
    %v1638 = vshll.u32 2475754826, %v1632
    %v1639 = vshrl.u32 2131351028, %v1633
    %v1640 = vor.u32 %v1638, %v1639
    %v1641 = vshll.u32 2131351028, %v1632
    %v1642 = vshrl.u32 2102212464, %v1633
    %v1643 = vor.u32 %v1641, %v1642
    %v1644 = vshll.u32 2102212464, %v1632
    %v1645 = vshrl.u32 920167782, %v1633
    %v1646 = vor.u32 %v1644, %v1645
    %v1647 = vshll.u32 920167782, %v1632
    %v1648 = vshrl.u32 1326507024, %v1633
    %v1649 = vor.u32 %v1647, %v1648
    %vm1650 = vcmp.lt.s32.totalorder %v1631, 1
    %vm1651 = vcmp.lt.s32.totalorder %v1631, 2
    %vm1652 = vcmp.lt.s32.totalorder %v1631, 3
    %vm1653 = vcmp.lt.s32.totalorder %v1631, 4
    %v1654 = vsel %vm1650, %v1634, %v1637
    %v1655 = vsel %vm1653, %v1643, 2102212464
    %v1656 = vsel %vm1652, %v1640, %v1655
    %v1657 = vsel %vm1651, %v1654, %v1656
    %v1658 = vsel %vm1650, %v1637, %v1640
    %v1659 = vsel %vm1653, %v1646, 920167782
    %v1660 = vsel %vm1652, %v1643, %v1659
    %v1661 = vsel %vm1651, %v1658, %v1660
    %v1662 = vsel %vm1650, %v1640, %v1643
    %v1663 = vsel %vm1653, %v1649, 1326507024
    %v1664 = vsel %vm1652, %v1646, %v1663
    %v1665 = vsel %vm1651, %v1662, %v1664
    %v1666 = vshll.u32 %v1626, 8
    %v1667 = vmul.u32.u64.compose %v1666, %v1665
    %v1668 = vextract.low.u32 %v1667
    %v1669 = vextract.high.u32 %v1667
    %v1670 = vmul.u32.u64.compose %v1666, %v1661
    %v1671 = vextract.low.u32 %v1670
    %v1672 = vextract.high.u32 %v1670
    %v1673 = vmul.u32 %v1666, %v1657
    %v1674 = vadd.s32 %v1669, %v1671
    %vm1675 = vc.u32 %v1669, %v1671
    %v1676 = vadd.s32 %v1672, 1
    %v1677 = vsel %vm1675, %v1676, %v1672
    %v1678 = vadd.s32 %v1673, %v1677
    %v1679 = vadd.s32 %v1678, 536870912
    %v1680 = vshrl.u32 %v1679, 30
    %v1681 = vshll.u32 %v1680, 30
    %v1682 = vsub.s32 %v1678, %v1681
    %vm1683 = vcmp.lt.s32.totalorder %v1682, 0
    %v1684 = vsub.s32 0, %v1682
    %v1685 = vsel %vm1683, %v1684, %v1682
    %v1686 = vclz %v1685
    %v1687 = vsub.s32 %v1686, 2
    %vm1688 = vcmp.gt.s32.totalorder 0, %v1687
    %v1689 = vsel %vm1688, 0, %v1687
    %v1690 = vsub.s32 32, %v1689
    %v1691 = vshll.u32 %v1682, %v1689
    %v1692 = vshrl.u32 %v1674, %v1690
    %v1693 = vor.u32 %v1691, %v1692
    %v1694 = vsub.s32 4294967266, %v1689
    %v1695 = vadd.s32 %v1694, 127
    %v1696 = vshll.u32 %v1695, 23
    %v1697 = vor.u32 4788187, %v1696
    %v1698 = vand.u32 2147483647, %v1697
    %v1700 = vcvt.s32.f32 %v1693
    %v1701 = vmul.f32 %v1700, %v1698
    %v1702 = vxor.u32 %v1701, 2147483648
    %v1703 = vsel %vm1620, %v1702, %v1701
    %v1704 = vsub.s32 4, %v1680
    %v1705 = vsel %vm1620, %v1704, %v1680
    %v1706 = vsel %vm1619, %v786, %v1703
    %v1707 = vsel %vm1619, 0, %v1705
    %v1708 = vcosq.f32.pop %v1706
    %v1709 = vsinq.f32.pop %v1706
    %vm1710 = vweird.f32 %v786
    %v1711 = vadd.s32 %v1707, 3
    %v1712 = vand.u32 %v1711, 3
    %vm1713 = vcmp.lt.s32.totalorder %v1712, 2
    %vm1714 = vcmp.eq.s32.totalorder %v1712, 0
    %v1715 = vxor.u32 %v1709, 2147483648
    %v1716 = vsel %vm1714, %v1708, %v1715
    %vm1717 = vcmp.eq.s32.totalorder %v1712, 2
    %v1718 = vxor.u32 %v1708, 2147483648
    %v1719 = vsel %vm1717, %v1718, %v1709
    %v1720 = vsel %vm1713, %v1716, %v1719
    %v1721 = vsel %vm1710, nan, %v1720
    %v1722 = vand.u32 2147483647, %v787
    %vm1723 = vcmp.le.f32.partialorder %v1722, 0.7853982
    %vm1724 = vcmp.lt.s32.totalorder %v787, 0
    %v1725 = vand.u32 %v787, 2139095040
    %v1726 = vshrl.u32 %v1725, 23
    %v1727 = vsub.s32 %v1726, 127
    %v1728 = vand.u32 2147483647, %v787
    %v1729 = vand.u32 %v1728, 8388607
    %v1730 = vor.u32 %v1729, 8388608
    %v1731 = vsub.s32 0, %v1730
    %v1732 = vadd.s32 %v1727, 1
    %vm1733 = vcmp.gt.s32.totalorder %v1732, 0
    %v1734 = vsel %vm1733, %v1732, 0
    %v1735 = vshrl.u32 %v1734, 5
    %v1736 = vand.u32 %v1734, 31
    %v1737 = vsub.s32 32, %v1736
    %v1738 = vshrl.u32 683565275, %v1737
    %v1739 = vshll.u32 683565275, %v1736
    %v1740 = vshrl.u32 2475754826, %v1737
    %v1741 = vor.u32 %v1739, %v1740
    %v1742 = vshll.u32 2475754826, %v1736
    %v1743 = vshrl.u32 2131351028, %v1737
    %v1744 = vor.u32 %v1742, %v1743
    %v1745 = vshll.u32 2131351028, %v1736
    %v1746 = vshrl.u32 2102212464, %v1737
    %v1747 = vor.u32 %v1745, %v1746
    %v1748 = vshll.u32 2102212464, %v1736
    %v1749 = vshrl.u32 920167782, %v1737
    %v1750 = vor.u32 %v1748, %v1749
    %v1751 = vshll.u32 920167782, %v1736
    %v1752 = vshrl.u32 1326507024, %v1737
    %v1753 = vor.u32 %v1751, %v1752
    %vm1754 = vcmp.lt.s32.totalorder %v1735, 1
    %vm1755 = vcmp.lt.s32.totalorder %v1735, 2
    %vm1756 = vcmp.lt.s32.totalorder %v1735, 3
    %vm1757 = vcmp.lt.s32.totalorder %v1735, 4
    %v1758 = vsel %vm1754, %v1738, %v1741
    %v1759 = vsel %vm1757, %v1747, 2102212464
    %v1760 = vsel %vm1756, %v1744, %v1759
    %v1761 = vsel %vm1755, %v1758, %v1760
    %v1762 = vsel %vm1754, %v1741, %v1744
    %v1763 = vsel %vm1757, %v1750, 920167782
    %v1764 = vsel %vm1756, %v1747, %v1763
    %v1765 = vsel %vm1755, %v1762, %v1764
    %v1766 = vsel %vm1754, %v1744, %v1747
    %v1767 = vsel %vm1757, %v1753, 1326507024
    %v1768 = vsel %vm1756, %v1750, %v1767
    %v1769 = vsel %vm1755, %v1766, %v1768
    %v1770 = vshll.u32 %v1730, 8
    %v1771 = vmul.u32.u64.compose %v1770, %v1769
    %v1772 = vextract.low.u32 %v1771
    %v1773 = vextract.high.u32 %v1771
    %v1774 = vmul.u32.u64.compose %v1770, %v1765
    %v1775 = vextract.low.u32 %v1774
    %v1776 = vextract.high.u32 %v1774
    %v1777 = vmul.u32 %v1770, %v1761
    %v1778 = vadd.s32 %v1773, %v1775
    %vm1779 = vc.u32 %v1773, %v1775
    %v1780 = vadd.s32 %v1776, 1
    %v1781 = vsel %vm1779, %v1780, %v1776
    %v1782 = vadd.s32 %v1777, %v1781
    %v1783 = vadd.s32 %v1782, 536870912
    %v1784 = vshrl.u32 %v1783, 30
    %v1785 = vshll.u32 %v1784, 30
    %v1786 = vsub.s32 %v1782, %v1785
    %vm1787 = vcmp.lt.s32.totalorder %v1786, 0
    %v1788 = vsub.s32 0, %v1786
    %v1789 = vsel %vm1787, %v1788, %v1786
    %v1790 = vclz %v1789
    %v1791 = vsub.s32 %v1790, 2
    %vm1792 = vcmp.gt.s32.totalorder 0, %v1791
    %v1793 = vsel %vm1792, 0, %v1791
    %v1794 = vsub.s32 32, %v1793
    %v1795 = vshll.u32 %v1786, %v1793
    %v1796 = vshrl.u32 %v1778, %v1794
    %v1797 = vor.u32 %v1795, %v1796
    %v1798 = vsub.s32 4294967266, %v1793
    %v1799 = vadd.s32 %v1798, 127
    %v1800 = vshll.u32 %v1799, 23
    %v1801 = vor.u32 4788187, %v1800
    %v1802 = vand.u32 2147483647, %v1801
    %v1804 = vcvt.s32.f32 %v1797
    %v1805 = vmul.f32 %v1804, %v1802
    %v1806 = vxor.u32 %v1805, 2147483648
    %v1807 = vsel %vm1724, %v1806, %v1805
    %v1808 = vsub.s32 4, %v1784
    %v1809 = vsel %vm1724, %v1808, %v1784
    %v1810 = vsel %vm1723, %v787, %v1807
    %v1811 = vsel %vm1723, 0, %v1809
    %v1812 = vcosq.f32.pop %v1810
    %v1813 = vsinq.f32.pop %v1810
    %vm1814 = vweird.f32 %v787
    %v1815 = vadd.s32 %v1811, 3
    %v1816 = vand.u32 %v1815, 3
    %vm1817 = vcmp.lt.s32.totalorder %v1816, 2
    %vm1818 = vcmp.eq.s32.totalorder %v1816, 0
    %v1819 = vxor.u32 %v1813, 2147483648
    %v1820 = vsel %vm1818, %v1812, %v1819
    %vm1821 = vcmp.eq.s32.totalorder %v1816, 2
    %v1822 = vxor.u32 %v1812, 2147483648
    %v1823 = vsel %vm1821, %v1822, %v1813
    %v1824 = vsel %vm1817, %v1820, %v1823
    %v1825 = vsel %vm1814, nan, %v1824
    %v1826 = vand.u32 2147483647, %v788
    %vm1827 = vcmp.le.f32.partialorder %v1826, 0.7853982
    %vm1828 = vcmp.lt.s32.totalorder %v788, 0
    %v1829 = vand.u32 %v788, 2139095040
    %v1830 = vshrl.u32 %v1829, 23
    %v1831 = vsub.s32 %v1830, 127
    %v1832 = vand.u32 2147483647, %v788
    %v1833 = vand.u32 %v1832, 8388607
    %v1834 = vor.u32 %v1833, 8388608
    %v1835 = vsub.s32 0, %v1834
    %v1836 = vadd.s32 %v1831, 1
    %vm1837 = vcmp.gt.s32.totalorder %v1836, 0
    %v1838 = vsel %vm1837, %v1836, 0
    %v1839 = vshrl.u32 %v1838, 5
    %v1840 = vand.u32 %v1838, 31
    %v1841 = vsub.s32 32, %v1840
    %v1842 = vshrl.u32 683565275, %v1841
    %v1843 = vshll.u32 683565275, %v1840
    %v1844 = vshrl.u32 2475754826, %v1841
    %v1845 = vor.u32 %v1843, %v1844
    %v1846 = vshll.u32 2475754826, %v1840
    %v1847 = vshrl.u32 2131351028, %v1841
    %v1848 = vor.u32 %v1846, %v1847
    %v1849 = vshll.u32 2131351028, %v1840
    %v1850 = vshrl.u32 2102212464, %v1841
    %v1851 = vor.u32 %v1849, %v1850
    %v1852 = vshll.u32 2102212464, %v1840
    %v1853 = vshrl.u32 920167782, %v1841
    %v1854 = vor.u32 %v1852, %v1853
    %v1855 = vshll.u32 920167782, %v1840
    %v1856 = vshrl.u32 1326507024, %v1841
    %v1857 = vor.u32 %v1855, %v1856
    %vm1858 = vcmp.lt.s32.totalorder %v1839, 1
    %vm1859 = vcmp.lt.s32.totalorder %v1839, 2
    %vm1860 = vcmp.lt.s32.totalorder %v1839, 3
    %vm1861 = vcmp.lt.s32.totalorder %v1839, 4
    %v1862 = vsel %vm1858, %v1842, %v1845
    %v1863 = vsel %vm1861, %v1851, 2102212464
    %v1864 = vsel %vm1860, %v1848, %v1863
    %v1865 = vsel %vm1859, %v1862, %v1864
    %v1866 = vsel %vm1858, %v1845, %v1848
    %v1867 = vsel %vm1861, %v1854, 920167782
    %v1868 = vsel %vm1860, %v1851, %v1867
    %v1869 = vsel %vm1859, %v1866, %v1868
    %v1870 = vsel %vm1858, %v1848, %v1851
    %v1871 = vsel %vm1861, %v1857, 1326507024
    %v1872 = vsel %vm1860, %v1854, %v1871
    %v1873 = vsel %vm1859, %v1870, %v1872
    %v1874 = vshll.u32 %v1834, 8
    %v1875 = vmul.u32.u64.compose %v1874, %v1873
    %v1876 = vextract.low.u32 %v1875
    %v1877 = vextract.high.u32 %v1875
    %v1878 = vmul.u32.u64.compose %v1874, %v1869
    %v1879 = vextract.low.u32 %v1878
    %v1880 = vextract.high.u32 %v1878
    %v1881 = vmul.u32 %v1874, %v1865
    %v1882 = vadd.s32 %v1877, %v1879
    %vm1883 = vc.u32 %v1877, %v1879
    %v1884 = vadd.s32 %v1880, 1
    %v1885 = vsel %vm1883, %v1884, %v1880
    %v1886 = vadd.s32 %v1881, %v1885
    %v1887 = vadd.s32 %v1886, 536870912
    %v1888 = vshrl.u32 %v1887, 30
    %v1889 = vshll.u32 %v1888, 30
    %v1890 = vsub.s32 %v1886, %v1889
    %vm1891 = vcmp.lt.s32.totalorder %v1890, 0
    %v1892 = vsub.s32 0, %v1890
    %v1893 = vsel %vm1891, %v1892, %v1890
    %v1894 = vclz %v1893
    %v1895 = vsub.s32 %v1894, 2
    %vm1896 = vcmp.gt.s32.totalorder 0, %v1895
    %v1897 = vsel %vm1896, 0, %v1895
    %v1898 = vsub.s32 32, %v1897
    %v1899 = vshll.u32 %v1890, %v1897
    %v1900 = vshrl.u32 %v1882, %v1898
    %v1901 = vor.u32 %v1899, %v1900
    %v1902 = vsub.s32 4294967266, %v1897
    %v1903 = vadd.s32 %v1902, 127
    %v1904 = vshll.u32 %v1903, 23
    %v1905 = vor.u32 4788187, %v1904
    %v1906 = vand.u32 2147483647, %v1905
    %v1908 = vcvt.s32.f32 %v1901
    %v1909 = vmul.f32 %v1908, %v1906
    %v1910 = vxor.u32 %v1909, 2147483648
    %v1911 = vsel %vm1828, %v1910, %v1909
    %v1912 = vsub.s32 4, %v1888
    %v1913 = vsel %vm1828, %v1912, %v1888
    %v1914 = vsel %vm1827, %v788, %v1911
    %v1915 = vsel %vm1827, 0, %v1913
    %v1916 = vcosq.f32.pop %v1914
    %v1917 = vsinq.f32.pop %v1914
    %vm1918 = vweird.f32 %v788
    %v1919 = vadd.s32 %v1915, 3
    %v1920 = vand.u32 %v1919, 3
    %vm1921 = vcmp.lt.s32.totalorder %v1920, 2
    %vm1922 = vcmp.eq.s32.totalorder %v1920, 0
    %v1923 = vxor.u32 %v1917, 2147483648
    %v1924 = vsel %vm1922, %v1916, %v1923
    %vm1925 = vcmp.eq.s32.totalorder %v1920, 2
    %v1926 = vxor.u32 %v1916, 2147483648
    %v1927 = vsel %vm1925, %v1926, %v1917
    %v1928 = vsel %vm1921, %v1924, %v1927
    %v1929 = vsel %vm1918, nan, %v1928
    %v1930 = vand.u32 2147483647, %v789
    %vm1931 = vcmp.le.f32.partialorder %v1930, 0.7853982
    %vm1932 = vcmp.lt.s32.totalorder %v789, 0
    %v1933 = vand.u32 %v789, 2139095040
    %v1934 = vshrl.u32 %v1933, 23
    %v1935 = vsub.s32 %v1934, 127
    %v1936 = vand.u32 2147483647, %v789
    %v1937 = vand.u32 %v1936, 8388607
    %v1938 = vor.u32 %v1937, 8388608
    %v1939 = vsub.s32 0, %v1938
    %v1940 = vadd.s32 %v1935, 1
    %vm1941 = vcmp.gt.s32.totalorder %v1940, 0
    %v1942 = vsel %vm1941, %v1940, 0
    %v1943 = vshrl.u32 %v1942, 5
    %v1944 = vand.u32 %v1942, 31
    %v1945 = vsub.s32 32, %v1944
    %v1946 = vshrl.u32 683565275, %v1945
    %v1947 = vshll.u32 683565275, %v1944
    %v1948 = vshrl.u32 2475754826, %v1945
    %v1949 = vor.u32 %v1947, %v1948
    %v1950 = vshll.u32 2475754826, %v1944
    %v1951 = vshrl.u32 2131351028, %v1945
    %v1952 = vor.u32 %v1950, %v1951
    %v1953 = vshll.u32 2131351028, %v1944
    %v1954 = vshrl.u32 2102212464, %v1945
    %v1955 = vor.u32 %v1953, %v1954
    %v1956 = vshll.u32 2102212464, %v1944
    %v1957 = vshrl.u32 920167782, %v1945
    %v1958 = vor.u32 %v1956, %v1957
    %v1959 = vshll.u32 920167782, %v1944
    %v1960 = vshrl.u32 1326507024, %v1945
    %v1961 = vor.u32 %v1959, %v1960
    %vm1962 = vcmp.lt.s32.totalorder %v1943, 1
    %vm1963 = vcmp.lt.s32.totalorder %v1943, 2
    %vm1964 = vcmp.lt.s32.totalorder %v1943, 3
    %vm1965 = vcmp.lt.s32.totalorder %v1943, 4
    %v1966 = vsel %vm1962, %v1946, %v1949
    %v1967 = vsel %vm1965, %v1955, 2102212464
    %v1968 = vsel %vm1964, %v1952, %v1967
    %v1969 = vsel %vm1963, %v1966, %v1968
    %v1970 = vsel %vm1962, %v1949, %v1952
    %v1971 = vsel %vm1965, %v1958, 920167782
    %v1972 = vsel %vm1964, %v1955, %v1971
    %v1973 = vsel %vm1963, %v1970, %v1972
    %v1974 = vsel %vm1962, %v1952, %v1955
    %v1975 = vsel %vm1965, %v1961, 1326507024
    %v1976 = vsel %vm1964, %v1958, %v1975
    %v1977 = vsel %vm1963, %v1974, %v1976
    %v1978 = vshll.u32 %v1938, 8
    %v1979 = vmul.u32.u64.compose %v1978, %v1977
    %v1980 = vextract.low.u32 %v1979
    %v1981 = vextract.high.u32 %v1979
    %v1982 = vmul.u32.u64.compose %v1978, %v1973
    %v1983 = vextract.low.u32 %v1982
    %v1984 = vextract.high.u32 %v1982
    %v1985 = vmul.u32 %v1978, %v1969
    %v1986 = vadd.s32 %v1981, %v1983
    %vm1987 = vc.u32 %v1981, %v1983
    %v1988 = vadd.s32 %v1984, 1
    %v1989 = vsel %vm1987, %v1988, %v1984
    %v1990 = vadd.s32 %v1985, %v1989
    %v1991 = vadd.s32 %v1990, 536870912
    %v1992 = vshrl.u32 %v1991, 30
    %v1993 = vshll.u32 %v1992, 30
    %v1994 = vsub.s32 %v1990, %v1993
    %vm1995 = vcmp.lt.s32.totalorder %v1994, 0
    %v1996 = vsub.s32 0, %v1994
    %v1997 = vsel %vm1995, %v1996, %v1994
    %v1998 = vclz %v1997
    %v1999 = vsub.s32 %v1998, 2
    %vm2000 = vcmp.gt.s32.totalorder 0, %v1999
    %v2001 = vsel %vm2000, 0, %v1999
    %v2002 = vsub.s32 32, %v2001
    %v2003 = vshll.u32 %v1994, %v2001
    %v2004 = vshrl.u32 %v1986, %v2002
    %v2005 = vor.u32 %v2003, %v2004
    %v2006 = vsub.s32 4294967266, %v2001
    %v2007 = vadd.s32 %v2006, 127
    %v2008 = vshll.u32 %v2007, 23
    %v2009 = vor.u32 4788187, %v2008
    %v2010 = vand.u32 2147483647, %v2009
    %v2012 = vcvt.s32.f32 %v2005
    %v2013 = vmul.f32 %v2012, %v2010
    %v2014 = vxor.u32 %v2013, 2147483648
    %v2015 = vsel %vm1932, %v2014, %v2013
    %v2016 = vsub.s32 4, %v1992
    %v2017 = vsel %vm1932, %v2016, %v1992
    %v2018 = vsel %vm1931, %v789, %v2015
    %v2019 = vsel %vm1931, 0, %v2017
    %v2020 = vcosq.f32.pop %v2018
    %v2021 = vsinq.f32.pop %v2018
    %vm2022 = vweird.f32 %v789
    %v2023 = vadd.s32 %v2019, 3
    %v2024 = vand.u32 %v2023, 3
    %vm2025 = vcmp.lt.s32.totalorder %v2024, 2
    %vm2026 = vcmp.eq.s32.totalorder %v2024, 0
    %v2027 = vxor.u32 %v2021, 2147483648
    %v2028 = vsel %vm2026, %v2020, %v2027
    %vm2029 = vcmp.eq.s32.totalorder %v2024, 2
    %v2030 = vxor.u32 %v2020, 2147483648
    %v2031 = vsel %vm2029, %v2030, %v2021
    %v2032 = vsel %vm2025, %v2028, %v2031
    %v2033 = vsel %vm2022, nan, %v2032
    %v2034 = vand.u32 2147483647, %v786
    %vm2035 = vcmp.le.f32.partialorder %v2034, 0.7853982
    %vm2036 = vcmp.lt.s32.totalorder %v786, 0
    %v2037 = vand.u32 %v786, 2139095040
    %v2038 = vshrl.u32 %v2037, 23
    %v2039 = vsub.s32 %v2038, 127
    %v2040 = vand.u32 2147483647, %v786
    %v2041 = vand.u32 %v2040, 8388607
    %v2042 = vor.u32 %v2041, 8388608
    %v2043 = vsub.s32 0, %v2042
    %v2044 = vadd.s32 %v2039, 1
    %vm2045 = vcmp.gt.s32.totalorder %v2044, 0
    %v2046 = vsel %vm2045, %v2044, 0
    %v2047 = vshrl.u32 %v2046, 5
    %v2048 = vand.u32 %v2046, 31
    %v2049 = vsub.s32 32, %v2048
    %v2050 = vshrl.u32 683565275, %v2049
    %v2051 = vshll.u32 683565275, %v2048
    %v2052 = vshrl.u32 2475754826, %v2049
    %v2053 = vor.u32 %v2051, %v2052
    %v2054 = vshll.u32 2475754826, %v2048
    %v2055 = vshrl.u32 2131351028, %v2049
    %v2056 = vor.u32 %v2054, %v2055
    %v2057 = vshll.u32 2131351028, %v2048
    %v2058 = vshrl.u32 2102212464, %v2049
    %v2059 = vor.u32 %v2057, %v2058
    %v2060 = vshll.u32 2102212464, %v2048
    %v2061 = vshrl.u32 920167782, %v2049
    %v2062 = vor.u32 %v2060, %v2061
    %v2063 = vshll.u32 920167782, %v2048
    %v2064 = vshrl.u32 1326507024, %v2049
    %v2065 = vor.u32 %v2063, %v2064
    %vm2066 = vcmp.lt.s32.totalorder %v2047, 1
    %vm2067 = vcmp.lt.s32.totalorder %v2047, 2
    %vm2068 = vcmp.lt.s32.totalorder %v2047, 3
    %vm2069 = vcmp.lt.s32.totalorder %v2047, 4
    %v2070 = vsel %vm2066, %v2050, %v2053
    %v2071 = vsel %vm2069, %v2059, 2102212464
    %v2072 = vsel %vm2068, %v2056, %v2071
    %v2073 = vsel %vm2067, %v2070, %v2072
    %v2074 = vsel %vm2066, %v2053, %v2056
    %v2075 = vsel %vm2069, %v2062, 920167782
    %v2076 = vsel %vm2068, %v2059, %v2075
    %v2077 = vsel %vm2067, %v2074, %v2076
    %v2078 = vsel %vm2066, %v2056, %v2059
    %v2079 = vsel %vm2069, %v2065, 1326507024
    %v2080 = vsel %vm2068, %v2062, %v2079
    %v2081 = vsel %vm2067, %v2078, %v2080
    %v2082 = vshll.u32 %v2042, 8
    %v2083 = vmul.u32.u64.compose %v2082, %v2081
    %v2084 = vextract.low.u32 %v2083
    %v2085 = vextract.high.u32 %v2083
    %v2086 = vmul.u32.u64.compose %v2082, %v2077
    %v2087 = vextract.low.u32 %v2086
    %v2088 = vextract.high.u32 %v2086
    %v2089 = vmul.u32 %v2082, %v2073
    %v2090 = vadd.s32 %v2085, %v2087
    %vm2091 = vc.u32 %v2085, %v2087
    %v2092 = vadd.s32 %v2088, 1
    %v2093 = vsel %vm2091, %v2092, %v2088
    %v2094 = vadd.s32 %v2089, %v2093
    %v2095 = vadd.s32 %v2094, 536870912
    %v2096 = vshrl.u32 %v2095, 30
    %v2097 = vshll.u32 %v2096, 30
    %v2098 = vsub.s32 %v2094, %v2097
    %vm2099 = vcmp.lt.s32.totalorder %v2098, 0
    %v2100 = vsub.s32 0, %v2098
    %v2101 = vsel %vm2099, %v2100, %v2098
    %v2102 = vclz %v2101
    %v2103 = vsub.s32 %v2102, 2
    %vm2104 = vcmp.gt.s32.totalorder 0, %v2103
    %v2105 = vsel %vm2104, 0, %v2103
    %v2106 = vsub.s32 32, %v2105
    %v2107 = vshll.u32 %v2098, %v2105
    %v2108 = vshrl.u32 %v2090, %v2106
    %v2109 = vor.u32 %v2107, %v2108
    %v2110 = vsub.s32 4294967266, %v2105
    %v2111 = vadd.s32 %v2110, 127
    %v2112 = vshll.u32 %v2111, 23
    %v2113 = vor.u32 4788187, %v2112
    %v2114 = vand.u32 2147483647, %v2113
    %v2116 = vcvt.s32.f32 %v2109
    %v2117 = vmul.f32 %v2116, %v2114
    %v2118 = vxor.u32 %v2117, 2147483648
    %v2119 = vsel %vm2036, %v2118, %v2117
    %v2120 = vsub.s32 4, %v2096
    %v2121 = vsel %vm2036, %v2120, %v2096
    %v2122 = vsel %vm2035, %v786, %v2119
    %v2123 = vsel %vm2035, 0, %v2121
    %v2124 = vcosq.f32.pop %v2122
    %v2125 = vsinq.f32.pop %v2122
    %vm2126 = vweird.f32 %v786
    %v2127 = vand.u32 %v2123, 3
    %vm2128 = vcmp.lt.s32.totalorder %v2127, 2
    %vm2129 = vcmp.eq.s32.totalorder %v2127, 0
    %v2130 = vxor.u32 %v2125, 2147483648
    %v2131 = vsel %vm2129, %v2124, %v2130
    %vm2132 = vcmp.eq.s32.totalorder %v2127, 2
    %v2133 = vxor.u32 %v2124, 2147483648
    %v2134 = vsel %vm2132, %v2133, %v2125
    %v2135 = vsel %vm2128, %v2131, %v2134
    %v2136 = vsel %vm2126, nan, %v2135
    %v2137 = vand.u32 2147483647, %v787
    %vm2138 = vcmp.le.f32.partialorder %v2137, 0.7853982
    %vm2139 = vcmp.lt.s32.totalorder %v787, 0
    %v2140 = vand.u32 %v787, 2139095040
    %v2141 = vshrl.u32 %v2140, 23
    %v2142 = vsub.s32 %v2141, 127
    %v2143 = vand.u32 2147483647, %v787
    %v2144 = vand.u32 %v2143, 8388607
    %v2145 = vor.u32 %v2144, 8388608
    %v2146 = vsub.s32 0, %v2145
    %v2147 = vadd.s32 %v2142, 1
    %vm2148 = vcmp.gt.s32.totalorder %v2147, 0
    %v2149 = vsel %vm2148, %v2147, 0
    %v2150 = vshrl.u32 %v2149, 5
    %v2151 = vand.u32 %v2149, 31
    %v2152 = vsub.s32 32, %v2151
    %v2153 = vshrl.u32 683565275, %v2152
    %v2154 = vshll.u32 683565275, %v2151
    %v2155 = vshrl.u32 2475754826, %v2152
    %v2156 = vor.u32 %v2154, %v2155
    %v2157 = vshll.u32 2475754826, %v2151
    %v2158 = vshrl.u32 2131351028, %v2152
    %v2159 = vor.u32 %v2157, %v2158
    %v2160 = vshll.u32 2131351028, %v2151
    %v2161 = vshrl.u32 2102212464, %v2152
    %v2162 = vor.u32 %v2160, %v2161
    %v2163 = vshll.u32 2102212464, %v2151
    %v2164 = vshrl.u32 920167782, %v2152
    %v2165 = vor.u32 %v2163, %v2164
    %v2166 = vshll.u32 920167782, %v2151
    %v2167 = vshrl.u32 1326507024, %v2152
    %v2168 = vor.u32 %v2166, %v2167
    %vm2169 = vcmp.lt.s32.totalorder %v2150, 1
    %vm2170 = vcmp.lt.s32.totalorder %v2150, 2
    %vm2171 = vcmp.lt.s32.totalorder %v2150, 3
    %vm2172 = vcmp.lt.s32.totalorder %v2150, 4
    %v2173 = vsel %vm2169, %v2153, %v2156
    %v2174 = vsel %vm2172, %v2162, 2102212464
    %v2175 = vsel %vm2171, %v2159, %v2174
    %v2176 = vsel %vm2170, %v2173, %v2175
    %v2177 = vsel %vm2169, %v2156, %v2159
    %v2178 = vsel %vm2172, %v2165, 920167782
    %v2179 = vsel %vm2171, %v2162, %v2178
    %v2180 = vsel %vm2170, %v2177, %v2179
    %v2181 = vsel %vm2169, %v2159, %v2162
    %v2182 = vsel %vm2172, %v2168, 1326507024
    %v2183 = vsel %vm2171, %v2165, %v2182
    %v2184 = vsel %vm2170, %v2181, %v2183
    %v2185 = vshll.u32 %v2145, 8
    %v2186 = vmul.u32.u64.compose %v2185, %v2184
    %v2187 = vextract.low.u32 %v2186
    %v2188 = vextract.high.u32 %v2186
    %v2189 = vmul.u32.u64.compose %v2185, %v2180
    %v2190 = vextract.low.u32 %v2189
    %v2191 = vextract.high.u32 %v2189
    %v2192 = vmul.u32 %v2185, %v2176
    %v2193 = vadd.s32 %v2188, %v2190
    %vm2194 = vc.u32 %v2188, %v2190
    %v2195 = vadd.s32 %v2191, 1
    %v2196 = vsel %vm2194, %v2195, %v2191
    %v2197 = vadd.s32 %v2192, %v2196
    %v2198 = vadd.s32 %v2197, 536870912
    %v2199 = vshrl.u32 %v2198, 30
    %v2200 = vshll.u32 %v2199, 30
    %v2201 = vsub.s32 %v2197, %v2200
    %vm2202 = vcmp.lt.s32.totalorder %v2201, 0
    %v2203 = vsub.s32 0, %v2201
    %v2204 = vsel %vm2202, %v2203, %v2201
    %v2205 = vclz %v2204
    %v2206 = vsub.s32 %v2205, 2
    %vm2207 = vcmp.gt.s32.totalorder 0, %v2206
    %v2208 = vsel %vm2207, 0, %v2206
    %v2209 = vsub.s32 32, %v2208
    %v2210 = vshll.u32 %v2201, %v2208
    %v2211 = vshrl.u32 %v2193, %v2209
    %v2212 = vor.u32 %v2210, %v2211
    %v2213 = vsub.s32 4294967266, %v2208
    %v2214 = vadd.s32 %v2213, 127
    %v2215 = vshll.u32 %v2214, 23
    %v2216 = vor.u32 4788187, %v2215
    %v2217 = vand.u32 2147483647, %v2216
    %v2219 = vcvt.s32.f32 %v2212
    %v2220 = vmul.f32 %v2219, %v2217
    %v2221 = vxor.u32 %v2220, 2147483648
    %v2222 = vsel %vm2139, %v2221, %v2220
    %v2223 = vsub.s32 4, %v2199
    %v2224 = vsel %vm2139, %v2223, %v2199
    %v2225 = vsel %vm2138, %v787, %v2222
    %v2226 = vsel %vm2138, 0, %v2224
    %v2227 = vcosq.f32.pop %v2225
    %v2228 = vsinq.f32.pop %v2225
    %vm2229 = vweird.f32 %v787
    %v2230 = vand.u32 %v2226, 3
    %vm2231 = vcmp.lt.s32.totalorder %v2230, 2
    %vm2232 = vcmp.eq.s32.totalorder %v2230, 0
    %v2233 = vxor.u32 %v2228, 2147483648
    %v2234 = vsel %vm2232, %v2227, %v2233
    %vm2235 = vcmp.eq.s32.totalorder %v2230, 2
    %v2236 = vxor.u32 %v2227, 2147483648
    %v2237 = vsel %vm2235, %v2236, %v2228
    %v2238 = vsel %vm2231, %v2234, %v2237
    %v2239 = vsel %vm2229, nan, %v2238
    %v2240 = vand.u32 2147483647, %v788
    %vm2241 = vcmp.le.f32.partialorder %v2240, 0.7853982
    %vm2242 = vcmp.lt.s32.totalorder %v788, 0
    %v2243 = vand.u32 %v788, 2139095040
    %v2244 = vshrl.u32 %v2243, 23
    %v2245 = vsub.s32 %v2244, 127
    %v2246 = vand.u32 2147483647, %v788
    %v2247 = vand.u32 %v2246, 8388607
    %v2248 = vor.u32 %v2247, 8388608
    %v2249 = vsub.s32 0, %v2248
    %v2250 = vadd.s32 %v2245, 1
    %vm2251 = vcmp.gt.s32.totalorder %v2250, 0
    %v2252 = vsel %vm2251, %v2250, 0
    %v2253 = vshrl.u32 %v2252, 5
    %v2254 = vand.u32 %v2252, 31
    %v2255 = vsub.s32 32, %v2254
    %v2256 = vshrl.u32 683565275, %v2255
    %v2257 = vshll.u32 683565275, %v2254
    %v2258 = vshrl.u32 2475754826, %v2255
    %v2259 = vor.u32 %v2257, %v2258
    %v2260 = vshll.u32 2475754826, %v2254
    %v2261 = vshrl.u32 2131351028, %v2255
    %v2262 = vor.u32 %v2260, %v2261
    %v2263 = vshll.u32 2131351028, %v2254
    %v2264 = vshrl.u32 2102212464, %v2255
    %v2265 = vor.u32 %v2263, %v2264
    %v2266 = vshll.u32 2102212464, %v2254
    %v2267 = vshrl.u32 920167782, %v2255
    %v2268 = vor.u32 %v2266, %v2267
    %v2269 = vshll.u32 920167782, %v2254
    %v2270 = vshrl.u32 1326507024, %v2255
    %v2271 = vor.u32 %v2269, %v2270
    %vm2272 = vcmp.lt.s32.totalorder %v2253, 1
    %vm2273 = vcmp.lt.s32.totalorder %v2253, 2
    %vm2274 = vcmp.lt.s32.totalorder %v2253, 3
    %vm2275 = vcmp.lt.s32.totalorder %v2253, 4
    %v2276 = vsel %vm2272, %v2256, %v2259
    %v2277 = vsel %vm2275, %v2265, 2102212464
    %v2278 = vsel %vm2274, %v2262, %v2277
    %v2279 = vsel %vm2273, %v2276, %v2278
    %v2280 = vsel %vm2272, %v2259, %v2262
    %v2281 = vsel %vm2275, %v2268, 920167782
    %v2282 = vsel %vm2274, %v2265, %v2281
    %v2283 = vsel %vm2273, %v2280, %v2282
    %v2284 = vsel %vm2272, %v2262, %v2265
    %v2285 = vsel %vm2275, %v2271, 1326507024
    %v2286 = vsel %vm2274, %v2268, %v2285
    %v2287 = vsel %vm2273, %v2284, %v2286
    %v2288 = vshll.u32 %v2248, 8
    %v2289 = vmul.u32.u64.compose %v2288, %v2287
    %v2290 = vextract.low.u32 %v2289
    %v2291 = vextract.high.u32 %v2289
    %v2292 = vmul.u32.u64.compose %v2288, %v2283
    %v2293 = vextract.low.u32 %v2292
    %v2294 = vextract.high.u32 %v2292
    %v2295 = vmul.u32 %v2288, %v2279
    %v2296 = vadd.s32 %v2291, %v2293
    %vm2297 = vc.u32 %v2291, %v2293
    %v2298 = vadd.s32 %v2294, 1
    %v2299 = vsel %vm2297, %v2298, %v2294
    %v2300 = vadd.s32 %v2295, %v2299
    %v2301 = vadd.s32 %v2300, 536870912
    %v2302 = vshrl.u32 %v2301, 30
    %v2303 = vshll.u32 %v2302, 30
    %v2304 = vsub.s32 %v2300, %v2303
    %vm2305 = vcmp.lt.s32.totalorder %v2304, 0
    %v2306 = vsub.s32 0, %v2304
    %v2307 = vsel %vm2305, %v2306, %v2304
    %v2308 = vclz %v2307
    %v2309 = vsub.s32 %v2308, 2
    %vm2310 = vcmp.gt.s32.totalorder 0, %v2309
    %v2311 = vsel %vm2310, 0, %v2309
    %v2312 = vsub.s32 32, %v2311
    %v2313 = vshll.u32 %v2304, %v2311
    %v2314 = vshrl.u32 %v2296, %v2312
    %v2315 = vor.u32 %v2313, %v2314
    %v2316 = vsub.s32 4294967266, %v2311
    %v2317 = vadd.s32 %v2316, 127
    %v2318 = vshll.u32 %v2317, 23
    %v2319 = vor.u32 4788187, %v2318
    %v2320 = vand.u32 2147483647, %v2319
    %v2322 = vcvt.s32.f32 %v2315
    %v2323 = vmul.f32 %v2322, %v2320
    %v2324 = vxor.u32 %v2323, 2147483648
    %v2325 = vsel %vm2242, %v2324, %v2323
    %v2326 = vsub.s32 4, %v2302
    %v2327 = vsel %vm2242, %v2326, %v2302
    %v2328 = vsel %vm2241, %v788, %v2325
    %v2329 = vsel %vm2241, 0, %v2327
    %v2330 = vcosq.f32.pop %v2328
    %v2331 = vsinq.f32.pop %v2328
    %vm2332 = vweird.f32 %v788
    %v2333 = vand.u32 %v2329, 3
    %vm2334 = vcmp.lt.s32.totalorder %v2333, 2
    %vm2335 = vcmp.eq.s32.totalorder %v2333, 0
    %v2336 = vxor.u32 %v2331, 2147483648
    %v2337 = vsel %vm2335, %v2330, %v2336
    %vm2338 = vcmp.eq.s32.totalorder %v2333, 2
    %v2339 = vxor.u32 %v2330, 2147483648
    %v2340 = vsel %vm2338, %v2339, %v2331
    %v2341 = vsel %vm2334, %v2337, %v2340
    %v2342 = vsel %vm2332, nan, %v2341
    %v2343 = vand.u32 2147483647, %v789
    %vm2344 = vcmp.le.f32.partialorder %v2343, 0.7853982
    %vm2345 = vcmp.lt.s32.totalorder %v789, 0
    %v2346 = vand.u32 %v789, 2139095040
    %v2347 = vshrl.u32 %v2346, 23
    %v2348 = vsub.s32 %v2347, 127
    %v2349 = vand.u32 2147483647, %v789
    %v2350 = vand.u32 %v2349, 8388607
    %v2351 = vor.u32 %v2350, 8388608
    %v2352 = vsub.s32 0, %v2351
    %v2353 = vadd.s32 %v2348, 1
    %vm2354 = vcmp.gt.s32.totalorder %v2353, 0
    %v2355 = vsel %vm2354, %v2353, 0
    %v2356 = vshrl.u32 %v2355, 5
    %v2357 = vand.u32 %v2355, 31
    %v2358 = vsub.s32 32, %v2357
    %v2359 = vshrl.u32 683565275, %v2358
    %v2360 = vshll.u32 683565275, %v2357
    %v2361 = vshrl.u32 2475754826, %v2358
    %v2362 = vor.u32 %v2360, %v2361
    %v2363 = vshll.u32 2475754826, %v2357
    %v2364 = vshrl.u32 2131351028, %v2358
    %v2365 = vor.u32 %v2363, %v2364
    %v2366 = vshll.u32 2131351028, %v2357
    %v2367 = vshrl.u32 2102212464, %v2358
    %v2368 = vor.u32 %v2366, %v2367
    %v2369 = vshll.u32 2102212464, %v2357
    %v2370 = vshrl.u32 920167782, %v2358
    %v2371 = vor.u32 %v2369, %v2370
    %v2372 = vshll.u32 920167782, %v2357
    %v2373 = vshrl.u32 1326507024, %v2358
    %v2374 = vor.u32 %v2372, %v2373
    %vm2375 = vcmp.lt.s32.totalorder %v2356, 1
    %vm2376 = vcmp.lt.s32.totalorder %v2356, 2
    %vm2377 = vcmp.lt.s32.totalorder %v2356, 3
    %vm2378 = vcmp.lt.s32.totalorder %v2356, 4
    %v2379 = vsel %vm2375, %v2359, %v2362
    %v2380 = vsel %vm2378, %v2368, 2102212464
    %v2381 = vsel %vm2377, %v2365, %v2380
    %v2382 = vsel %vm2376, %v2379, %v2381
    %v2383 = vsel %vm2375, %v2362, %v2365
    %v2384 = vsel %vm2378, %v2371, 920167782
    %v2385 = vsel %vm2377, %v2368, %v2384
    %v2386 = vsel %vm2376, %v2383, %v2385
    %v2387 = vsel %vm2375, %v2365, %v2368
    %v2388 = vsel %vm2378, %v2374, 1326507024
    %v2389 = vsel %vm2377, %v2371, %v2388
    %v2390 = vsel %vm2376, %v2387, %v2389
    %v2391 = vshll.u32 %v2351, 8
    %v2392 = vmul.u32.u64.compose %v2391, %v2390
    %v2393 = vextract.low.u32 %v2392
    %v2394 = vextract.high.u32 %v2392
    %v2395 = vmul.u32.u64.compose %v2391, %v2386
    %v2396 = vextract.low.u32 %v2395
    %v2397 = vextract.high.u32 %v2395
    %v2398 = vmul.u32 %v2391, %v2382
    %v2399 = vadd.s32 %v2394, %v2396
    %vm2400 = vc.u32 %v2394, %v2396
    %v2401 = vadd.s32 %v2397, 1
    %v2402 = vsel %vm2400, %v2401, %v2397
    %v2403 = vadd.s32 %v2398, %v2402
    %v2404 = vadd.s32 %v2403, 536870912
    %v2405 = vshrl.u32 %v2404, 30
    %v2406 = vshll.u32 %v2405, 30
    %v2407 = vsub.s32 %v2403, %v2406
    %vm2408 = vcmp.lt.s32.totalorder %v2407, 0
    %v2409 = vsub.s32 0, %v2407
    %v2410 = vsel %vm2408, %v2409, %v2407
    %v2411 = vclz %v2410
    %v2412 = vsub.s32 %v2411, 2
    %vm2413 = vcmp.gt.s32.totalorder 0, %v2412
    %v2414 = vsel %vm2413, 0, %v2412
    %v2415 = vsub.s32 32, %v2414
    %v2416 = vshll.u32 %v2407, %v2414
    %v2417 = vshrl.u32 %v2399, %v2415
    %v2418 = vor.u32 %v2416, %v2417
    %v2419 = vsub.s32 4294967266, %v2414
    %v2420 = vadd.s32 %v2419, 127
    %v2421 = vshll.u32 %v2420, 23
    %v2422 = vor.u32 4788187, %v2421
    %v2423 = vand.u32 2147483647, %v2422
    %v2425 = vcvt.s32.f32 %v2418
    %v2426 = vmul.f32 %v2425, %v2423
    %v2427 = vxor.u32 %v2426, 2147483648
    %v2428 = vsel %vm2345, %v2427, %v2426
    %v2429 = vsub.s32 4, %v2405
    %v2430 = vsel %vm2345, %v2429, %v2405
    %v2431 = vsel %vm2344, %v789, %v2428
    %v2432 = vsel %vm2344, 0, %v2430
    %v2433 = vcosq.f32.pop %v2431
    %v2434 = vsinq.f32.pop %v2431
    %vm2435 = vweird.f32 %v789
    %v2436 = vand.u32 %v2432, 3
    %vm2437 = vcmp.lt.s32.totalorder %v2436, 2
    %vm2438 = vcmp.eq.s32.totalorder %v2436, 0
    %v2439 = vxor.u32 %v2434, 2147483648
    %v2440 = vsel %vm2438, %v2433, %v2439
    %vm2441 = vcmp.eq.s32.totalorder %v2436, 2
    %v2442 = vxor.u32 %v2433, 2147483648
    %v2443 = vsel %vm2441, %v2442, %v2434
    %v2444 = vsel %vm2437, %v2440, %v2443
    %v2445 = vsel %vm2435, nan, %v2444
    %v2446 = vpack.c.bf16 %v38, %v34
    %v2447 = vpack.c.bf16 %v39, %v35
    %v2448 = vpack.c.bf16 %v46, %v42
    %v2449 = vpack.c.bf16 %v47, %v43
    %v2450 = vpack.c.bf16 %v997, %v893
    %v2451 = vpack.c.bf16 %v1205, %v1101
    %v2452 = vpack.c.bf16 %v1411, %v1308
    %v2453 = vpack.c.bf16 %v1617, %v1514
    %v2454 = vpack.c.bf16 %v1825, %v1721
    %v2455 = vpack.c.bf16 %v2033, %v1929
    %v2456 = vpack.c.bf16 %v2239, %v2136
    %v2457 = vpack.c.bf16 %v2445, %v2342
    %2462 = vrot.lane.b32.xlu0 %v2446, 57
    %v2463 = vpop.permute.xlu0 %2462
    %2464 = vrot.lane.b32.xlu0 %v2447, 57
    %v2465 = vpop.permute.xlu0 %2464
    %2466 = vrot.lane.b32.xlu0 %v2448, 57
    %v2467 = vpop.permute.xlu0 %2466
    %2468 = vrot.lane.b32.xlu0 %v2449, 57
    %v2469 = vpop.permute.xlu0 %2468
    %vm2470 = vcmask 465920
    %v2471 = vsel %vm2470, %v2463, %v2465
    %v2472 = vsel %vm2470, %v2467, %v2469
    %vm2475 = vcmask 7168
    %v2477 = vsel %vm2475, %v2465, 0
    %v2480 = vsel %vm2475, %v2469, 0
    %2482 = vmatprep.subr.bf16.mxu0 0
    %2483 = vmatpush1.bf16.msra.mxu0 %v2450
    %2484 = vmatprep.subr.bf16.mxu0 0
    %2485 = vmatpush1.bf16.msra.mxu0 %v2451
    %2486 = vmatprep.subr.bf16.mxu0 0
    %2487 = vmatpush1.bf16.msra.mxu0 %v2452
    %2488 = vmatprep.subr.bf16.mxu0 0
    %2489 = vmatpush1.bf16.msra.mxu0 %v2453
    %2490 = vmatprep.subr.bf16.mxu0 0
    %2491 = vmatpush1.bf16.msra.mxu0 %v2454
    %2492 = vmatprep.subr.bf16.mxu0 0
    %2493 = vmatpush1.bf16.msra.mxu0 %v2455
    %2494 = vmatprep.subr.bf16.mxu0 0
    %2495 = vmatpush1.bf16.msra.mxu0 %v2456
    %2496 = vmatprep.subr.bf16.mxu0 0
    %2497 = vmatpush1.bf16.msra.mxu0 %v2457
    %2498 = vmatprep.subr.bf16.mxu0 0
    %2499 = vmatpush1.bf16.msra.mxu0 %v267
    %2500 = vmatprep.subr.bf16.mxu0 0
    %2501 = vmatpush1.bf16.msra.mxu0 0
    %2502 = vmatprep.subr.bf16.mxu0 0
    %2503 = vmatpush1.bf16.msra.mxu0 0
    %2504 = vmatprep.subr.bf16.mxu0 0
    %2505 = vmatpush1.bf16.msra.mxu0 0
    %2506 = vmatprep.subr.bf16.mxu0 0
    %2507 = vmatpush1.bf16.msra.mxu0 0
    %2508 = vmatprep.subr.bf16.mxu0 0
    %2509 = vmatpush1.bf16.msra.mxu0 0
    %2510 = vmatprep.subr.bf16.mxu0 0
    %2511 = vmatpush1.bf16.msra.mxu0 0
    %2512 = vmatprep.subr.bf16.mxu0 0
    %2513 = vmatpush1.bf16.msra.mxu0 0
    %2514 = vmatprep.mubr.bf16.mxu0 %v2477
    %2515 = vmatmul.mubr.bf16.gmra.mrb[0].mxu0 %v2471
    %v2516 = vpop.f32.mrb[0].mxu0
    %v2517 = vadd.f32 0.0, %v2516
    %v2518 = vpop.f32.mrb[0].mxu0
    %v2519 = vpop.f32.mrb[0].mxu0
    %v2520 = vadd.f32 0.0, %v2519
    %v2521 = vpop.f32.mrb[0].mxu0
    %2522 = vmatprep.mubr.bf16.mxu0 %v2480
    %2523 = vmatmul.mubr.bf16.gmra.mrb[0].mxu0 %v2472
    %v2524 = vpop.f32.mrb[0].mxu0
    %v2525 = vadd.f32 0.0, %v2524
    %v2526 = vpop.f32.mrb[0].mxu0
    %v2527 = vpop.f32.mrb[0].mxu0
    %v2528 = vadd.f32 0.0, %v2527
    %v2529 = vpop.f32.mrb[0].mxu0
    %2530 = vdwg.mxu0
    %v2531 = vlaneseq
    %v2532 = vshrl.u32 %v2531, 7
    %v2533 = vsub.s32 0, %v2532
    %v2534 = vrot.slane %v681, %v2533
    %v2535 = vmul.f32 %v2534, %v761
    %v2536 = vmul.f32 %v2534, %v766
    %v2537 = vmul.f32 %v2534, %v771
    %v2538 = vmul.f32 %v2534, %v776
    %v2539 = vlaneseq
    %v2540 = vshrl.u32 %v2539, 7
    %v2541 = vsub.s32 1, %v2540
    %v2542 = vrot.slane %v704, %v2541
    %v2543 = vmul.f32 %v2542, %v761
    %v2544 = vmul.f32 %v2542, %v766
    %v2545 = vmul.f32 %v2542, %v771
    %v2546 = vmul.f32 %v2542, %v776
    %v2547 = vand.u32 2147483647, %v2535
    %vm2548 = vcmp.le.f32.partialorder %v2547, 0.7853982
    %vm2549 = vcmp.lt.s32.totalorder %v2535, 0
    %v2550 = vand.u32 %v2535, 2139095040
    %v2551 = vshrl.u32 %v2550, 23
    %v2552 = vsub.s32 %v2551, 127
    %v2553 = vand.u32 2147483647, %v2535
    %v2554 = vand.u32 %v2553, 8388607
    %v2555 = vor.u32 %v2554, 8388608
    %v2556 = vsub.s32 0, %v2555
    %v2557 = vadd.s32 %v2552, 1
    %vm2558 = vcmp.gt.s32.totalorder %v2557, 0
    %v2559 = vsel %vm2558, %v2557, 0
    %v2560 = vshrl.u32 %v2559, 5
    %v2561 = vand.u32 %v2559, 31
    %v2562 = vsub.s32 32, %v2561
    %v2563 = vshrl.u32 683565275, %v2562
    %v2564 = vshll.u32 683565275, %v2561
    %v2565 = vshrl.u32 2475754826, %v2562
    %v2566 = vor.u32 %v2564, %v2565
    %v2567 = vshll.u32 2475754826, %v2561
    %v2568 = vshrl.u32 2131351028, %v2562
    %v2569 = vor.u32 %v2567, %v2568
    %v2570 = vshll.u32 2131351028, %v2561
    %v2571 = vshrl.u32 2102212464, %v2562
    %v2572 = vor.u32 %v2570, %v2571
    %v2573 = vshll.u32 2102212464, %v2561
    %v2574 = vshrl.u32 920167782, %v2562
    %v2575 = vor.u32 %v2573, %v2574
    %v2576 = vshll.u32 920167782, %v2561
    %v2577 = vshrl.u32 1326507024, %v2562
    %v2578 = vor.u32 %v2576, %v2577
    %vm2579 = vcmp.lt.s32.totalorder %v2560, 1
    %vm2580 = vcmp.lt.s32.totalorder %v2560, 2
    %vm2581 = vcmp.lt.s32.totalorder %v2560, 3
    %vm2582 = vcmp.lt.s32.totalorder %v2560, 4
    %v2583 = vsel %vm2579, %v2563, %v2566
    %v2584 = vsel %vm2582, %v2572, 2102212464
    %v2585 = vsel %vm2581, %v2569, %v2584
    %v2586 = vsel %vm2580, %v2583, %v2585
    %v2587 = vsel %vm2579, %v2566, %v2569
    %v2588 = vsel %vm2582, %v2575, 920167782
    %v2589 = vsel %vm2581, %v2572, %v2588
    %v2590 = vsel %vm2580, %v2587, %v2589
    %v2591 = vsel %vm2579, %v2569, %v2572
    %v2592 = vsel %vm2582, %v2578, 1326507024
    %v2593 = vsel %vm2581, %v2575, %v2592
    %v2594 = vsel %vm2580, %v2591, %v2593
    %v2595 = vshll.u32 %v2555, 8
    %v2596 = vmul.u32.u64.compose %v2595, %v2594
    %v2597 = vextract.low.u32 %v2596
    %v2598 = vextract.high.u32 %v2596
    %v2599 = vmul.u32.u64.compose %v2595, %v2590
    %v2600 = vextract.low.u32 %v2599
    %v2601 = vextract.high.u32 %v2599
    %v2602 = vmul.u32 %v2595, %v2586
    %v2603 = vadd.s32 %v2598, %v2600
    %vm2604 = vc.u32 %v2598, %v2600
    %v2605 = vadd.s32 %v2601, 1
    %v2606 = vsel %vm2604, %v2605, %v2601
    %v2607 = vadd.s32 %v2602, %v2606
    %v2608 = vadd.s32 %v2607, 536870912
    %v2609 = vshrl.u32 %v2608, 30
    %v2610 = vshll.u32 %v2609, 30
    %v2611 = vsub.s32 %v2607, %v2610
    %vm2612 = vcmp.lt.s32.totalorder %v2611, 0
    %v2613 = vsub.s32 0, %v2611
    %v2614 = vsel %vm2612, %v2613, %v2611
    %v2615 = vclz %v2614
    %v2616 = vsub.s32 %v2615, 2
    %vm2617 = vcmp.gt.s32.totalorder 0, %v2616
    %v2618 = vsel %vm2617, 0, %v2616
    %v2619 = vsub.s32 32, %v2618
    %v2620 = vshll.u32 %v2611, %v2618
    %v2621 = vshrl.u32 %v2603, %v2619
    %v2622 = vor.u32 %v2620, %v2621
    %v2623 = vsub.s32 4294967266, %v2618
    %v2624 = vadd.s32 %v2623, 127
    %v2625 = vshll.u32 %v2624, 23
    %v2626 = vor.u32 4788187, %v2625
    %v2627 = vand.u32 2147483647, %v2626
    %v2629 = vcvt.s32.f32 %v2622
    %v2630 = vmul.f32 %v2629, %v2627
    %v2631 = vxor.u32 %v2630, 2147483648
    %v2632 = vsel %vm2549, %v2631, %v2630
    %v2633 = vsub.s32 4, %v2609
    %v2634 = vsel %vm2549, %v2633, %v2609
    %v2635 = vsel %vm2548, %v2535, %v2632
    %v2636 = vsel %vm2548, 0, %v2634
    %v2637 = vcosq.f32.pop %v2635
    %v2638 = vsinq.f32.pop %v2635
    %vm2639 = vweird.f32 %v2535
    %v2640 = vadd.s32 %v2636, 3
    %v2641 = vand.u32 %v2640, 3
    %vm2642 = vcmp.lt.s32.totalorder %v2641, 2
    %vm2643 = vcmp.eq.s32.totalorder %v2641, 0
    %v2644 = vxor.u32 %v2638, 2147483648
    %v2645 = vsel %vm2643, %v2637, %v2644
    %vm2646 = vcmp.eq.s32.totalorder %v2641, 2
    %v2647 = vxor.u32 %v2637, 2147483648
    %v2648 = vsel %vm2646, %v2647, %v2638
    %v2649 = vsel %vm2642, %v2645, %v2648
    %v2650 = vsel %vm2639, nan, %v2649
    %v2651 = vand.u32 2147483647, %v2536
    %vm2652 = vcmp.le.f32.partialorder %v2651, 0.7853982
    %vm2653 = vcmp.lt.s32.totalorder %v2536, 0
    %v2654 = vand.u32 %v2536, 2139095040
    %v2655 = vshrl.u32 %v2654, 23
    %v2656 = vsub.s32 %v2655, 127
    %v2657 = vand.u32 2147483647, %v2536
    %v2658 = vand.u32 %v2657, 8388607
    %v2659 = vor.u32 %v2658, 8388608
    %v2660 = vsub.s32 0, %v2659
    %v2661 = vadd.s32 %v2656, 1
    %vm2662 = vcmp.gt.s32.totalorder %v2661, 0
    %v2663 = vsel %vm2662, %v2661, 0
    %v2664 = vshrl.u32 %v2663, 5
    %v2665 = vand.u32 %v2663, 31
    %v2666 = vsub.s32 32, %v2665
    %v2667 = vshrl.u32 683565275, %v2666
    %v2668 = vshll.u32 683565275, %v2665
    %v2669 = vshrl.u32 2475754826, %v2666
    %v2670 = vor.u32 %v2668, %v2669
    %v2671 = vshll.u32 2475754826, %v2665
    %v2672 = vshrl.u32 2131351028, %v2666
    %v2673 = vor.u32 %v2671, %v2672
    %v2674 = vshll.u32 2131351028, %v2665
    %v2675 = vshrl.u32 2102212464, %v2666
    %v2676 = vor.u32 %v2674, %v2675
    %v2677 = vshll.u32 2102212464, %v2665
    %v2678 = vshrl.u32 920167782, %v2666
    %v2679 = vor.u32 %v2677, %v2678
    %v2680 = vshll.u32 920167782, %v2665
    %v2681 = vshrl.u32 1326507024, %v2666
    %v2682 = vor.u32 %v2680, %v2681
    %vm2683 = vcmp.lt.s32.totalorder %v2664, 1
    %vm2684 = vcmp.lt.s32.totalorder %v2664, 2
    %vm2685 = vcmp.lt.s32.totalorder %v2664, 3
    %vm2686 = vcmp.lt.s32.totalorder %v2664, 4
    %v2687 = vsel %vm2683, %v2667, %v2670
    %v2688 = vsel %vm2686, %v2676, 2102212464
    %v2689 = vsel %vm2685, %v2673, %v2688
    %v2690 = vsel %vm2684, %v2687, %v2689
    %v2691 = vsel %vm2683, %v2670, %v2673
    %v2692 = vsel %vm2686, %v2679, 920167782
    %v2693 = vsel %vm2685, %v2676, %v2692
    %v2694 = vsel %vm2684, %v2691, %v2693
    %v2695 = vsel %vm2683, %v2673, %v2676
    %v2696 = vsel %vm2686, %v2682, 1326507024
    %v2697 = vsel %vm2685, %v2679, %v2696
    %v2698 = vsel %vm2684, %v2695, %v2697
    %v2699 = vshll.u32 %v2659, 8
    %v2700 = vmul.u32.u64.compose %v2699, %v2698
    %v2701 = vextract.low.u32 %v2700
    %v2702 = vextract.high.u32 %v2700
    %v2703 = vmul.u32.u64.compose %v2699, %v2694
    %v2704 = vextract.low.u32 %v2703
    %v2705 = vextract.high.u32 %v2703
    %v2706 = vmul.u32 %v2699, %v2690
    %v2707 = vadd.s32 %v2702, %v2704
    %vm2708 = vc.u32 %v2702, %v2704
    %v2709 = vadd.s32 %v2705, 1
    %v2710 = vsel %vm2708, %v2709, %v2705
    %v2711 = vadd.s32 %v2706, %v2710
    %v2712 = vadd.s32 %v2711, 536870912
    %v2713 = vshrl.u32 %v2712, 30
    %v2714 = vshll.u32 %v2713, 30
    %v2715 = vsub.s32 %v2711, %v2714
    %vm2716 = vcmp.lt.s32.totalorder %v2715, 0
    %v2717 = vsub.s32 0, %v2715
    %v2718 = vsel %vm2716, %v2717, %v2715
    %v2719 = vclz %v2718
    %v2720 = vsub.s32 %v2719, 2
    %vm2721 = vcmp.gt.s32.totalorder 0, %v2720
    %v2722 = vsel %vm2721, 0, %v2720
    %v2723 = vsub.s32 32, %v2722
    %v2724 = vshll.u32 %v2715, %v2722
    %v2725 = vshrl.u32 %v2707, %v2723
    %v2726 = vor.u32 %v2724, %v2725
    %v2727 = vsub.s32 4294967266, %v2722
    %v2728 = vadd.s32 %v2727, 127
    %v2729 = vshll.u32 %v2728, 23
    %v2730 = vor.u32 4788187, %v2729
    %v2731 = vand.u32 2147483647, %v2730
    %v2733 = vcvt.s32.f32 %v2726
    %v2734 = vmul.f32 %v2733, %v2731
    %v2735 = vxor.u32 %v2734, 2147483648
    %v2736 = vsel %vm2653, %v2735, %v2734
    %v2737 = vsub.s32 4, %v2713
    %v2738 = vsel %vm2653, %v2737, %v2713
    %v2739 = vsel %vm2652, %v2536, %v2736
    %v2740 = vsel %vm2652, 0, %v2738
    %v2741 = vcosq.f32.pop %v2739
    %v2742 = vsinq.f32.pop %v2739
    %vm2743 = vweird.f32 %v2536
    %v2744 = vadd.s32 %v2740, 3
    %v2745 = vand.u32 %v2744, 3
    %vm2746 = vcmp.lt.s32.totalorder %v2745, 2
    %vm2747 = vcmp.eq.s32.totalorder %v2745, 0
    %v2748 = vxor.u32 %v2742, 2147483648
    %v2749 = vsel %vm2747, %v2741, %v2748
    %vm2750 = vcmp.eq.s32.totalorder %v2745, 2
    %v2751 = vxor.u32 %v2741, 2147483648
    %v2752 = vsel %vm2750, %v2751, %v2742
    %v2753 = vsel %vm2746, %v2749, %v2752
    %v2754 = vsel %vm2743, nan, %v2753
    %v2755 = vand.u32 2147483647, %v2537
    %vm2756 = vcmp.le.f32.partialorder %v2755, 0.7853982
    %vm2757 = vcmp.lt.s32.totalorder %v2537, 0
    %v2758 = vand.u32 %v2537, 2139095040
    %v2759 = vshrl.u32 %v2758, 23
    %v2760 = vsub.s32 %v2759, 127
    %v2761 = vand.u32 2147483647, %v2537
    %v2762 = vand.u32 %v2761, 8388607
    %v2763 = vor.u32 %v2762, 8388608
    %v2764 = vsub.s32 0, %v2763
    %v2765 = vadd.s32 %v2760, 1
    %vm2766 = vcmp.gt.s32.totalorder %v2765, 0
    %v2767 = vsel %vm2766, %v2765, 0
    %v2768 = vshrl.u32 %v2767, 5
    %v2769 = vand.u32 %v2767, 31
    %v2770 = vsub.s32 32, %v2769
    %v2771 = vshrl.u32 683565275, %v2770
    %v2772 = vshll.u32 683565275, %v2769
    %v2773 = vshrl.u32 2475754826, %v2770
    %v2774 = vor.u32 %v2772, %v2773
    %v2775 = vshll.u32 2475754826, %v2769
    %v2776 = vshrl.u32 2131351028, %v2770
    %v2777 = vor.u32 %v2775, %v2776
    %v2778 = vshll.u32 2131351028, %v2769
    %v2779 = vshrl.u32 2102212464, %v2770
    %v2780 = vor.u32 %v2778, %v2779
    %v2781 = vshll.u32 2102212464, %v2769
    %v2782 = vshrl.u32 920167782, %v2770
    %v2783 = vor.u32 %v2781, %v2782
    %v2784 = vshll.u32 920167782, %v2769
    %v2785 = vshrl.u32 1326507024, %v2770
    %v2786 = vor.u32 %v2784, %v2785
    %vm2787 = vcmp.lt.s32.totalorder %v2768, 1
    %vm2788 = vcmp.lt.s32.totalorder %v2768, 2
    %vm2789 = vcmp.lt.s32.totalorder %v2768, 3
    %vm2790 = vcmp.lt.s32.totalorder %v2768, 4
    %v2791 = vsel %vm2787, %v2771, %v2774
    %v2792 = vsel %vm2790, %v2780, 2102212464
    %v2793 = vsel %vm2789, %v2777, %v2792
    %v2794 = vsel %vm2788, %v2791, %v2793
    %v2795 = vsel %vm2787, %v2774, %v2777
    %v2796 = vsel %vm2790, %v2783, 920167782
    %v2797 = vsel %vm2789, %v2780, %v2796
    %v2798 = vsel %vm2788, %v2795, %v2797
    %v2799 = vsel %vm2787, %v2777, %v2780
    %v2800 = vsel %vm2790, %v2786, 1326507024
    %v2801 = vsel %vm2789, %v2783, %v2800
    %v2802 = vsel %vm2788, %v2799, %v2801
    %v2803 = vshll.u32 %v2763, 8
    %v2804 = vmul.u32.u64.compose %v2803, %v2802
    %v2805 = vextract.low.u32 %v2804
    %v2806 = vextract.high.u32 %v2804
    %v2807 = vmul.u32.u64.compose %v2803, %v2798
    %v2808 = vextract.low.u32 %v2807
    %v2809 = vextract.high.u32 %v2807
    %v2810 = vmul.u32 %v2803, %v2794
    %v2811 = vadd.s32 %v2806, %v2808
    %vm2812 = vc.u32 %v2806, %v2808
    %v2813 = vadd.s32 %v2809, 1
    %v2814 = vsel %vm2812, %v2813, %v2809
    %v2815 = vadd.s32 %v2810, %v2814
    %v2816 = vadd.s32 %v2815, 536870912
    %v2817 = vshrl.u32 %v2816, 30
    %v2818 = vshll.u32 %v2817, 30
    %v2819 = vsub.s32 %v2815, %v2818
    %vm2820 = vcmp.lt.s32.totalorder %v2819, 0
    %v2821 = vsub.s32 0, %v2819
    %v2822 = vsel %vm2820, %v2821, %v2819
    %v2823 = vclz %v2822
    %v2824 = vsub.s32 %v2823, 2
    %vm2825 = vcmp.gt.s32.totalorder 0, %v2824
    %v2826 = vsel %vm2825, 0, %v2824
    %v2827 = vsub.s32 32, %v2826
    %v2828 = vshll.u32 %v2819, %v2826
    %v2829 = vshrl.u32 %v2811, %v2827
    %v2830 = vor.u32 %v2828, %v2829
    %v2831 = vsub.s32 4294967266, %v2826
    %v2832 = vadd.s32 %v2831, 127
    %v2833 = vshll.u32 %v2832, 23
    %v2834 = vor.u32 4788187, %v2833
    %v2835 = vand.u32 2147483647, %v2834
    %v2837 = vcvt.s32.f32 %v2830
    %v2838 = vmul.f32 %v2837, %v2835
    %v2839 = vxor.u32 %v2838, 2147483648
    %v2840 = vsel %vm2757, %v2839, %v2838
    %v2841 = vsub.s32 4, %v2817
    %v2842 = vsel %vm2757, %v2841, %v2817
    %v2843 = vsel %vm2756, %v2537, %v2840
    %v2844 = vsel %vm2756, 0, %v2842
    %v2845 = vcosq.f32.pop %v2843
    %v2846 = vsinq.f32.pop %v2843
    %vm2847 = vweird.f32 %v2537
    %v2848 = vadd.s32 %v2844, 3
    %v2849 = vand.u32 %v2848, 3
    %vm2850 = vcmp.lt.s32.totalorder %v2849, 2
    %vm2851 = vcmp.eq.s32.totalorder %v2849, 0
    %v2852 = vxor.u32 %v2846, 2147483648
    %v2853 = vsel %vm2851, %v2845, %v2852
    %vm2854 = vcmp.eq.s32.totalorder %v2849, 2
    %v2855 = vxor.u32 %v2845, 2147483648
    %v2856 = vsel %vm2854, %v2855, %v2846
    %v2857 = vsel %vm2850, %v2853, %v2856
    %v2858 = vsel %vm2847, nan, %v2857
    %v2859 = vand.u32 2147483647, %v2538
    %vm2860 = vcmp.le.f32.partialorder %v2859, 0.7853982
    %vm2861 = vcmp.lt.s32.totalorder %v2538, 0
    %v2862 = vand.u32 %v2538, 2139095040
    %v2863 = vshrl.u32 %v2862, 23
    %v2864 = vsub.s32 %v2863, 127
    %v2865 = vand.u32 2147483647, %v2538
    %v2866 = vand.u32 %v2865, 8388607
    %v2867 = vor.u32 %v2866, 8388608
    %v2868 = vsub.s32 0, %v2867
    %v2869 = vadd.s32 %v2864, 1
    %vm2870 = vcmp.gt.s32.totalorder %v2869, 0
    %v2871 = vsel %vm2870, %v2869, 0
    %v2872 = vshrl.u32 %v2871, 5
    %v2873 = vand.u32 %v2871, 31
    %v2874 = vsub.s32 32, %v2873
    %v2875 = vshrl.u32 683565275, %v2874
    %v2876 = vshll.u32 683565275, %v2873
    %v2877 = vshrl.u32 2475754826, %v2874
    %v2878 = vor.u32 %v2876, %v2877
    %v2879 = vshll.u32 2475754826, %v2873
    %v2880 = vshrl.u32 2131351028, %v2874
    %v2881 = vor.u32 %v2879, %v2880
    %v2882 = vshll.u32 2131351028, %v2873
    %v2883 = vshrl.u32 2102212464, %v2874
    %v2884 = vor.u32 %v2882, %v2883
    %v2885 = vshll.u32 2102212464, %v2873
    %v2886 = vshrl.u32 920167782, %v2874
    %v2887 = vor.u32 %v2885, %v2886
    %v2888 = vshll.u32 920167782, %v2873
    %v2889 = vshrl.u32 1326507024, %v2874
    %v2890 = vor.u32 %v2888, %v2889
    %vm2891 = vcmp.lt.s32.totalorder %v2872, 1
    %vm2892 = vcmp.lt.s32.totalorder %v2872, 2
    %vm2893 = vcmp.lt.s32.totalorder %v2872, 3
    %vm2894 = vcmp.lt.s32.totalorder %v2872, 4
    %v2895 = vsel %vm2891, %v2875, %v2878
    %v2896 = vsel %vm2894, %v2884, 2102212464
    %v2897 = vsel %vm2893, %v2881, %v2896
    %v2898 = vsel %vm2892, %v2895, %v2897
    %v2899 = vsel %vm2891, %v2878, %v2881
    %v2900 = vsel %vm2894, %v2887, 920167782
    %v2901 = vsel %vm2893, %v2884, %v2900
    %v2902 = vsel %vm2892, %v2899, %v2901
    %v2903 = vsel %vm2891, %v2881, %v2884
    %v2904 = vsel %vm2894, %v2890, 1326507024
    %v2905 = vsel %vm2893, %v2887, %v2904
    %v2906 = vsel %vm2892, %v2903, %v2905
    %v2907 = vshll.u32 %v2867, 8
    %v2908 = vmul.u32.u64.compose %v2907, %v2906
    %v2909 = vextract.low.u32 %v2908
    %v2910 = vextract.high.u32 %v2908
    %v2911 = vmul.u32.u64.compose %v2907, %v2902
    %v2912 = vextract.low.u32 %v2911
    %v2913 = vextract.high.u32 %v2911
    %v2914 = vmul.u32 %v2907, %v2898
    %v2915 = vadd.s32 %v2910, %v2912
    %vm2916 = vc.u32 %v2910, %v2912
    %v2917 = vadd.s32 %v2913, 1
    %v2918 = vsel %vm2916, %v2917, %v2913
    %v2919 = vadd.s32 %v2914, %v2918
    %v2920 = vadd.s32 %v2919, 536870912
    %v2921 = vshrl.u32 %v2920, 30
    %v2922 = vshll.u32 %v2921, 30
    %v2923 = vsub.s32 %v2919, %v2922
    %vm2924 = vcmp.lt.s32.totalorder %v2923, 0
    %v2925 = vsub.s32 0, %v2923
    %v2926 = vsel %vm2924, %v2925, %v2923
    %v2927 = vclz %v2926
    %v2928 = vsub.s32 %v2927, 2
    %vm2929 = vcmp.gt.s32.totalorder 0, %v2928
    %v2930 = vsel %vm2929, 0, %v2928
    %v2931 = vsub.s32 32, %v2930
    %v2932 = vshll.u32 %v2923, %v2930
    %v2933 = vshrl.u32 %v2915, %v2931
    %v2934 = vor.u32 %v2932, %v2933
    %v2935 = vsub.s32 4294967266, %v2930
    %v2936 = vadd.s32 %v2935, 127
    %v2937 = vshll.u32 %v2936, 23
    %v2938 = vor.u32 4788187, %v2937
    %v2939 = vand.u32 2147483647, %v2938
    %v2941 = vcvt.s32.f32 %v2934
    %v2942 = vmul.f32 %v2941, %v2939
    %v2943 = vxor.u32 %v2942, 2147483648
    %v2944 = vsel %vm2861, %v2943, %v2942
    %v2945 = vsub.s32 4, %v2921
    %v2946 = vsel %vm2861, %v2945, %v2921
    %v2947 = vsel %vm2860, %v2538, %v2944
    %v2948 = vsel %vm2860, 0, %v2946
    %v2949 = vcosq.f32.pop %v2947
    %v2950 = vsinq.f32.pop %v2947
    %vm2951 = vweird.f32 %v2538
    %v2952 = vadd.s32 %v2948, 3
    %v2953 = vand.u32 %v2952, 3
    %vm2954 = vcmp.lt.s32.totalorder %v2953, 2
    %vm2955 = vcmp.eq.s32.totalorder %v2953, 0
    %v2956 = vxor.u32 %v2950, 2147483648
    %v2957 = vsel %vm2955, %v2949, %v2956
    %vm2958 = vcmp.eq.s32.totalorder %v2953, 2
    %v2959 = vxor.u32 %v2949, 2147483648
    %v2960 = vsel %vm2958, %v2959, %v2950
    %v2961 = vsel %vm2954, %v2957, %v2960
    %v2962 = vsel %vm2951, nan, %v2961
    %v2963 = vand.u32 2147483647, %v2535
    %vm2964 = vcmp.le.f32.partialorder %v2963, 0.7853982
    %vm2965 = vcmp.lt.s32.totalorder %v2535, 0
    %v2966 = vand.u32 %v2535, 2139095040
    %v2967 = vshrl.u32 %v2966, 23
    %v2968 = vsub.s32 %v2967, 127
    %v2969 = vand.u32 2147483647, %v2535
    %v2970 = vand.u32 %v2969, 8388607
    %v2971 = vor.u32 %v2970, 8388608
    %v2972 = vsub.s32 0, %v2971
    %v2973 = vadd.s32 %v2968, 1
    %vm2974 = vcmp.gt.s32.totalorder %v2973, 0
    %v2975 = vsel %vm2974, %v2973, 0
    %v2976 = vshrl.u32 %v2975, 5
    %v2977 = vand.u32 %v2975, 31
    %v2978 = vsub.s32 32, %v2977
    %v2979 = vshrl.u32 683565275, %v2978
    %v2980 = vshll.u32 683565275, %v2977
    %v2981 = vshrl.u32 2475754826, %v2978
    %v2982 = vor.u32 %v2980, %v2981
    %v2983 = vshll.u32 2475754826, %v2977
    %v2984 = vshrl.u32 2131351028, %v2978
    %v2985 = vor.u32 %v2983, %v2984
    %v2986 = vshll.u32 2131351028, %v2977
    %v2987 = vshrl.u32 2102212464, %v2978
    %v2988 = vor.u32 %v2986, %v2987
    %v2989 = vshll.u32 2102212464, %v2977
    %v2990 = vshrl.u32 920167782, %v2978
    %v2991 = vor.u32 %v2989, %v2990
    %v2992 = vshll.u32 920167782, %v2977
    %v2993 = vshrl.u32 1326507024, %v2978
    %v2994 = vor.u32 %v2992, %v2993
    %vm2995 = vcmp.lt.s32.totalorder %v2976, 1
    %vm2996 = vcmp.lt.s32.totalorder %v2976, 2
    %vm2997 = vcmp.lt.s32.totalorder %v2976, 3
    %vm2998 = vcmp.lt.s32.totalorder %v2976, 4
    %v2999 = vsel %vm2995, %v2979, %v2982
    %v3000 = vsel %vm2998, %v2988, 2102212464
    %v3001 = vsel %vm2997, %v2985, %v3000
    %v3002 = vsel %vm2996, %v2999, %v3001
    %v3003 = vsel %vm2995, %v2982, %v2985
    %v3004 = vsel %vm2998, %v2991, 920167782
    %v3005 = vsel %vm2997, %v2988, %v3004
    %v3006 = vsel %vm2996, %v3003, %v3005
    %v3007 = vsel %vm2995, %v2985, %v2988
    %v3008 = vsel %vm2998, %v2994, 1326507024
    %v3009 = vsel %vm2997, %v2991, %v3008
    %v3010 = vsel %vm2996, %v3007, %v3009
    %v3011 = vshll.u32 %v2971, 8
    %v3012 = vmul.u32.u64.compose %v3011, %v3010
    %v3013 = vextract.low.u32 %v3012
    %v3014 = vextract.high.u32 %v3012
    %v3015 = vmul.u32.u64.compose %v3011, %v3006
    %v3016 = vextract.low.u32 %v3015
    %v3017 = vextract.high.u32 %v3015
    %v3018 = vmul.u32 %v3011, %v3002
    %v3019 = vadd.s32 %v3014, %v3016
    %vm3020 = vc.u32 %v3014, %v3016
    %v3021 = vadd.s32 %v3017, 1
    %v3022 = vsel %vm3020, %v3021, %v3017
    %v3023 = vadd.s32 %v3018, %v3022
    %v3024 = vadd.s32 %v3023, 536870912
    %v3025 = vshrl.u32 %v3024, 30
    %v3026 = vshll.u32 %v3025, 30
    %v3027 = vsub.s32 %v3023, %v3026
    %vm3028 = vcmp.lt.s32.totalorder %v3027, 0
    %v3029 = vsub.s32 0, %v3027
    %v3030 = vsel %vm3028, %v3029, %v3027
    %v3031 = vclz %v3030
    %v3032 = vsub.s32 %v3031, 2
    %vm3033 = vcmp.gt.s32.totalorder 0, %v3032
    %v3034 = vsel %vm3033, 0, %v3032
    %v3035 = vsub.s32 32, %v3034
    %v3036 = vshll.u32 %v3027, %v3034
    %v3037 = vshrl.u32 %v3019, %v3035
    %v3038 = vor.u32 %v3036, %v3037
    %v3039 = vsub.s32 4294967266, %v3034
    %v3040 = vadd.s32 %v3039, 127
    %v3041 = vshll.u32 %v3040, 23
    %v3042 = vor.u32 4788187, %v3041
    %v3043 = vand.u32 2147483647, %v3042
    %v3045 = vcvt.s32.f32 %v3038
    %v3046 = vmul.f32 %v3045, %v3043
    %v3047 = vxor.u32 %v3046, 2147483648
    %v3048 = vsel %vm2965, %v3047, %v3046
    %v3049 = vsub.s32 4, %v3025
    %v3050 = vsel %vm2965, %v3049, %v3025
    %v3051 = vsel %vm2964, %v2535, %v3048
    %v3052 = vsel %vm2964, 0, %v3050
    %v3053 = vcosq.f32.pop %v3051
    %v3054 = vsinq.f32.pop %v3051
    %vm3055 = vweird.f32 %v2535
    %v3056 = vand.u32 %v3052, 3
    %vm3057 = vcmp.lt.s32.totalorder %v3056, 2
    %vm3058 = vcmp.eq.s32.totalorder %v3056, 0
    %v3059 = vxor.u32 %v3054, 2147483648
    %v3060 = vsel %vm3058, %v3053, %v3059
    %vm3061 = vcmp.eq.s32.totalorder %v3056, 2
    %v3062 = vxor.u32 %v3053, 2147483648
    %v3063 = vsel %vm3061, %v3062, %v3054
    %v3064 = vsel %vm3057, %v3060, %v3063
    %v3065 = vsel %vm3055, nan, %v3064
    %v3066 = vand.u32 2147483647, %v2536
    %vm3067 = vcmp.le.f32.partialorder %v3066, 0.7853982
    %vm3068 = vcmp.lt.s32.totalorder %v2536, 0
    %v3069 = vand.u32 %v2536, 2139095040
    %v3070 = vshrl.u32 %v3069, 23
    %v3071 = vsub.s32 %v3070, 127
    %v3072 = vand.u32 2147483647, %v2536
    %v3073 = vand.u32 %v3072, 8388607
    %v3074 = vor.u32 %v3073, 8388608
    %v3075 = vsub.s32 0, %v3074
    %v3076 = vadd.s32 %v3071, 1
    %vm3077 = vcmp.gt.s32.totalorder %v3076, 0
    %v3078 = vsel %vm3077, %v3076, 0
    %v3079 = vshrl.u32 %v3078, 5
    %v3080 = vand.u32 %v3078, 31
    %v3081 = vsub.s32 32, %v3080
    %v3082 = vshrl.u32 683565275, %v3081
    %v3083 = vshll.u32 683565275, %v3080
    %v3084 = vshrl.u32 2475754826, %v3081
    %v3085 = vor.u32 %v3083, %v3084
    %v3086 = vshll.u32 2475754826, %v3080
    %v3087 = vshrl.u32 2131351028, %v3081
    %v3088 = vor.u32 %v3086, %v3087
    %v3089 = vshll.u32 2131351028, %v3080
    %v3090 = vshrl.u32 2102212464, %v3081
    %v3091 = vor.u32 %v3089, %v3090
    %v3092 = vshll.u32 2102212464, %v3080
    %v3093 = vshrl.u32 920167782, %v3081
    %v3094 = vor.u32 %v3092, %v3093
    %v3095 = vshll.u32 920167782, %v3080
    %v3096 = vshrl.u32 1326507024, %v3081
    %v3097 = vor.u32 %v3095, %v3096
    %vm3098 = vcmp.lt.s32.totalorder %v3079, 1
    %vm3099 = vcmp.lt.s32.totalorder %v3079, 2
    %vm3100 = vcmp.lt.s32.totalorder %v3079, 3
    %vm3101 = vcmp.lt.s32.totalorder %v3079, 4
    %v3102 = vsel %vm3098, %v3082, %v3085
    %v3103 = vsel %vm3101, %v3091, 2102212464
    %v3104 = vsel %vm3100, %v3088, %v3103
    %v3105 = vsel %vm3099, %v3102, %v3104
    %v3106 = vsel %vm3098, %v3085, %v3088
    %v3107 = vsel %vm3101, %v3094, 920167782
    %v3108 = vsel %vm3100, %v3091, %v3107
    %v3109 = vsel %vm3099, %v3106, %v3108
    %v3110 = vsel %vm3098, %v3088, %v3091
    %v3111 = vsel %vm3101, %v3097, 1326507024
    %v3112 = vsel %vm3100, %v3094, %v3111
    %v3113 = vsel %vm3099, %v3110, %v3112
    %v3114 = vshll.u32 %v3074, 8
    %v3115 = vmul.u32.u64.compose %v3114, %v3113
    %v3116 = vextract.low.u32 %v3115
    %v3117 = vextract.high.u32 %v3115
    %v3118 = vmul.u32.u64.compose %v3114, %v3109
    %v3119 = vextract.low.u32 %v3118
    %v3120 = vextract.high.u32 %v3118
    %v3121 = vmul.u32 %v3114, %v3105
    %v3122 = vadd.s32 %v3117, %v3119
    %vm3123 = vc.u32 %v3117, %v3119
    %v3124 = vadd.s32 %v3120, 1
    %v3125 = vsel %vm3123, %v3124, %v3120
    %v3126 = vadd.s32 %v3121, %v3125
    %v3127 = vadd.s32 %v3126, 536870912
    %v3128 = vshrl.u32 %v3127, 30
    %v3129 = vshll.u32 %v3128, 30
    %v3130 = vsub.s32 %v3126, %v3129
    %vm3131 = vcmp.lt.s32.totalorder %v3130, 0
    %v3132 = vsub.s32 0, %v3130
    %v3133 = vsel %vm3131, %v3132, %v3130
    %v3134 = vclz %v3133
    %v3135 = vsub.s32 %v3134, 2
    %vm3136 = vcmp.gt.s32.totalorder 0, %v3135
    %v3137 = vsel %vm3136, 0, %v3135
    %v3138 = vsub.s32 32, %v3137
    %v3139 = vshll.u32 %v3130, %v3137
    %v3140 = vshrl.u32 %v3122, %v3138
    %v3141 = vor.u32 %v3139, %v3140
    %v3142 = vsub.s32 4294967266, %v3137
    %v3143 = vadd.s32 %v3142, 127
    %v3144 = vshll.u32 %v3143, 23
    %v3145 = vor.u32 4788187, %v3144
    %v3146 = vand.u32 2147483647, %v3145
    %v3148 = vcvt.s32.f32 %v3141
    %v3149 = vmul.f32 %v3148, %v3146
    %v3150 = vxor.u32 %v3149, 2147483648
    %v3151 = vsel %vm3068, %v3150, %v3149
    %v3152 = vsub.s32 4, %v3128
    %v3153 = vsel %vm3068, %v3152, %v3128
    %v3154 = vsel %vm3067, %v2536, %v3151
    %v3155 = vsel %vm3067, 0, %v3153
    %v3156 = vcosq.f32.pop %v3154
    %v3157 = vsinq.f32.pop %v3154
    %vm3158 = vweird.f32 %v2536
    %v3159 = vand.u32 %v3155, 3
    %vm3160 = vcmp.lt.s32.totalorder %v3159, 2
    %vm3161 = vcmp.eq.s32.totalorder %v3159, 0
    %v3162 = vxor.u32 %v3157, 2147483648
    %v3163 = vsel %vm3161, %v3156, %v3162
    %vm3164 = vcmp.eq.s32.totalorder %v3159, 2
    %v3165 = vxor.u32 %v3156, 2147483648
    %v3166 = vsel %vm3164, %v3165, %v3157
    %v3167 = vsel %vm3160, %v3163, %v3166
    %v3168 = vsel %vm3158, nan, %v3167
    %v3169 = vand.u32 2147483647, %v2537
    %vm3170 = vcmp.le.f32.partialorder %v3169, 0.7853982
    %vm3171 = vcmp.lt.s32.totalorder %v2537, 0
    %v3172 = vand.u32 %v2537, 2139095040
    %v3173 = vshrl.u32 %v3172, 23
    %v3174 = vsub.s32 %v3173, 127
    %v3175 = vand.u32 2147483647, %v2537
    %v3176 = vand.u32 %v3175, 8388607
    %v3177 = vor.u32 %v3176, 8388608
    %v3178 = vsub.s32 0, %v3177
    %v3179 = vadd.s32 %v3174, 1
    %vm3180 = vcmp.gt.s32.totalorder %v3179, 0
    %v3181 = vsel %vm3180, %v3179, 0
    %v3182 = vshrl.u32 %v3181, 5
    %v3183 = vand.u32 %v3181, 31
    %v3184 = vsub.s32 32, %v3183
    %v3185 = vshrl.u32 683565275, %v3184
    %v3186 = vshll.u32 683565275, %v3183
    %v3187 = vshrl.u32 2475754826, %v3184
    %v3188 = vor.u32 %v3186, %v3187
    %v3189 = vshll.u32 2475754826, %v3183
    %v3190 = vshrl.u32 2131351028, %v3184
    %v3191 = vor.u32 %v3189, %v3190
    %v3192 = vshll.u32 2131351028, %v3183
    %v3193 = vshrl.u32 2102212464, %v3184
    %v3194 = vor.u32 %v3192, %v3193
    %v3195 = vshll.u32 2102212464, %v3183
    %v3196 = vshrl.u32 920167782, %v3184
    %v3197 = vor.u32 %v3195, %v3196
    %v3198 = vshll.u32 920167782, %v3183
    %v3199 = vshrl.u32 1326507024, %v3184
    %v3200 = vor.u32 %v3198, %v3199
    %vm3201 = vcmp.lt.s32.totalorder %v3182, 1
    %vm3202 = vcmp.lt.s32.totalorder %v3182, 2
    %vm3203 = vcmp.lt.s32.totalorder %v3182, 3
    %vm3204 = vcmp.lt.s32.totalorder %v3182, 4
    %v3205 = vsel %vm3201, %v3185, %v3188
    %v3206 = vsel %vm3204, %v3194, 2102212464
    %v3207 = vsel %vm3203, %v3191, %v3206
    %v3208 = vsel %vm3202, %v3205, %v3207
    %v3209 = vsel %vm3201, %v3188, %v3191
    %v3210 = vsel %vm3204, %v3197, 920167782
    %v3211 = vsel %vm3203, %v3194, %v3210
    %v3212 = vsel %vm3202, %v3209, %v3211
    %v3213 = vsel %vm3201, %v3191, %v3194
    %v3214 = vsel %vm3204, %v3200, 1326507024
    %v3215 = vsel %vm3203, %v3197, %v3214
    %v3216 = vsel %vm3202, %v3213, %v3215
    %v3217 = vshll.u32 %v3177, 8
    %v3218 = vmul.u32.u64.compose %v3217, %v3216
    %v3219 = vextract.low.u32 %v3218
    %v3220 = vextract.high.u32 %v3218
    %v3221 = vmul.u32.u64.compose %v3217, %v3212
    %v3222 = vextract.low.u32 %v3221
    %v3223 = vextract.high.u32 %v3221
    %v3224 = vmul.u32 %v3217, %v3208
    %v3225 = vadd.s32 %v3220, %v3222
    %vm3226 = vc.u32 %v3220, %v3222
    %v3227 = vadd.s32 %v3223, 1
    %v3228 = vsel %vm3226, %v3227, %v3223
    %v3229 = vadd.s32 %v3224, %v3228
    %v3230 = vadd.s32 %v3229, 536870912
    %v3231 = vshrl.u32 %v3230, 30
    %v3232 = vshll.u32 %v3231, 30
    %v3233 = vsub.s32 %v3229, %v3232
    %vm3234 = vcmp.lt.s32.totalorder %v3233, 0
    %v3235 = vsub.s32 0, %v3233
    %v3236 = vsel %vm3234, %v3235, %v3233
    %v3237 = vclz %v3236
    %v3238 = vsub.s32 %v3237, 2
    %vm3239 = vcmp.gt.s32.totalorder 0, %v3238
    %v3240 = vsel %vm3239, 0, %v3238
    %v3241 = vsub.s32 32, %v3240
    %v3242 = vshll.u32 %v3233, %v3240
    %v3243 = vshrl.u32 %v3225, %v3241
    %v3244 = vor.u32 %v3242, %v3243
    %v3245 = vsub.s32 4294967266, %v3240
    %v3246 = vadd.s32 %v3245, 127
    %v3247 = vshll.u32 %v3246, 23
    %v3248 = vor.u32 4788187, %v3247
    %v3249 = vand.u32 2147483647, %v3248
    %v3251 = vcvt.s32.f32 %v3244
    %v3252 = vmul.f32 %v3251, %v3249
    %v3253 = vxor.u32 %v3252, 2147483648
    %v3254 = vsel %vm3171, %v3253, %v3252
    %v3255 = vsub.s32 4, %v3231
    %v3256 = vsel %vm3171, %v3255, %v3231
    %v3257 = vsel %vm3170, %v2537, %v3254
    %v3258 = vsel %vm3170, 0, %v3256
    %v3259 = vcosq.f32.pop %v3257
    %v3260 = vsinq.f32.pop %v3257
    %vm3261 = vweird.f32 %v2537
    %v3262 = vand.u32 %v3258, 3
    %vm3263 = vcmp.lt.s32.totalorder %v3262, 2
    %vm3264 = vcmp.eq.s32.totalorder %v3262, 0
    %v3265 = vxor.u32 %v3260, 2147483648
    %v3266 = vsel %vm3264, %v3259, %v3265
    %vm3267 = vcmp.eq.s32.totalorder %v3262, 2
    %v3268 = vxor.u32 %v3259, 2147483648
    %v3269 = vsel %vm3267, %v3268, %v3260
    %v3270 = vsel %vm3263, %v3266, %v3269
    %v3271 = vsel %vm3261, nan, %v3270
    %v3272 = vand.u32 2147483647, %v2538
    %vm3273 = vcmp.le.f32.partialorder %v3272, 0.7853982
    %vm3274 = vcmp.lt.s32.totalorder %v2538, 0
    %v3275 = vand.u32 %v2538, 2139095040
    %v3276 = vshrl.u32 %v3275, 23
    %v3277 = vsub.s32 %v3276, 127
    %v3278 = vand.u32 2147483647, %v2538
    %v3279 = vand.u32 %v3278, 8388607
    %v3280 = vor.u32 %v3279, 8388608
    %v3281 = vsub.s32 0, %v3280
    %v3282 = vadd.s32 %v3277, 1
    %vm3283 = vcmp.gt.s32.totalorder %v3282, 0
    %v3284 = vsel %vm3283, %v3282, 0
    %v3285 = vshrl.u32 %v3284, 5
    %v3286 = vand.u32 %v3284, 31
    %v3287 = vsub.s32 32, %v3286
    %v3288 = vshrl.u32 683565275, %v3287
    %v3289 = vshll.u32 683565275, %v3286
    %v3290 = vshrl.u32 2475754826, %v3287
    %v3291 = vor.u32 %v3289, %v3290
    %v3292 = vshll.u32 2475754826, %v3286
    %v3293 = vshrl.u32 2131351028, %v3287
    %v3294 = vor.u32 %v3292, %v3293
    %v3295 = vshll.u32 2131351028, %v3286
    %v3296 = vshrl.u32 2102212464, %v3287
    %v3297 = vor.u32 %v3295, %v3296
    %v3298 = vshll.u32 2102212464, %v3286
    %v3299 = vshrl.u32 920167782, %v3287
    %v3300 = vor.u32 %v3298, %v3299
    %v3301 = vshll.u32 920167782, %v3286
    %v3302 = vshrl.u32 1326507024, %v3287
    %v3303 = vor.u32 %v3301, %v3302
    %vm3304 = vcmp.lt.s32.totalorder %v3285, 1
    %vm3305 = vcmp.lt.s32.totalorder %v3285, 2
    %vm3306 = vcmp.lt.s32.totalorder %v3285, 3
    %vm3307 = vcmp.lt.s32.totalorder %v3285, 4
    %v3308 = vsel %vm3304, %v3288, %v3291
    %v3309 = vsel %vm3307, %v3297, 2102212464
    %v3310 = vsel %vm3306, %v3294, %v3309
    %v3311 = vsel %vm3305, %v3308, %v3310
    %v3312 = vsel %vm3304, %v3291, %v3294
    %v3313 = vsel %vm3307, %v3300, 920167782
    %v3314 = vsel %vm3306, %v3297, %v3313
    %v3315 = vsel %vm3305, %v3312, %v3314
    %v3316 = vsel %vm3304, %v3294, %v3297
    %v3317 = vsel %vm3307, %v3303, 1326507024
    %v3318 = vsel %vm3306, %v3300, %v3317
    %v3319 = vsel %vm3305, %v3316, %v3318
    %v3320 = vshll.u32 %v3280, 8
    %v3321 = vmul.u32.u64.compose %v3320, %v3319
    %v3322 = vextract.low.u32 %v3321
    %v3323 = vextract.high.u32 %v3321
    %v3324 = vmul.u32.u64.compose %v3320, %v3315
    %v3325 = vextract.low.u32 %v3324
    %v3326 = vextract.high.u32 %v3324
    %v3327 = vmul.u32 %v3320, %v3311
    %v3328 = vadd.s32 %v3323, %v3325
    %vm3329 = vc.u32 %v3323, %v3325
    %v3330 = vadd.s32 %v3326, 1
    %v3331 = vsel %vm3329, %v3330, %v3326
    %v3332 = vadd.s32 %v3327, %v3331
    %v3333 = vadd.s32 %v3332, 536870912
    %v3334 = vshrl.u32 %v3333, 30
    %v3335 = vshll.u32 %v3334, 30
    %v3336 = vsub.s32 %v3332, %v3335
    %vm3337 = vcmp.lt.s32.totalorder %v3336, 0
    %v3338 = vsub.s32 0, %v3336
    %v3339 = vsel %vm3337, %v3338, %v3336
    %v3340 = vclz %v3339
    %v3341 = vsub.s32 %v3340, 2
    %vm3342 = vcmp.gt.s32.totalorder 0, %v3341
    %v3343 = vsel %vm3342, 0, %v3341
    %v3344 = vsub.s32 32, %v3343
    %v3345 = vshll.u32 %v3336, %v3343
    %v3346 = vshrl.u32 %v3328, %v3344
    %v3347 = vor.u32 %v3345, %v3346
    %v3348 = vsub.s32 4294967266, %v3343
    %v3349 = vadd.s32 %v3348, 127
    %v3350 = vshll.u32 %v3349, 23
    %v3351 = vor.u32 4788187, %v3350
    %v3352 = vand.u32 2147483647, %v3351
    %v3354 = vcvt.s32.f32 %v3347
    %v3355 = vmul.f32 %v3354, %v3352
    %v3356 = vxor.u32 %v3355, 2147483648
    %v3357 = vsel %vm3274, %v3356, %v3355
    %v3358 = vsub.s32 4, %v3334
    %v3359 = vsel %vm3274, %v3358, %v3334
    %v3360 = vsel %vm3273, %v2538, %v3357
    %v3361 = vsel %vm3273, 0, %v3359
    %v3362 = vcosq.f32.pop %v3360
    %v3363 = vsinq.f32.pop %v3360
    %vm3364 = vweird.f32 %v2538
    %v3365 = vand.u32 %v3361, 3
    %vm3366 = vcmp.lt.s32.totalorder %v3365, 2
    %vm3367 = vcmp.eq.s32.totalorder %v3365, 0
    %v3368 = vxor.u32 %v3363, 2147483648
    %v3369 = vsel %vm3367, %v3362, %v3368
    %vm3370 = vcmp.eq.s32.totalorder %v3365, 2
    %v3371 = vxor.u32 %v3362, 2147483648
    %v3372 = vsel %vm3370, %v3371, %v3363
    %v3373 = vsel %vm3366, %v3369, %v3372
    %v3374 = vsel %vm3364, nan, %v3373
    %v3375 = vand.u32 2147483647, %v2543
    %vm3376 = vcmp.le.f32.partialorder %v3375, 0.7853982
    %vm3377 = vcmp.lt.s32.totalorder %v2543, 0
    %v3378 = vand.u32 %v2543, 2139095040
    %v3379 = vshrl.u32 %v3378, 23
    %v3380 = vsub.s32 %v3379, 127
    %v3381 = vand.u32 2147483647, %v2543
    %v3382 = vand.u32 %v3381, 8388607
    %v3383 = vor.u32 %v3382, 8388608
    %v3384 = vsub.s32 0, %v3383
    %v3385 = vadd.s32 %v3380, 1
    %vm3386 = vcmp.gt.s32.totalorder %v3385, 0
    %v3387 = vsel %vm3386, %v3385, 0
    %v3388 = vshrl.u32 %v3387, 5
    %v3389 = vand.u32 %v3387, 31
    %v3390 = vsub.s32 32, %v3389
    %v3391 = vshrl.u32 683565275, %v3390
    %v3392 = vshll.u32 683565275, %v3389
    %v3393 = vshrl.u32 2475754826, %v3390
    %v3394 = vor.u32 %v3392, %v3393
    %v3395 = vshll.u32 2475754826, %v3389
    %v3396 = vshrl.u32 2131351028, %v3390
    %v3397 = vor.u32 %v3395, %v3396
    %v3398 = vshll.u32 2131351028, %v3389
    %v3399 = vshrl.u32 2102212464, %v3390
    %v3400 = vor.u32 %v3398, %v3399
    %v3401 = vshll.u32 2102212464, %v3389
    %v3402 = vshrl.u32 920167782, %v3390
    %v3403 = vor.u32 %v3401, %v3402
    %v3404 = vshll.u32 920167782, %v3389
    %v3405 = vshrl.u32 1326507024, %v3390
    %v3406 = vor.u32 %v3404, %v3405
    %vm3407 = vcmp.lt.s32.totalorder %v3388, 1
    %vm3408 = vcmp.lt.s32.totalorder %v3388, 2
    %vm3409 = vcmp.lt.s32.totalorder %v3388, 3
    %vm3410 = vcmp.lt.s32.totalorder %v3388, 4
    %v3411 = vsel %vm3407, %v3391, %v3394
    %v3412 = vsel %vm3410, %v3400, 2102212464
    %v3413 = vsel %vm3409, %v3397, %v3412
    %v3414 = vsel %vm3408, %v3411, %v3413
    %v3415 = vsel %vm3407, %v3394, %v3397
    %v3416 = vsel %vm3410, %v3403, 920167782
    %v3417 = vsel %vm3409, %v3400, %v3416
    %v3418 = vsel %vm3408, %v3415, %v3417
    %v3419 = vsel %vm3407, %v3397, %v3400
    %v3420 = vsel %vm3410, %v3406, 1326507024
    %v3421 = vsel %vm3409, %v3403, %v3420
    %v3422 = vsel %vm3408, %v3419, %v3421
    %v3423 = vshll.u32 %v3383, 8
    %v3424 = vmul.u32.u64.compose %v3423, %v3422
    %v3425 = vextract.low.u32 %v3424
    %v3426 = vextract.high.u32 %v3424
    %v3427 = vmul.u32.u64.compose %v3423, %v3418
    %v3428 = vextract.low.u32 %v3427
    %v3429 = vextract.high.u32 %v3427
    %v3430 = vmul.u32 %v3423, %v3414
    %v3431 = vadd.s32 %v3426, %v3428
    %vm3432 = vc.u32 %v3426, %v3428
    %v3433 = vadd.s32 %v3429, 1
    %v3434 = vsel %vm3432, %v3433, %v3429
    %v3435 = vadd.s32 %v3430, %v3434
    %v3436 = vadd.s32 %v3435, 536870912
    %v3437 = vshrl.u32 %v3436, 30
    %v3438 = vshll.u32 %v3437, 30
    %v3439 = vsub.s32 %v3435, %v3438
    %vm3440 = vcmp.lt.s32.totalorder %v3439, 0
    %v3441 = vsub.s32 0, %v3439
    %v3442 = vsel %vm3440, %v3441, %v3439
    %v3443 = vclz %v3442
    %v3444 = vsub.s32 %v3443, 2
    %vm3445 = vcmp.gt.s32.totalorder 0, %v3444
    %v3446 = vsel %vm3445, 0, %v3444
    %v3447 = vsub.s32 32, %v3446
    %v3448 = vshll.u32 %v3439, %v3446
    %v3449 = vshrl.u32 %v3431, %v3447
    %v3450 = vor.u32 %v3448, %v3449
    %v3451 = vsub.s32 4294967266, %v3446
    %v3452 = vadd.s32 %v3451, 127
    %v3453 = vshll.u32 %v3452, 23
    %v3454 = vor.u32 4788187, %v3453
    %v3455 = vand.u32 2147483647, %v3454
    %v3457 = vcvt.s32.f32 %v3450
    %v3458 = vmul.f32 %v3457, %v3455
    %v3459 = vxor.u32 %v3458, 2147483648
    %v3460 = vsel %vm3377, %v3459, %v3458
    %v3461 = vsub.s32 4, %v3437
    %v3462 = vsel %vm3377, %v3461, %v3437
    %v3463 = vsel %vm3376, %v2543, %v3460
    %v3464 = vsel %vm3376, 0, %v3462
    %v3465 = vcosq.f32.pop %v3463
    %v3466 = vsinq.f32.pop %v3463
    %vm3467 = vweird.f32 %v2543
    %v3468 = vadd.s32 %v3464, 3
    %v3469 = vand.u32 %v3468, 3
    %vm3470 = vcmp.lt.s32.totalorder %v3469, 2
    %vm3471 = vcmp.eq.s32.totalorder %v3469, 0
    %v3472 = vxor.u32 %v3466, 2147483648
    %v3473 = vsel %vm3471, %v3465, %v3472
    %vm3474 = vcmp.eq.s32.totalorder %v3469, 2
    %v3475 = vxor.u32 %v3465, 2147483648
    %v3476 = vsel %vm3474, %v3475, %v3466
    %v3477 = vsel %vm3470, %v3473, %v3476
    %v3478 = vsel %vm3467, nan, %v3477
    %v3479 = vand.u32 2147483647, %v2544
    %vm3480 = vcmp.le.f32.partialorder %v3479, 0.7853982
    %vm3481 = vcmp.lt.s32.totalorder %v2544, 0
    %v3482 = vand.u32 %v2544, 2139095040
    %v3483 = vshrl.u32 %v3482, 23
    %v3484 = vsub.s32 %v3483, 127
    %v3485 = vand.u32 2147483647, %v2544
    %v3486 = vand.u32 %v3485, 8388607
    %v3487 = vor.u32 %v3486, 8388608
    %v3488 = vsub.s32 0, %v3487
    %v3489 = vadd.s32 %v3484, 1
    %vm3490 = vcmp.gt.s32.totalorder %v3489, 0
    %v3491 = vsel %vm3490, %v3489, 0
    %v3492 = vshrl.u32 %v3491, 5
    %v3493 = vand.u32 %v3491, 31
    %v3494 = vsub.s32 32, %v3493
    %v3495 = vshrl.u32 683565275, %v3494
    %v3496 = vshll.u32 683565275, %v3493
    %v3497 = vshrl.u32 2475754826, %v3494
    %v3498 = vor.u32 %v3496, %v3497
    %v3499 = vshll.u32 2475754826, %v3493
    %v3500 = vshrl.u32 2131351028, %v3494
    %v3501 = vor.u32 %v3499, %v3500
    %v3502 = vshll.u32 2131351028, %v3493
    %v3503 = vshrl.u32 2102212464, %v3494
    %v3504 = vor.u32 %v3502, %v3503
    %v3505 = vshll.u32 2102212464, %v3493
    %v3506 = vshrl.u32 920167782, %v3494
    %v3507 = vor.u32 %v3505, %v3506
    %v3508 = vshll.u32 920167782, %v3493
    %v3509 = vshrl.u32 1326507024, %v3494
    %v3510 = vor.u32 %v3508, %v3509
    %vm3511 = vcmp.lt.s32.totalorder %v3492, 1
    %vm3512 = vcmp.lt.s32.totalorder %v3492, 2
    %vm3513 = vcmp.lt.s32.totalorder %v3492, 3
    %vm3514 = vcmp.lt.s32.totalorder %v3492, 4
    %v3515 = vsel %vm3511, %v3495, %v3498
    %v3516 = vsel %vm3514, %v3504, 2102212464
    %v3517 = vsel %vm3513, %v3501, %v3516
    %v3518 = vsel %vm3512, %v3515, %v3517
    %v3519 = vsel %vm3511, %v3498, %v3501
    %v3520 = vsel %vm3514, %v3507, 920167782
    %v3521 = vsel %vm3513, %v3504, %v3520
    %v3522 = vsel %vm3512, %v3519, %v3521
    %v3523 = vsel %vm3511, %v3501, %v3504
    %v3524 = vsel %vm3514, %v3510, 1326507024
    %v3525 = vsel %vm3513, %v3507, %v3524
    %v3526 = vsel %vm3512, %v3523, %v3525
    %v3527 = vshll.u32 %v3487, 8
    %v3528 = vmul.u32.u64.compose %v3527, %v3526
    %v3529 = vextract.low.u32 %v3528
    %v3530 = vextract.high.u32 %v3528
    %v3531 = vmul.u32.u64.compose %v3527, %v3522
    %v3532 = vextract.low.u32 %v3531
    %v3533 = vextract.high.u32 %v3531
    %v3534 = vmul.u32 %v3527, %v3518
    %v3535 = vadd.s32 %v3530, %v3532
    %vm3536 = vc.u32 %v3530, %v3532
    %v3537 = vadd.s32 %v3533, 1
    %v3538 = vsel %vm3536, %v3537, %v3533
    %v3539 = vadd.s32 %v3534, %v3538
    %v3540 = vadd.s32 %v3539, 536870912
    %v3541 = vshrl.u32 %v3540, 30
    %v3542 = vshll.u32 %v3541, 30
    %v3543 = vsub.s32 %v3539, %v3542
    %vm3544 = vcmp.lt.s32.totalorder %v3543, 0
    %v3545 = vsub.s32 0, %v3543
    %v3546 = vsel %vm3544, %v3545, %v3543
    %v3547 = vclz %v3546
    %v3548 = vsub.s32 %v3547, 2
    %vm3549 = vcmp.gt.s32.totalorder 0, %v3548
    %v3550 = vsel %vm3549, 0, %v3548
    %v3551 = vsub.s32 32, %v3550
    %v3552 = vshll.u32 %v3543, %v3550
    %v3553 = vshrl.u32 %v3535, %v3551
    %v3554 = vor.u32 %v3552, %v3553
    %v3555 = vsub.s32 4294967266, %v3550
    %v3556 = vadd.s32 %v3555, 127
    %v3557 = vshll.u32 %v3556, 23
    %v3558 = vor.u32 4788187, %v3557
    %v3559 = vand.u32 2147483647, %v3558
    %v3561 = vcvt.s32.f32 %v3554
    %v3562 = vmul.f32 %v3561, %v3559
    %v3563 = vxor.u32 %v3562, 2147483648
    %v3564 = vsel %vm3481, %v3563, %v3562
    %v3565 = vsub.s32 4, %v3541
    %v3566 = vsel %vm3481, %v3565, %v3541
    %v3567 = vsel %vm3480, %v2544, %v3564
    %v3568 = vsel %vm3480, 0, %v3566
    %v3569 = vcosq.f32.pop %v3567
    %v3570 = vsinq.f32.pop %v3567
    %vm3571 = vweird.f32 %v2544
    %v3572 = vadd.s32 %v3568, 3
    %v3573 = vand.u32 %v3572, 3
    %vm3574 = vcmp.lt.s32.totalorder %v3573, 2
    %vm3575 = vcmp.eq.s32.totalorder %v3573, 0
    %v3576 = vxor.u32 %v3570, 2147483648
    %v3577 = vsel %vm3575, %v3569, %v3576
    %vm3578 = vcmp.eq.s32.totalorder %v3573, 2
    %v3579 = vxor.u32 %v3569, 2147483648
    %v3580 = vsel %vm3578, %v3579, %v3570
    %v3581 = vsel %vm3574, %v3577, %v3580
    %v3582 = vsel %vm3571, nan, %v3581
    %v3583 = vand.u32 2147483647, %v2545
    %vm3584 = vcmp.le.f32.partialorder %v3583, 0.7853982
    %vm3585 = vcmp.lt.s32.totalorder %v2545, 0
    %v3586 = vand.u32 %v2545, 2139095040
    %v3587 = vshrl.u32 %v3586, 23
    %v3588 = vsub.s32 %v3587, 127
    %v3589 = vand.u32 2147483647, %v2545
    %v3590 = vand.u32 %v3589, 8388607
    %v3591 = vor.u32 %v3590, 8388608
    %v3592 = vsub.s32 0, %v3591
    %v3593 = vadd.s32 %v3588, 1
    %vm3594 = vcmp.gt.s32.totalorder %v3593, 0
    %v3595 = vsel %vm3594, %v3593, 0
    %v3596 = vshrl.u32 %v3595, 5
    %v3597 = vand.u32 %v3595, 31
    %v3598 = vsub.s32 32, %v3597
    %v3599 = vshrl.u32 683565275, %v3598
    %v3600 = vshll.u32 683565275, %v3597
    %v3601 = vshrl.u32 2475754826, %v3598
    %v3602 = vor.u32 %v3600, %v3601
    %v3603 = vshll.u32 2475754826, %v3597
    %v3604 = vshrl.u32 2131351028, %v3598
    %v3605 = vor.u32 %v3603, %v3604
    %v3606 = vshll.u32 2131351028, %v3597
    %v3607 = vshrl.u32 2102212464, %v3598
    %v3608 = vor.u32 %v3606, %v3607
    %v3609 = vshll.u32 2102212464, %v3597
    %v3610 = vshrl.u32 920167782, %v3598
    %v3611 = vor.u32 %v3609, %v3610
    %v3612 = vshll.u32 920167782, %v3597
    %v3613 = vshrl.u32 1326507024, %v3598
    %v3614 = vor.u32 %v3612, %v3613
    %vm3615 = vcmp.lt.s32.totalorder %v3596, 1
    %vm3616 = vcmp.lt.s32.totalorder %v3596, 2
    %vm3617 = vcmp.lt.s32.totalorder %v3596, 3
    %vm3618 = vcmp.lt.s32.totalorder %v3596, 4
    %v3619 = vsel %vm3615, %v3599, %v3602
    %v3620 = vsel %vm3618, %v3608, 2102212464
    %v3621 = vsel %vm3617, %v3605, %v3620
    %v3622 = vsel %vm3616, %v3619, %v3621
    %v3623 = vsel %vm3615, %v3602, %v3605
    %v3624 = vsel %vm3618, %v3611, 920167782
    %v3625 = vsel %vm3617, %v3608, %v3624
    %v3626 = vsel %vm3616, %v3623, %v3625
    %v3627 = vsel %vm3615, %v3605, %v3608
    %v3628 = vsel %vm3618, %v3614, 1326507024
    %v3629 = vsel %vm3617, %v3611, %v3628
    %v3630 = vsel %vm3616, %v3627, %v3629
    %v3631 = vshll.u32 %v3591, 8
    %v3632 = vmul.u32.u64.compose %v3631, %v3630
    %v3633 = vextract.low.u32 %v3632
    %v3634 = vextract.high.u32 %v3632
    %v3635 = vmul.u32.u64.compose %v3631, %v3626
    %v3636 = vextract.low.u32 %v3635
    %v3637 = vextract.high.u32 %v3635
    %v3638 = vmul.u32 %v3631, %v3622
    %v3639 = vadd.s32 %v3634, %v3636
    %vm3640 = vc.u32 %v3634, %v3636
    %v3641 = vadd.s32 %v3637, 1
    %v3642 = vsel %vm3640, %v3641, %v3637
    %v3643 = vadd.s32 %v3638, %v3642
    %v3644 = vadd.s32 %v3643, 536870912
    %v3645 = vshrl.u32 %v3644, 30
    %v3646 = vshll.u32 %v3645, 30
    %v3647 = vsub.s32 %v3643, %v3646
    %vm3648 = vcmp.lt.s32.totalorder %v3647, 0
    %v3649 = vsub.s32 0, %v3647
    %v3650 = vsel %vm3648, %v3649, %v3647
    %v3651 = vclz %v3650
    %v3652 = vsub.s32 %v3651, 2
    %vm3653 = vcmp.gt.s32.totalorder 0, %v3652
    %v3654 = vsel %vm3653, 0, %v3652
    %v3655 = vsub.s32 32, %v3654
    %v3656 = vshll.u32 %v3647, %v3654
    %v3657 = vshrl.u32 %v3639, %v3655
    %v3658 = vor.u32 %v3656, %v3657
    %v3659 = vsub.s32 4294967266, %v3654
    %v3660 = vadd.s32 %v3659, 127
    %v3661 = vshll.u32 %v3660, 23
    %v3662 = vor.u32 4788187, %v3661
    %v3663 = vand.u32 2147483647, %v3662
    %v3665 = vcvt.s32.f32 %v3658
    %v3666 = vmul.f32 %v3665, %v3663
    %v3667 = vxor.u32 %v3666, 2147483648
    %v3668 = vsel %vm3585, %v3667, %v3666
    %v3669 = vsub.s32 4, %v3645
    %v3670 = vsel %vm3585, %v3669, %v3645
    %v3671 = vsel %vm3584, %v2545, %v3668
    %v3672 = vsel %vm3584, 0, %v3670
    %v3673 = vcosq.f32.pop %v3671
    %v3674 = vsinq.f32.pop %v3671
    %vm3675 = vweird.f32 %v2545
    %v3676 = vadd.s32 %v3672, 3
    %v3677 = vand.u32 %v3676, 3
    %vm3678 = vcmp.lt.s32.totalorder %v3677, 2
    %vm3679 = vcmp.eq.s32.totalorder %v3677, 0
    %v3680 = vxor.u32 %v3674, 2147483648
    %v3681 = vsel %vm3679, %v3673, %v3680
    %vm3682 = vcmp.eq.s32.totalorder %v3677, 2
    %v3683 = vxor.u32 %v3673, 2147483648
    %v3684 = vsel %vm3682, %v3683, %v3674
    %v3685 = vsel %vm3678, %v3681, %v3684
    %v3686 = vsel %vm3675, nan, %v3685
    %v3687 = vand.u32 2147483647, %v2546
    %vm3688 = vcmp.le.f32.partialorder %v3687, 0.7853982
    %vm3689 = vcmp.lt.s32.totalorder %v2546, 0
    %v3690 = vand.u32 %v2546, 2139095040
    %v3691 = vshrl.u32 %v3690, 23
    %v3692 = vsub.s32 %v3691, 127
    %v3693 = vand.u32 2147483647, %v2546
    %v3694 = vand.u32 %v3693, 8388607
    %v3695 = vor.u32 %v3694, 8388608
    %v3696 = vsub.s32 0, %v3695
    %v3697 = vadd.s32 %v3692, 1
    %vm3698 = vcmp.gt.s32.totalorder %v3697, 0
    %v3699 = vsel %vm3698, %v3697, 0
    %v3700 = vshrl.u32 %v3699, 5
    %v3701 = vand.u32 %v3699, 31
    %v3702 = vsub.s32 32, %v3701
    %v3703 = vshrl.u32 683565275, %v3702
    %v3704 = vshll.u32 683565275, %v3701
    %v3705 = vshrl.u32 2475754826, %v3702
    %v3706 = vor.u32 %v3704, %v3705
    %v3707 = vshll.u32 2475754826, %v3701
    %v3708 = vshrl.u32 2131351028, %v3702
    %v3709 = vor.u32 %v3707, %v3708
    %v3710 = vshll.u32 2131351028, %v3701
    %v3711 = vshrl.u32 2102212464, %v3702
    %v3712 = vor.u32 %v3710, %v3711
    %v3713 = vshll.u32 2102212464, %v3701
    %v3714 = vshrl.u32 920167782, %v3702
    %v3715 = vor.u32 %v3713, %v3714
    %v3716 = vshll.u32 920167782, %v3701
    %v3717 = vshrl.u32 1326507024, %v3702
    %v3718 = vor.u32 %v3716, %v3717
    %vm3719 = vcmp.lt.s32.totalorder %v3700, 1
    %vm3720 = vcmp.lt.s32.totalorder %v3700, 2
    %vm3721 = vcmp.lt.s32.totalorder %v3700, 3
    %vm3722 = vcmp.lt.s32.totalorder %v3700, 4
    %v3723 = vsel %vm3719, %v3703, %v3706
    %v3724 = vsel %vm3722, %v3712, 2102212464
    %v3725 = vsel %vm3721, %v3709, %v3724
    %v3726 = vsel %vm3720, %v3723, %v3725
    %v3727 = vsel %vm3719, %v3706, %v3709
    %v3728 = vsel %vm3722, %v3715, 920167782
    %v3729 = vsel %vm3721, %v3712, %v3728
    %v3730 = vsel %vm3720, %v3727, %v3729
    %v3731 = vsel %vm3719, %v3709, %v3712
    %v3732 = vsel %vm3722, %v3718, 1326507024
    %v3733 = vsel %vm3721, %v3715, %v3732
    %v3734 = vsel %vm3720, %v3731, %v3733
    %v3735 = vshll.u32 %v3695, 8
    %v3736 = vmul.u32.u64.compose %v3735, %v3734
    %v3737 = vextract.low.u32 %v3736
    %v3738 = vextract.high.u32 %v3736
    %v3739 = vmul.u32.u64.compose %v3735, %v3730
    %v3740 = vextract.low.u32 %v3739
    %v3741 = vextract.high.u32 %v3739
    %v3742 = vmul.u32 %v3735, %v3726
    %v3743 = vadd.s32 %v3738, %v3740
    %vm3744 = vc.u32 %v3738, %v3740
    %v3745 = vadd.s32 %v3741, 1
    %v3746 = vsel %vm3744, %v3745, %v3741
    %v3747 = vadd.s32 %v3742, %v3746
    %v3748 = vadd.s32 %v3747, 536870912
    %v3749 = vshrl.u32 %v3748, 30
    %v3750 = vshll.u32 %v3749, 30
    %v3751 = vsub.s32 %v3747, %v3750
    %vm3752 = vcmp.lt.s32.totalorder %v3751, 0
    %v3753 = vsub.s32 0, %v3751
    %v3754 = vsel %vm3752, %v3753, %v3751
    %v3755 = vclz %v3754
    %v3756 = vsub.s32 %v3755, 2
    %vm3757 = vcmp.gt.s32.totalorder 0, %v3756
    %v3758 = vsel %vm3757, 0, %v3756
    %v3759 = vsub.s32 32, %v3758
    %v3760 = vshll.u32 %v3751, %v3758
    %v3761 = vshrl.u32 %v3743, %v3759
    %v3762 = vor.u32 %v3760, %v3761
    %v3763 = vsub.s32 4294967266, %v3758
    %v3764 = vadd.s32 %v3763, 127
    %v3765 = vshll.u32 %v3764, 23
    %v3766 = vor.u32 4788187, %v3765
    %v3767 = vand.u32 2147483647, %v3766
    %v3769 = vcvt.s32.f32 %v3762
    %v3770 = vmul.f32 %v3769, %v3767
    %v3771 = vxor.u32 %v3770, 2147483648
    %v3772 = vsel %vm3689, %v3771, %v3770
    %v3773 = vsub.s32 4, %v3749
    %v3774 = vsel %vm3689, %v3773, %v3749
    %v3775 = vsel %vm3688, %v2546, %v3772
    %v3776 = vsel %vm3688, 0, %v3774
    %v3777 = vcosq.f32.pop %v3775
    %v3778 = vsinq.f32.pop %v3775
    %vm3779 = vweird.f32 %v2546
    %v3780 = vadd.s32 %v3776, 3
    %v3781 = vand.u32 %v3780, 3
    %vm3782 = vcmp.lt.s32.totalorder %v3781, 2
    %vm3783 = vcmp.eq.s32.totalorder %v3781, 0
    %v3784 = vxor.u32 %v3778, 2147483648
    %v3785 = vsel %vm3783, %v3777, %v3784
    %vm3786 = vcmp.eq.s32.totalorder %v3781, 2
    %v3787 = vxor.u32 %v3777, 2147483648
    %v3788 = vsel %vm3786, %v3787, %v3778
    %v3789 = vsel %vm3782, %v3785, %v3788
    %v3790 = vsel %vm3779, nan, %v3789
    %v3791 = vand.u32 2147483647, %v2543
    %vm3792 = vcmp.le.f32.partialorder %v3791, 0.7853982
    %vm3793 = vcmp.lt.s32.totalorder %v2543, 0
    %v3794 = vand.u32 %v2543, 2139095040
    %v3795 = vshrl.u32 %v3794, 23
    %v3796 = vsub.s32 %v3795, 127
    %v3797 = vand.u32 2147483647, %v2543
    %v3798 = vand.u32 %v3797, 8388607
    %v3799 = vor.u32 %v3798, 8388608
    %v3800 = vsub.s32 0, %v3799
    %v3801 = vadd.s32 %v3796, 1
    %vm3802 = vcmp.gt.s32.totalorder %v3801, 0
    %v3803 = vsel %vm3802, %v3801, 0
    %v3804 = vshrl.u32 %v3803, 5
    %v3805 = vand.u32 %v3803, 31
    %v3806 = vsub.s32 32, %v3805
    %v3807 = vshrl.u32 683565275, %v3806
    %v3808 = vshll.u32 683565275, %v3805
    %v3809 = vshrl.u32 2475754826, %v3806
    %v3810 = vor.u32 %v3808, %v3809
    %v3811 = vshll.u32 2475754826, %v3805
    %v3812 = vshrl.u32 2131351028, %v3806
    %v3813 = vor.u32 %v3811, %v3812
    %v3814 = vshll.u32 2131351028, %v3805
    %v3815 = vshrl.u32 2102212464, %v3806
    %v3816 = vor.u32 %v3814, %v3815
    %v3817 = vshll.u32 2102212464, %v3805
    %v3818 = vshrl.u32 920167782, %v3806
    %v3819 = vor.u32 %v3817, %v3818
    %v3820 = vshll.u32 920167782, %v3805
    %v3821 = vshrl.u32 1326507024, %v3806
    %v3822 = vor.u32 %v3820, %v3821
    %vm3823 = vcmp.lt.s32.totalorder %v3804, 1
    %vm3824 = vcmp.lt.s32.totalorder %v3804, 2
    %vm3825 = vcmp.lt.s32.totalorder %v3804, 3
    %vm3826 = vcmp.lt.s32.totalorder %v3804, 4
    %v3827 = vsel %vm3823, %v3807, %v3810
    %v3828 = vsel %vm3826, %v3816, 2102212464
    %v3829 = vsel %vm3825, %v3813, %v3828
    %v3830 = vsel %vm3824, %v3827, %v3829
    %v3831 = vsel %vm3823, %v3810, %v3813
    %v3832 = vsel %vm3826, %v3819, 920167782
    %v3833 = vsel %vm3825, %v3816, %v3832
    %v3834 = vsel %vm3824, %v3831, %v3833
    %v3835 = vsel %vm3823, %v3813, %v3816
    %v3836 = vsel %vm3826, %v3822, 1326507024
    %v3837 = vsel %vm3825, %v3819, %v3836
    %v3838 = vsel %vm3824, %v3835, %v3837
    %v3839 = vshll.u32 %v3799, 8
    %v3840 = vmul.u32.u64.compose %v3839, %v3838
    %v3841 = vextract.low.u32 %v3840
    %v3842 = vextract.high.u32 %v3840
    %v3843 = vmul.u32.u64.compose %v3839, %v3834
    %v3844 = vextract.low.u32 %v3843
    %v3845 = vextract.high.u32 %v3843
    %v3846 = vmul.u32 %v3839, %v3830
    %v3847 = vadd.s32 %v3842, %v3844
    %vm3848 = vc.u32 %v3842, %v3844
    %v3849 = vadd.s32 %v3845, 1
    %v3850 = vsel %vm3848, %v3849, %v3845
    %v3851 = vadd.s32 %v3846, %v3850
    %v3852 = vadd.s32 %v3851, 536870912
    %v3853 = vshrl.u32 %v3852, 30
    %v3854 = vshll.u32 %v3853, 30
    %v3855 = vsub.s32 %v3851, %v3854
    %vm3856 = vcmp.lt.s32.totalorder %v3855, 0
    %v3857 = vsub.s32 0, %v3855
    %v3858 = vsel %vm3856, %v3857, %v3855
    %v3859 = vclz %v3858
    %v3860 = vsub.s32 %v3859, 2
    %vm3861 = vcmp.gt.s32.totalorder 0, %v3860
    %v3862 = vsel %vm3861, 0, %v3860
    %v3863 = vsub.s32 32, %v3862
    %v3864 = vshll.u32 %v3855, %v3862
    %v3865 = vshrl.u32 %v3847, %v3863
    %v3866 = vor.u32 %v3864, %v3865
    %v3867 = vsub.s32 4294967266, %v3862
    %v3868 = vadd.s32 %v3867, 127
    %v3869 = vshll.u32 %v3868, 23
    %v3870 = vor.u32 4788187, %v3869
    %v3871 = vand.u32 2147483647, %v3870
    %v3873 = vcvt.s32.f32 %v3866
    %v3874 = vmul.f32 %v3873, %v3871
    %v3875 = vxor.u32 %v3874, 2147483648
    %v3876 = vsel %vm3793, %v3875, %v3874
    %v3877 = vsub.s32 4, %v3853
    %v3878 = vsel %vm3793, %v3877, %v3853
    %v3879 = vsel %vm3792, %v2543, %v3876
    %v3880 = vsel %vm3792, 0, %v3878
    %v3881 = vcosq.f32.pop %v3879
    %v3882 = vsinq.f32.pop %v3879
    %vm3883 = vweird.f32 %v2543
    %v3884 = vand.u32 %v3880, 3
    %vm3885 = vcmp.lt.s32.totalorder %v3884, 2
    %vm3886 = vcmp.eq.s32.totalorder %v3884, 0
    %v3887 = vxor.u32 %v3882, 2147483648
    %v3888 = vsel %vm3886, %v3881, %v3887
    %vm3889 = vcmp.eq.s32.totalorder %v3884, 2
    %v3890 = vxor.u32 %v3881, 2147483648
    %v3891 = vsel %vm3889, %v3890, %v3882
    %v3892 = vsel %vm3885, %v3888, %v3891
    %v3893 = vsel %vm3883, nan, %v3892
    %v3894 = vand.u32 2147483647, %v2544
    %vm3895 = vcmp.le.f32.partialorder %v3894, 0.7853982
    %vm3896 = vcmp.lt.s32.totalorder %v2544, 0
    %v3897 = vand.u32 %v2544, 2139095040
    %v3898 = vshrl.u32 %v3897, 23
    %v3899 = vsub.s32 %v3898, 127
    %v3900 = vand.u32 2147483647, %v2544
    %v3901 = vand.u32 %v3900, 8388607
    %v3902 = vor.u32 %v3901, 8388608
    %v3903 = vsub.s32 0, %v3902
    %v3904 = vadd.s32 %v3899, 1
    %vm3905 = vcmp.gt.s32.totalorder %v3904, 0
    %v3906 = vsel %vm3905, %v3904, 0
    %v3907 = vshrl.u32 %v3906, 5
    %v3908 = vand.u32 %v3906, 31
    %v3909 = vsub.s32 32, %v3908
    %v3910 = vshrl.u32 683565275, %v3909
    %v3911 = vshll.u32 683565275, %v3908
    %v3912 = vshrl.u32 2475754826, %v3909
    %v3913 = vor.u32 %v3911, %v3912
    %v3914 = vshll.u32 2475754826, %v3908
    %v3915 = vshrl.u32 2131351028, %v3909
    %v3916 = vor.u32 %v3914, %v3915
    %v3917 = vshll.u32 2131351028, %v3908
    %v3918 = vshrl.u32 2102212464, %v3909
    %v3919 = vor.u32 %v3917, %v3918
    %v3920 = vshll.u32 2102212464, %v3908
    %v3921 = vshrl.u32 920167782, %v3909
    %v3922 = vor.u32 %v3920, %v3921
    %v3923 = vshll.u32 920167782, %v3908
    %v3924 = vshrl.u32 1326507024, %v3909
    %v3925 = vor.u32 %v3923, %v3924
    %vm3926 = vcmp.lt.s32.totalorder %v3907, 1
    %vm3927 = vcmp.lt.s32.totalorder %v3907, 2
    %vm3928 = vcmp.lt.s32.totalorder %v3907, 3
    %vm3929 = vcmp.lt.s32.totalorder %v3907, 4
    %v3930 = vsel %vm3926, %v3910, %v3913
    %v3931 = vsel %vm3929, %v3919, 2102212464
    %v3932 = vsel %vm3928, %v3916, %v3931
    %v3933 = vsel %vm3927, %v3930, %v3932
    %v3934 = vsel %vm3926, %v3913, %v3916
    %v3935 = vsel %vm3929, %v3922, 920167782
    %v3936 = vsel %vm3928, %v3919, %v3935
    %v3937 = vsel %vm3927, %v3934, %v3936
    %v3938 = vsel %vm3926, %v3916, %v3919
    %v3939 = vsel %vm3929, %v3925, 1326507024
    %v3940 = vsel %vm3928, %v3922, %v3939
    %v3941 = vsel %vm3927, %v3938, %v3940
    %v3942 = vshll.u32 %v3902, 8
    %v3943 = vmul.u32.u64.compose %v3942, %v3941
    %v3944 = vextract.low.u32 %v3943
    %v3945 = vextract.high.u32 %v3943
    %v3946 = vmul.u32.u64.compose %v3942, %v3937
    %v3947 = vextract.low.u32 %v3946
    %v3948 = vextract.high.u32 %v3946
    %v3949 = vmul.u32 %v3942, %v3933
    %v3950 = vadd.s32 %v3945, %v3947
    %vm3951 = vc.u32 %v3945, %v3947
    %v3952 = vadd.s32 %v3948, 1
    %v3953 = vsel %vm3951, %v3952, %v3948
    %v3954 = vadd.s32 %v3949, %v3953
    %v3955 = vadd.s32 %v3954, 536870912
    %v3956 = vshrl.u32 %v3955, 30
    %v3957 = vshll.u32 %v3956, 30
    %v3958 = vsub.s32 %v3954, %v3957
    %vm3959 = vcmp.lt.s32.totalorder %v3958, 0
    %v3960 = vsub.s32 0, %v3958
    %v3961 = vsel %vm3959, %v3960, %v3958
    %v3962 = vclz %v3961
    %v3963 = vsub.s32 %v3962, 2
    %vm3964 = vcmp.gt.s32.totalorder 0, %v3963
    %v3965 = vsel %vm3964, 0, %v3963
    %v3966 = vsub.s32 32, %v3965
    %v3967 = vshll.u32 %v3958, %v3965
    %v3968 = vshrl.u32 %v3950, %v3966
    %v3969 = vor.u32 %v3967, %v3968
    %v3970 = vsub.s32 4294967266, %v3965
    %v3971 = vadd.s32 %v3970, 127
    %v3972 = vshll.u32 %v3971, 23
    %v3973 = vor.u32 4788187, %v3972
    %v3974 = vand.u32 2147483647, %v3973
    %v3976 = vcvt.s32.f32 %v3969
    %v3977 = vmul.f32 %v3976, %v3974
    %v3978 = vxor.u32 %v3977, 2147483648
    %v3979 = vsel %vm3896, %v3978, %v3977
    %v3980 = vsub.s32 4, %v3956
    %v3981 = vsel %vm3896, %v3980, %v3956
    %v3982 = vsel %vm3895, %v2544, %v3979
    %v3983 = vsel %vm3895, 0, %v3981
    %v3984 = vcosq.f32.pop %v3982
    %v3985 = vsinq.f32.pop %v3982
    %vm3986 = vweird.f32 %v2544
    %v3987 = vand.u32 %v3983, 3
    %vm3988 = vcmp.lt.s32.totalorder %v3987, 2
    %vm3989 = vcmp.eq.s32.totalorder %v3987, 0
    %v3990 = vxor.u32 %v3985, 2147483648
    %v3991 = vsel %vm3989, %v3984, %v3990
    %vm3992 = vcmp.eq.s32.totalorder %v3987, 2
    %v3993 = vxor.u32 %v3984, 2147483648
    %v3994 = vsel %vm3992, %v3993, %v3985
    %v3995 = vsel %vm3988, %v3991, %v3994
    %v3996 = vsel %vm3986, nan, %v3995
    %v3997 = vand.u32 2147483647, %v2545
    %vm3998 = vcmp.le.f32.partialorder %v3997, 0.7853982
    %vm3999 = vcmp.lt.s32.totalorder %v2545, 0
    %v4000 = vand.u32 %v2545, 2139095040
    %v4001 = vshrl.u32 %v4000, 23
    %v4002 = vsub.s32 %v4001, 127
    %v4003 = vand.u32 2147483647, %v2545
    %v4004 = vand.u32 %v4003, 8388607
    %v4005 = vor.u32 %v4004, 8388608
    %v4006 = vsub.s32 0, %v4005
    %v4007 = vadd.s32 %v4002, 1
    %vm4008 = vcmp.gt.s32.totalorder %v4007, 0
    %v4009 = vsel %vm4008, %v4007, 0
    %v4010 = vshrl.u32 %v4009, 5
    %v4011 = vand.u32 %v4009, 31
    %v4012 = vsub.s32 32, %v4011
    %v4013 = vshrl.u32 683565275, %v4012
    %v4014 = vshll.u32 683565275, %v4011
    %v4015 = vshrl.u32 2475754826, %v4012
    %v4016 = vor.u32 %v4014, %v4015
    %v4017 = vshll.u32 2475754826, %v4011
    %v4018 = vshrl.u32 2131351028, %v4012
    %v4019 = vor.u32 %v4017, %v4018
    %v4020 = vshll.u32 2131351028, %v4011
    %v4021 = vshrl.u32 2102212464, %v4012
    %v4022 = vor.u32 %v4020, %v4021
    %v4023 = vshll.u32 2102212464, %v4011
    %v4024 = vshrl.u32 920167782, %v4012
    %v4025 = vor.u32 %v4023, %v4024
    %v4026 = vshll.u32 920167782, %v4011
    %v4027 = vshrl.u32 1326507024, %v4012
    %v4028 = vor.u32 %v4026, %v4027
    %vm4029 = vcmp.lt.s32.totalorder %v4010, 1
    %vm4030 = vcmp.lt.s32.totalorder %v4010, 2
    %vm4031 = vcmp.lt.s32.totalorder %v4010, 3
    %vm4032 = vcmp.lt.s32.totalorder %v4010, 4
    %v4033 = vsel %vm4029, %v4013, %v4016
    %v4034 = vsel %vm4032, %v4022, 2102212464
    %v4035 = vsel %vm4031, %v4019, %v4034
    %v4036 = vsel %vm4030, %v4033, %v4035
    %v4037 = vsel %vm4029, %v4016, %v4019
    %v4038 = vsel %vm4032, %v4025, 920167782
    %v4039 = vsel %vm4031, %v4022, %v4038
    %v4040 = vsel %vm4030, %v4037, %v4039
    %v4041 = vsel %vm4029, %v4019, %v4022
    %v4042 = vsel %vm4032, %v4028, 1326507024
    %v4043 = vsel %vm4031, %v4025, %v4042
    %v4044 = vsel %vm4030, %v4041, %v4043
    %v4045 = vshll.u32 %v4005, 8
    %v4046 = vmul.u32.u64.compose %v4045, %v4044
    %v4047 = vextract.low.u32 %v4046
    %v4048 = vextract.high.u32 %v4046
    %v4049 = vmul.u32.u64.compose %v4045, %v4040
    %v4050 = vextract.low.u32 %v4049
    %v4051 = vextract.high.u32 %v4049
    %v4052 = vmul.u32 %v4045, %v4036
    %v4053 = vadd.s32 %v4048, %v4050
    %vm4054 = vc.u32 %v4048, %v4050
    %v4055 = vadd.s32 %v4051, 1
    %v4056 = vsel %vm4054, %v4055, %v4051
    %v4057 = vadd.s32 %v4052, %v4056
    %v4058 = vadd.s32 %v4057, 536870912
    %v4059 = vshrl.u32 %v4058, 30
    %v4060 = vshll.u32 %v4059, 30
    %v4061 = vsub.s32 %v4057, %v4060
    %vm4062 = vcmp.lt.s32.totalorder %v4061, 0
    %v4063 = vsub.s32 0, %v4061
    %v4064 = vsel %vm4062, %v4063, %v4061
    %v4065 = vclz %v4064
    %v4066 = vsub.s32 %v4065, 2
    %vm4067 = vcmp.gt.s32.totalorder 0, %v4066
    %v4068 = vsel %vm4067, 0, %v4066
    %v4069 = vsub.s32 32, %v4068
    %v4070 = vshll.u32 %v4061, %v4068
    %v4071 = vshrl.u32 %v4053, %v4069
    %v4072 = vor.u32 %v4070, %v4071
    %v4073 = vsub.s32 4294967266, %v4068
    %v4074 = vadd.s32 %v4073, 127
    %v4075 = vshll.u32 %v4074, 23
    %v4076 = vor.u32 4788187, %v4075
    %v4077 = vand.u32 2147483647, %v4076
    %v4079 = vcvt.s32.f32 %v4072
    %v4080 = vmul.f32 %v4079, %v4077
    %v4081 = vxor.u32 %v4080, 2147483648
    %v4082 = vsel %vm3999, %v4081, %v4080
    %v4083 = vsub.s32 4, %v4059
    %v4084 = vsel %vm3999, %v4083, %v4059
    %v4085 = vsel %vm3998, %v2545, %v4082
    %v4086 = vsel %vm3998, 0, %v4084
    %v4087 = vcosq.f32.pop %v4085
    %v4088 = vsinq.f32.pop %v4085
    %vm4089 = vweird.f32 %v2545
    %v4090 = vand.u32 %v4086, 3
    %vm4091 = vcmp.lt.s32.totalorder %v4090, 2
    %vm4092 = vcmp.eq.s32.totalorder %v4090, 0
    %v4093 = vxor.u32 %v4088, 2147483648
    %v4094 = vsel %vm4092, %v4087, %v4093
    %vm4095 = vcmp.eq.s32.totalorder %v4090, 2
    %v4096 = vxor.u32 %v4087, 2147483648
    %v4097 = vsel %vm4095, %v4096, %v4088
    %v4098 = vsel %vm4091, %v4094, %v4097
    %v4099 = vsel %vm4089, nan, %v4098
    %v4100 = vand.u32 2147483647, %v2546
    %vm4101 = vcmp.le.f32.partialorder %v4100, 0.7853982
    %vm4102 = vcmp.lt.s32.totalorder %v2546, 0
    %v4103 = vand.u32 %v2546, 2139095040
    %v4104 = vshrl.u32 %v4103, 23
    %v4105 = vsub.s32 %v4104, 127
    %v4106 = vand.u32 2147483647, %v2546
    %v4107 = vand.u32 %v4106, 8388607
    %v4108 = vor.u32 %v4107, 8388608
    %v4109 = vsub.s32 0, %v4108
    %v4110 = vadd.s32 %v4105, 1
    %vm4111 = vcmp.gt.s32.totalorder %v4110, 0
    %v4112 = vsel %vm4111, %v4110, 0
    %v4113 = vshrl.u32 %v4112, 5
    %v4114 = vand.u32 %v4112, 31
    %v4115 = vsub.s32 32, %v4114
    %v4116 = vshrl.u32 683565275, %v4115
    %v4117 = vshll.u32 683565275, %v4114
    %v4118 = vshrl.u32 2475754826, %v4115
    %v4119 = vor.u32 %v4117, %v4118
    %v4120 = vshll.u32 2475754826, %v4114
    %v4121 = vshrl.u32 2131351028, %v4115
    %v4122 = vor.u32 %v4120, %v4121
    %v4123 = vshll.u32 2131351028, %v4114
    %v4124 = vshrl.u32 2102212464, %v4115
    %v4125 = vor.u32 %v4123, %v4124
    %v4126 = vshll.u32 2102212464, %v4114
    %v4127 = vshrl.u32 920167782, %v4115
    %v4128 = vor.u32 %v4126, %v4127
    %v4129 = vshll.u32 920167782, %v4114
    %v4130 = vshrl.u32 1326507024, %v4115
    %v4131 = vor.u32 %v4129, %v4130
    %vm4132 = vcmp.lt.s32.totalorder %v4113, 1
    %vm4133 = vcmp.lt.s32.totalorder %v4113, 2
    %vm4134 = vcmp.lt.s32.totalorder %v4113, 3
    %vm4135 = vcmp.lt.s32.totalorder %v4113, 4
    %v4136 = vsel %vm4132, %v4116, %v4119
    %v4137 = vsel %vm4135, %v4125, 2102212464
    %v4138 = vsel %vm4134, %v4122, %v4137
    %v4139 = vsel %vm4133, %v4136, %v4138
    %v4140 = vsel %vm4132, %v4119, %v4122
    %v4141 = vsel %vm4135, %v4128, 920167782
    %v4142 = vsel %vm4134, %v4125, %v4141
    %v4143 = vsel %vm4133, %v4140, %v4142
    %v4144 = vsel %vm4132, %v4122, %v4125
    %v4145 = vsel %vm4135, %v4131, 1326507024
    %v4146 = vsel %vm4134, %v4128, %v4145
    %v4147 = vsel %vm4133, %v4144, %v4146
    %v4148 = vshll.u32 %v4108, 8
    %v4149 = vmul.u32.u64.compose %v4148, %v4147
    %v4150 = vextract.low.u32 %v4149
    %v4151 = vextract.high.u32 %v4149
    %v4152 = vmul.u32.u64.compose %v4148, %v4143
    %v4153 = vextract.low.u32 %v4152
    %v4154 = vextract.high.u32 %v4152
    %v4155 = vmul.u32 %v4148, %v4139
    %v4156 = vadd.s32 %v4151, %v4153
    %vm4157 = vc.u32 %v4151, %v4153
    %v4158 = vadd.s32 %v4154, 1
    %v4159 = vsel %vm4157, %v4158, %v4154
    %v4160 = vadd.s32 %v4155, %v4159
    %v4161 = vadd.s32 %v4160, 536870912
    %v4162 = vshrl.u32 %v4161, 30
    %v4163 = vshll.u32 %v4162, 30
    %v4164 = vsub.s32 %v4160, %v4163
    %vm4165 = vcmp.lt.s32.totalorder %v4164, 0
    %v4166 = vsub.s32 0, %v4164
    %v4167 = vsel %vm4165, %v4166, %v4164
    %v4168 = vclz %v4167
    %v4169 = vsub.s32 %v4168, 2
    %vm4170 = vcmp.gt.s32.totalorder 0, %v4169
    %v4171 = vsel %vm4170, 0, %v4169
    %v4172 = vsub.s32 32, %v4171
    %v4173 = vshll.u32 %v4164, %v4171
    %v4174 = vshrl.u32 %v4156, %v4172
    %v4175 = vor.u32 %v4173, %v4174
    %v4176 = vsub.s32 4294967266, %v4171
    %v4177 = vadd.s32 %v4176, 127
    %v4178 = vshll.u32 %v4177, 23
    %v4179 = vor.u32 4788187, %v4178
    %v4180 = vand.u32 2147483647, %v4179
    %v4182 = vcvt.s32.f32 %v4175
    %v4183 = vmul.f32 %v4182, %v4180
    %v4184 = vxor.u32 %v4183, 2147483648
    %v4185 = vsel %vm4102, %v4184, %v4183
    %v4186 = vsub.s32 4, %v4162
    %v4187 = vsel %vm4102, %v4186, %v4162
    %v4188 = vsel %vm4101, %v2546, %v4185
    %v4189 = vsel %vm4101, 0, %v4187
    %v4190 = vcosq.f32.pop %v4188
    %v4191 = vsinq.f32.pop %v4188
    %vm4192 = vweird.f32 %v2546
    %v4193 = vand.u32 %v4189, 3
    %vm4194 = vcmp.lt.s32.totalorder %v4193, 2
    %vm4195 = vcmp.eq.s32.totalorder %v4193, 0
    %v4196 = vxor.u32 %v4191, 2147483648
    %v4197 = vsel %vm4195, %v4190, %v4196
    %vm4198 = vcmp.eq.s32.totalorder %v4193, 2
    %v4199 = vxor.u32 %v4190, 2147483648
    %v4200 = vsel %vm4198, %v4199, %v4191
    %v4201 = vsel %vm4194, %v4197, %v4200
    %v4202 = vsel %vm4192, nan, %v4201
    %v4203 = vpack.c.bf16 %v2754, %v2650
    %v4204 = vpack.c.bf16 %v2962, %v2858
    %v4205 = vpack.c.bf16 %v3168, %v3065
    %v4206 = vpack.c.bf16 %v3374, %v3271
    %v4207 = vpack.c.bf16 %v3582, %v3478
    %v4208 = vpack.c.bf16 %v3790, %v3686
    %v4209 = vpack.c.bf16 %v3996, %v3893
    %v4210 = vpack.c.bf16 %v4202, %v4099
    %4211 = vmatprep.subr.bf16.mxu0 0
    %4212 = vmatpush1.bf16.msra.mxu0 %v4203
    %4213 = vmatprep.subr.bf16.mxu0 0
    %4214 = vmatpush1.bf16.msra.mxu0 %v4204
    %4215 = vmatprep.subr.bf16.mxu0 0
    %4216 = vmatpush1.bf16.msra.mxu0 %v4205
    %4217 = vmatprep.subr.bf16.mxu0 0
    %4218 = vmatpush1.bf16.msra.mxu0 %v4206
    %4219 = vmatprep.subr.bf16.mxu0 0
    %4220 = vmatpush1.bf16.msra.mxu0 %v4207
    %4221 = vmatprep.subr.bf16.mxu0 0
    %4222 = vmatpush1.bf16.msra.mxu0 %v4208
    %4223 = vmatprep.subr.bf16.mxu0 0
    %4224 = vmatpush1.bf16.msra.mxu0 %v4209
    %4225 = vmatprep.subr.bf16.mxu0 0
    %4226 = vmatpush1.bf16.msra.mxu0 %v4210
    %4227 = vmatprep.subr.bf16.mxu0 0
    %4228 = vmatpush1.bf16.msra.mxu0 %v267
    %4229 = vmatprep.subr.bf16.mxu0 0
    %4230 = vmatpush1.bf16.msra.mxu0 0
    %4231 = vmatprep.subr.bf16.mxu0 0
    %4232 = vmatpush1.bf16.msra.mxu0 0
    %4233 = vmatprep.subr.bf16.mxu0 0
    %4234 = vmatpush1.bf16.msra.mxu0 0
    %4235 = vmatprep.subr.bf16.mxu0 0
    %4236 = vmatpush1.bf16.msra.mxu0 0
    %4237 = vmatprep.subr.bf16.mxu0 0
    %4238 = vmatpush1.bf16.msra.mxu0 0
    %4239 = vmatprep.subr.bf16.mxu0 0
    %4240 = vmatpush1.bf16.msra.mxu0 0
    %4241 = vmatprep.subr.bf16.mxu0 0
    %4242 = vmatpush1.bf16.msra.mxu0 0
    %4243 = vmatprep.mubr.bf16.mxu0 %v2477
    %4244 = vmatmul.mubr.bf16.gmra.mrb[0].mxu0 %v2471
    %v4245 = vpop.f32.mrb[0].mxu0
    %v4246 = vadd.f32 0.0, %v4245
    %v4247 = vpop.f32.mrb[0].mxu0
    %v4248 = vpop.f32.mrb[0].mxu0
    %v4249 = vadd.f32 0.0, %v4248
    %v4250 = vpop.f32.mrb[0].mxu0
    %4251 = vmatprep.mubr.bf16.mxu0 %v2480
    %4252 = vmatmul.mubr.bf16.gmra.mrb[0].mxu0 %v2472
    %v4253 = vpop.f32.mrb[0].mxu0
    %v4254 = vadd.f32 0.0, %v4253
    %v4255 = vpop.f32.mrb[0].mxu0
    %v4256 = vpop.f32.mrb[0].mxu0
    %v4257 = vadd.f32 0.0, %v4256
    %v4258 = vpop.f32.mrb[0].mxu0
    %4259 = vdwg.mxu0
    %v4260 = vmul.f32 %v396, %v508
    %v4261 = vmul.f32 %v399, %v511
    %v4262 = vmul.f32 %v404, %v516
    %v4263 = vmul.f32 %v407, %v519
    %v4264 = vadd.f32 %v396, %v508
    %v4265 = vadd.f32 %v399, %v511
    %v4266 = vadd.f32 %v404, %v516
    %v4267 = vadd.f32 %v407, %v519
    %vm4268 = vcmask 1043456
    %v4269 = vsel %vm4268, %v148, 1.0
    %v4270 = vpack.c.bf16 %v4261, %v4260
    %v4271 = vpack.c.bf16 %v4263, %v4262
    %v4272 = vpack.c.bf16 %v4265, %v4264
    %v4273 = vpack.c.bf16 %v4267, %v4266
    %v4274 = vpack.c.bf16 %v137, %v136
    %v4275 = vpack.c.bf16 %v139, %v138
    %v4276 = vpack.c.bf16 %v141, %v140
    %v4277 = vpack.c.bf16 %v143, %v142
    %v4278 = vpack.c.bf16 %v145, %v144
    %v4279 = vpack.c.bf16 %v147, %v146
    %v4280 = vpack.c.bf16 %v4269, %v4269
    %v4282 = vrot.slane %v743, 7
    %vm4288 = vcmask 1041408
    %v4289 = vrot.slane %v2517, 6
    %v4290 = vrot.slane %v2520, 6
    %v4291 = vsel %vm4288, %v4289, %v4290
    %v4292 = vrot.slane %v2525, 6
    %v4293 = vsel %vm4288, %v4290, %v4292
    %v4294 = vrot.slane %v2528, 6
    %v4295 = vsel %vm4288, %v4292, %v4294
    %v4305 = vrot.slane %v4246, 6
    %v4306 = vrot.slane %v4249, 6
    %v4307 = vsel %vm4288, %v4305, %v4306
    %v4308 = vrot.slane %v4254, 6
    %v4309 = vsel %vm4288, %v4306, %v4308
    %v4310 = vrot.slane %v4257, 6
    %v4311 = vsel %vm4288, %v4308, %v4310
    %v4317 = vsel %vm263, %v753, %v4282
    %v4318 = vsel %vm4288, %v4317, %v4289
    %v4319 = vsel %vm4288, %v4294, %v4305
    %v4320 = vsel %vm4288, %v4310, 1.0
    %v4321 = vpack.c.bf16 %v40, %v36
    %v4322 = vpack.c.bf16 %v48, %v44
    %v4323 = vpack.c.bf16 %v4291, %v4318
    %v4324 = vpack.c.bf16 %v4295, %v4293
    %v4325 = vpack.c.bf16 %v4307, %v4319
    %v4326 = vpack.c.bf16 %v4311, %v4309
    %v4327 = vpack.c.bf16 %v4320, %v4320
    %4330 = vrot.lane.b32.xlu0 %v2447, 56
    %v4331 = vpop.permute.xlu0 %4330
    %4332 = vrot.lane.b32.xlu0 %v4321, 56
    %v4333 = vpop.permute.xlu0 %4332
    %4334 = vrot.lane.b32.xlu0 %v2449, 56
    %v4335 = vpop.permute.xlu0 %4334
    %4336 = vrot.lane.b32.xlu0 %v4322, 56
    %v4337 = vpop.permute.xlu0 %4336
    %vm4338 = vcmask 457728
    %v4339 = vsel %vm4338, %v4331, %v4333
    %v4340 = vsel %vm4338, %v4335, %v4337
    %vm4341 = vcmask 547840
    %v4343 = vsel %vm4341, %v4339, 0
    %v4346 = vsel %vm4341, %v4340, 0
    %v4348 = vsel %vm263, 4294967295, 65535
    %v4349 = vsel %vm4288, %v4348, 0
    %v4351 = vand.u32 %v4327, %v4349
    %4353 = vmatprep.subr.bf16.mxu0 0
    %4354 = vmatpush1.bf16.msra.mxu0 %v4323
    %4355 = vmatprep.subr.bf16.mxu0 0
    %4356 = vmatpush1.bf16.msra.mxu0 %v4324
    %4357 = vmatprep.subr.bf16.mxu0 0
    %4358 = vmatpush1.bf16.msra.mxu0 %v4325
    %4359 = vmatprep.subr.bf16.mxu0 0
    %4360 = vmatpush1.bf16.msra.mxu0 %v4326
    %4361 = vmatprep.subr.bf16.mxu0 0
    %4362 = vmatpush1.bf16.msra.mxu0 %v4351
    %4363 = vmatprep.subr.bf16.mxu0 0
    %4364 = vmatpush1.bf16.msra.mxu0 0
    %4365 = vmatprep.subr.bf16.mxu0 0
    %4366 = vmatpush1.bf16.msra.mxu0 0
    %4367 = vmatprep.subr.bf16.mxu0 0
    %4368 = vmatpush1.bf16.msra.mxu0 0
    %4369 = vmatprep.subr.bf16.mxu0 0
    %4370 = vmatpush1.bf16.msra.mxu0 0
    %4371 = vmatprep.subr.bf16.mxu0 0
    %4372 = vmatpush1.bf16.msra.mxu0 0
    %4373 = vmatprep.subr.bf16.mxu0 0
    %4374 = vmatpush1.bf16.msra.mxu0 0
    %4375 = vmatprep.subr.bf16.mxu0 0
    %4376 = vmatpush1.bf16.msra.mxu0 0
    %4377 = vmatprep.subr.bf16.mxu0 0
    %4378 = vmatpush1.bf16.msra.mxu0 0
    %4379 = vmatprep.subr.bf16.mxu0 0
    %4380 = vmatpush1.bf16.msra.mxu0 0
    %4381 = vmatprep.subr.bf16.mxu0 0
    %4382 = vmatpush1.bf16.msra.mxu0 0
    %4383 = vmatprep.subr.bf16.mxu0 0
    %4384 = vmatpush1.bf16.msra.mxu0 0
    %4385 = vmatprep.mubr.bf16.mxu0 0
    %4386 = vmatmul.mubr.bf16.gmra.mrb[0].mxu0 %v4343
    %v4387 = vpop.f32.mrb[0].mxu0
    %v4388 = vadd.f32 0.0, %v4387
    %v4389 = vpop.f32.mrb[0].mxu0
    %v4390 = vpop.f32.mrb[0].mxu0
    %v4391 = vadd.f32 0.0, %v4390
    %v4392 = vpop.f32.mrb[0].mxu0
    %4393 = vmatprep.mubr.bf16.mxu0 0
    %4394 = vmatmul.mubr.bf16.gmra.mrb[0].mxu0 %v4346
    %v4395 = vpop.f32.mrb[0].mxu0
    %v4396 = vadd.f32 0.0, %v4395
    %v4397 = vpop.f32.mrb[0].mxu0
    %v4398 = vpop.f32.mrb[0].mxu0
    %v4399 = vadd.f32 0.0, %v4398
    %v4400 = vpop.f32.mrb[0].mxu0
    %4401 = vdwg.mxu0
    %v4402 = vxor.u32 %v4388, 2147483648
    %v4403 = vxor.u32 %v4391, 2147483648
    %v4404 = vxor.u32 %v4396, 2147483648
    %v4405 = vxor.u32 %v4399, 2147483648
    %v4406 = vmul.f32 %v4402, 1.442695
    %v4407 = vpow.pop %v4406
    %v4408 = vmul.f32 %v4403, 1.442695
    %v4409 = vpow.pop %v4408
    %v4410 = vmul.f32 %v4404, 1.442695
    %v4411 = vpow.pop %v4410
    %v4412 = vmul.f32 %v4405, 1.442695
    %v4413 = vpow.pop %v4412
    %v4414 = vadd.f32 %v4407, 1.0
    %v4415 = vadd.f32 %v4409, 1.0
    %v4416 = vadd.f32 %v4411, 1.0
    %v4417 = vadd.f32 %v4413, 1.0
    %v4418 = vrcp.pop %v4414
    %v4419 = vmul.f32 1.0, %v4418
    %v4420 = vrcp.pop %v4415
    %v4421 = vmul.f32 1.0, %v4420
    %v4422 = vrcp.pop %v4416
    %v4423 = vmul.f32 1.0, %v4422
    %v4424 = vrcp.pop %v4417
    %v4425 = vmul.f32 1.0, %v4424
    %v4426 = vmul.f32 %v4388, %v4419
    %v4427 = vmul.f32 %v4391, %v4421
    %v4428 = vmul.f32 %v4396, %v4423
    %v4429 = vmul.f32 %v4399, %v4425
    %v4430 = vpack.c.bf16 %v4427, %v4426
    %v4431 = vpack.c.bf16 %v4429, %v4428
    %4432 = vrot.lane.b32.xlu0 %v4321, 117
    %v4433 = vpop.permute.xlu0 %4432
    %4434 = vrot.lane.b32.xlu0 %v4322, 117
    %v4435 = vpop.permute.xlu0 %4434
    %v4437 = vsel %vm256, %v4433, 0
    %v4440 = vsel %vm256, %v4435, 0
    %4442 = vmatprep.subr.bf16.mxu0 0
    %4443 = vmatpush1.bf16.msra.mxu0 %v4430
    %4444 = vmatprep.subr.bf16.mxu0 0
    %4445 = vmatpush1.bf16.msra.mxu0 %v4431
    %4446 = vmatprep.subr.bf16.mxu0 0
    %4447 = vmatpush1.bf16.msra.mxu0 %v267
    %4448 = vmatprep.subr.bf16.mxu0 0
    %4449 = vmatpush1.bf16.msra.mxu0 0
    %4450 = vmatprep.subr.bf16.mxu0 0
    %4451 = vmatpush1.bf16.msra.mxu0 0
    %4452 = vmatprep.subr.bf16.mxu0 0
    %4453 = vmatpush1.bf16.msra.mxu0 0
    %4454 = vmatprep.subr.bf16.mxu0 0
    %4455 = vmatpush1.bf16.msra.mxu0 0
    %4456 = vmatprep.subr.bf16.mxu0 0
    %4457 = vmatpush1.bf16.msra.mxu0 0
    %4458 = vmatprep.subr.bf16.mxu0 0
    %4459 = vmatpush1.bf16.msra.mxu0 0
    %4460 = vmatprep.subr.bf16.mxu0 0
    %4461 = vmatpush1.bf16.msra.mxu0 0
    %4462 = vmatprep.subr.bf16.mxu0 0
    %4463 = vmatpush1.bf16.msra.mxu0 0
    %4464 = vmatprep.subr.bf16.mxu0 0
    %4465 = vmatpush1.bf16.msra.mxu0 0
    %4466 = vmatprep.subr.bf16.mxu0 0
    %4467 = vmatpush1.bf16.msra.mxu0 0
    %4468 = vmatprep.subr.bf16.mxu0 0
    %4469 = vmatpush1.bf16.msra.mxu0 0
    %4470 = vmatprep.subr.bf16.mxu0 0
    %4471 = vmatpush1.bf16.msra.mxu0 0
    %4472 = vmatprep.subr.bf16.mxu0 0
    %4473 = vmatpush1.bf16.msra.mxu0 0
    %4474 = vmatprep.mubr.bf16.mxu0 0
    %4475 = vmatmul.mubr.bf16.gmra.mrb[0].mxu0 %v4437
    %v4476 = vpop.f32.mrb[0].mxu0
    %v4477 = vadd.f32 0.0, %v4476
    %v4478 = vpop.f32.mrb[0].mxu0
    %v4479 = vpop.f32.mrb[0].mxu0
    %v4480 = vadd.f32 0.0, %v4479
    %v4481 = vpop.f32.mrb[0].mxu0
    %4482 = vmatprep.mubr.bf16.mxu0 0
    %4483 = vmatmul.mubr.bf16.gmra.mrb[0].mxu0 %v4440
    %v4484 = vpop.f32.mrb[0].mxu0
    %v4485 = vadd.f32 0.0, %v4484
    %v4486 = vpop.f32.mrb[0].mxu0
    %v4487 = vpop.f32.mrb[0].mxu0
    %v4488 = vadd.f32 0.0, %v4487
    %v4489 = vpop.f32.mrb[0].mxu0
    %4490 = vdwg.mxu0
    %4491 = vrot.lane.b32.xlu0 %v245, 94
    %v4492 = vpop.permute.xlu0 %4491
    %4493 = vrot.lane.b32.xlu0 %v2446, 94
    %v4494 = vpop.permute.xlu0 %4493
    %4495 = vrot.lane.b32.xlu0 %v246, 94
    %v4496 = vpop.permute.xlu0 %4495
    %4497 = vrot.lane.b32.xlu0 %v2448, 94
    %v4498 = vpop.permute.xlu0 %4497
    %vm4499 = vcmask 769024
    %v4500 = vsel %vm4499, %v4492, %v4494
    %v4501 = vsel %vm4499, %v4496, %v4498
    %vm4504 = vcmask 302080
    %v4506 = vsel %vm4504, %v4494, 0
    %v4509 = vsel %vm4504, %v4498, 0
    %vm4511 = vcmask 1042432
    %v4512 = vsel %vm4288, 4294967295, 65535
    %v4513 = vsel %vm4511, %v4512, 0
    %v4515 = vand.u32 %v4280, %v4513
    %4517 = vmatprep.subr.bf16.mxu0 0
    %4518 = vmatpush1.bf16.msra.mxu0 %v4270
    %4519 = vmatprep.subr.bf16.mxu0 0
    %4520 = vmatpush1.bf16.msra.mxu0 %v4271
    %4521 = vmatprep.subr.bf16.mxu0 0
    %4522 = vmatpush1.bf16.msra.mxu0 %v4272
    %4523 = vmatprep.subr.bf16.mxu0 0
    %4524 = vmatpush1.bf16.msra.mxu0 %v4273
    %4525 = vmatprep.subr.bf16.mxu0 0
    %4526 = vmatpush1.bf16.msra.mxu0 %v4274
    %4527 = vmatprep.subr.bf16.mxu0 0
    %4528 = vmatpush1.bf16.msra.mxu0 %v4275
    %4529 = vmatprep.subr.bf16.mxu0 0
    %4530 = vmatpush1.bf16.msra.mxu0 %v4276
    %4531 = vmatprep.subr.bf16.mxu0 0
    %4532 = vmatpush1.bf16.msra.mxu0 %v4277
    %4533 = vmatprep.subr.bf16.mxu0 0
    %4534 = vmatpush1.bf16.msra.mxu0 %v4278
    %4535 = vmatprep.subr.bf16.mxu0 0
    %4536 = vmatpush1.bf16.msra.mxu0 %v4279
    %4537 = vmatprep.subr.bf16.mxu0 0
    %4538 = vmatpush1.bf16.msra.mxu0 %v4515
    %4539 = vmatprep.subr.bf16.mxu0 0
    %4540 = vmatpush1.bf16.msra.mxu0 0
    %4541 = vmatprep.subr.bf16.mxu0 0
    %4542 = vmatpush1.bf16.msra.mxu0 0
    %4543 = vmatprep.subr.bf16.mxu0 0
    %4544 = vmatpush1.bf16.msra.mxu0 0
    %4545 = vmatprep.subr.bf16.mxu0 0
    %4546 = vmatpush1.bf16.msra.mxu0 0
    %4547 = vmatprep.subr.bf16.mxu0 0
    %4548 = vmatpush1.bf16.msra.mxu0 0
    %4549 = vmatprep.mubr.bf16.mxu0 %v4506
    %4550 = vmatmul.mubr.bf16.gmra.mrb[0].mxu0 %v4500
    %v4551 = vpop.f32.mrb[0].mxu0
    %v4552 = vadd.f32 %v4477, %v4551
    %v4553 = vpop.f32.mrb[0].mxu0
    %v4554 = vpop.f32.mrb[0].mxu0
    %v4555 = vadd.f32 %v4480, %v4554
    %v4556 = vpop.f32.mrb[0].mxu0
    %4557 = vmatprep.mubr.bf16.mxu0 %v4509
    %4558 = vmatmul.mubr.bf16.gmra.mrb[0].mxu0 %v4501
    %v4559 = vpop.f32.mrb[0].mxu0
    %v4560 = vadd.f32 %v4485, %v4559
    %v4561 = vpop.f32.mrb[0].mxu0
    %v4562 = vpop.f32.mrb[0].mxu0
    %v4563 = vadd.f32 %v4488, %v4562
    %v4564 = vpop.f32.mrb[0].mxu0
    %4565 = vdwg.mxu0
    %v4566 = vld [vmem:[%s4] sm:$0xff]
    %v4567 = vld [vmem:[%s4 + $0x8] sm:$0xff]
    %v4568 = vld [vmem:[%s4 + $0x10] sm:$0xff]
    %v4569 = vld [vmem:[%s4 + $0x18] sm:$0xff]
    %v4570 = vld [vmem:[%s4 + $0x20] sm:$0xff]
    %v4571 = vld [vmem:[%s4 + $0x28] sm:$0xff]
    %v4572 = vld [vmem:[%s4 + $0x30] sm:$0xff]
    %v4573 = vld [vmem:[%s4 + $0x38] sm:$0xff]
    %v4574 = vld [vmem:[%s4 + $0x40] sm:$0xff]
    %v4575 = vld [vmem:[%s4 + $0x48] sm:$0xff]
    %v4576 = vld [vmem:[%s4 + $0x50] sm:$0xff]
    %v4577 = vld [vmem:[%s4 + $0x58] sm:$0xff]
    %v4578 = vld [vmem:[%s4 + $0x60] sm:$0xff]
    %v4579 = vld [vmem:[%s4 + $0x68] sm:$0xff]
    %v4580 = vld [vmem:[%s4 + $0x70] sm:$0xff]
    %v4581 = vld [vmem:[%s4 + $0x78] sm:$0xff]
    %v4582 = vpack.c.bf16 %v4567, %v4566
    %v4583 = vpack.c.bf16 %v4569, %v4568
    %v4584 = vpack.c.bf16 %v4571, %v4570
    %v4585 = vpack.c.bf16 %v4573, %v4572
    %v4586 = vpack.c.bf16 %v4575, %v4574
    %v4587 = vpack.c.bf16 %v4577, %v4576
    %v4588 = vpack.c.bf16 %v4579, %v4578
    %v4589 = vpack.c.bf16 %v4581, %v4580
    %v4590 = vpack.c.bf16 %v415, %v412
    %v4591 = vpack.c.bf16 %v423, %v420
    %v4592 = vpack.c.bf16 %v527, %v524
    %v4593 = vpack.c.bf16 %v535, %v532
    %v4594 = vpack.c.bf16 %v4555, %v4552
    %v4595 = vpack.c.bf16 %v4563, %v4560
    %vm4596 = vcmask 793600
    %v4598 = vsel %vm4596, %v4582, 0
    %v4601 = vsel %vm4596, %v4583, 0
    %v4604 = vsel %vm4596, %v4584, 0
    %v4607 = vsel %vm4596, %v4585, 0
    %v4610 = vsel %vm4596, %v4586, 0
    %v4613 = vsel %vm4596, %v4587, 0
    %v4616 = vsel %vm4596, %v4588, 0
    %v4619 = vsel %vm4596, %v4589, 0
    %4621 = vmatprep.subr.bf16.mxu0 0
    %4622 = vmatpush1.bf16.msra.mxu0 %v4590
    %4623 = vmatprep.subr.bf16.mxu0 0
    %4624 = vmatpush1.bf16.msra.mxu0 %v4591
    %4625 = vmatprep.subr.bf16.mxu0 0
    %4626 = vmatpush1.bf16.msra.mxu0 %v4592
    %4627 = vmatprep.subr.bf16.mxu0 0
    %4628 = vmatpush1.bf16.msra.mxu0 %v4593
    %4629 = vmatprep.subr.bf16.mxu0 0
    %4630 = vmatpush1.bf16.msra.mxu0 %v4594
    %4631 = vmatprep.subr.bf16.mxu0 0
    %4632 = vmatpush1.bf16.msra.mxu0 %v4595
    %4633 = vmatprep.subr.bf16.mxu0 0
    %4634 = vmatpush1.bf16.msra.mxu0 %v267
    %4635 = vmatprep.subr.bf16.mxu0 0
    %4636 = vmatpush1.bf16.msra.mxu0 0
    %4637 = vmatprep.subr.bf16.mxu0 0
    %4638 = vmatpush1.bf16.msra.mxu0 0
    %4639 = vmatprep.subr.bf16.mxu0 0
    %4640 = vmatpush1.bf16.msra.mxu0 0
    %4641 = vmatprep.subr.bf16.mxu0 0
    %4642 = vmatpush1.bf16.msra.mxu0 0
    %4643 = vmatprep.subr.bf16.mxu0 0
    %4644 = vmatpush1.bf16.msra.mxu0 0
    %4645 = vmatprep.subr.bf16.mxu0 0
    %4646 = vmatpush1.bf16.msra.mxu0 0
    %4647 = vmatprep.subr.bf16.mxu0 0
    %4648 = vmatpush1.bf16.msra.mxu0 0
    %4649 = vmatprep.subr.bf16.mxu0 0
    %4650 = vmatpush1.bf16.msra.mxu0 0
    %4651 = vmatprep.subr.bf16.mxu0 0
    %4652 = vmatpush1.bf16.msra.mxu0 0
    %4653 = vmatprep.mubr.bf16.mxu0 0
    %4654 = vmatmul.mubr.bf16.gmra.mrb[0].mxu0 %v4598
    %v4655 = vpop.f32.mrb[0].mxu0
    %v4656 = vadd.f32 0.0, %v4655
    %v4657 = vpop.f32.mrb[0].mxu0
    %v4658 = vpop.f32.mrb[0].mxu0
    %v4659 = vadd.f32 0.0, %v4658
    %v4660 = vpop.f32.mrb[0].mxu0
    %4661 = vmatprep.mubr.bf16.mxu0 0
    %4662 = vmatmul.mubr.bf16.gmra.mrb[0].mxu0 %v4601
    %v4663 = vpop.f32.mrb[0].mxu0
    %v4664 = vadd.f32 0.0, %v4663
    %v4665 = vpop.f32.mrb[0].mxu0
    %v4666 = vpop.f32.mrb[0].mxu0
    %v4667 = vadd.f32 0.0, %v4666
    %v4668 = vpop.f32.mrb[0].mxu0
    %4669 = vmatprep.mubr.bf16.mxu0 0
    %4670 = vmatmul.mubr.bf16.gmra.mrb[0].mxu0 %v4604
    %v4671 = vpop.f32.mrb[0].mxu0
    %v4672 = vadd.f32 0.0, %v4671
    %v4673 = vpop.f32.mrb[0].mxu0
    %v4674 = vpop.f32.mrb[0].mxu0
    %v4675 = vadd.f32 0.0, %v4674
    %v4676 = vpop.f32.mrb[0].mxu0
    %4677 = vmatprep.mubr.bf16.mxu0 0
    %4678 = vmatmul.mubr.bf16.gmra.mrb[0].mxu0 %v4607
    %v4679 = vpop.f32.mrb[0].mxu0
    %v4680 = vadd.f32 0.0, %v4679
    %v4681 = vpop.f32.mrb[0].mxu0
    %v4682 = vpop.f32.mrb[0].mxu0
    %v4683 = vadd.f32 0.0, %v4682
    %v4684 = vpop.f32.mrb[0].mxu0
    %4685 = vmatprep.mubr.bf16.mxu0 0
    %4686 = vmatmul.mubr.bf16.gmra.mrb[0].mxu0 %v4610
    %v4687 = vpop.f32.mrb[0].mxu0
    %v4688 = vadd.f32 0.0, %v4687
    %v4689 = vpop.f32.mrb[0].mxu0
    %v4690 = vpop.f32.mrb[0].mxu0
    %v4691 = vadd.f32 0.0, %v4690
    %v4692 = vpop.f32.mrb[0].mxu0
    %4693 = vmatprep.mubr.bf16.mxu0 0
    %4694 = vmatmul.mubr.bf16.gmra.mrb[0].mxu0 %v4613
    %v4695 = vpop.f32.mrb[0].mxu0
    %v4696 = vadd.f32 0.0, %v4695
    %v4697 = vpop.f32.mrb[0].mxu0
    %v4698 = vpop.f32.mrb[0].mxu0
    %v4699 = vadd.f32 0.0, %v4698
    %v4700 = vpop.f32.mrb[0].mxu0
    %4701 = vmatprep.mubr.bf16.mxu0 0
    %4702 = vmatmul.mubr.bf16.gmra.mrb[0].mxu0 %v4616
    %v4703 = vpop.f32.mrb[0].mxu0
    %v4704 = vadd.f32 0.0, %v4703
    %v4705 = vpop.f32.mrb[0].mxu0
    %v4706 = vpop.f32.mrb[0].mxu0
    %v4707 = vadd.f32 0.0, %v4706
    %v4708 = vpop.f32.mrb[0].mxu0
    %4709 = vmatprep.mubr.bf16.mxu0 0
    %4710 = vmatmul.mubr.bf16.gmra.mrb[0].mxu0 %v4619
    %v4711 = vpop.f32.mrb[0].mxu0
    %v4712 = vadd.f32 0.0, %v4711
    %v4713 = vpop.f32.mrb[0].mxu0
    %v4714 = vpop.f32.mrb[0].mxu0
    %v4715 = vadd.f32 0.0, %v4714
    %v4716 = vpop.f32.mrb[0].mxu0
    %4717 = vdwg.mxu0
    %v4718 = vxor.u32 %v4656, 2147483648
    %v4719 = vxor.u32 %v4659, 2147483648
    %v4720 = vxor.u32 %v4664, 2147483648
    %v4721 = vxor.u32 %v4667, 2147483648
    %v4722 = vxor.u32 %v4672, 2147483648
    %v4723 = vxor.u32 %v4675, 2147483648
    %v4724 = vxor.u32 %v4680, 2147483648
    %v4725 = vxor.u32 %v4683, 2147483648
    %v4726 = vxor.u32 %v4688, 2147483648
    %v4727 = vxor.u32 %v4691, 2147483648
    %v4728 = vxor.u32 %v4696, 2147483648
    %v4729 = vxor.u32 %v4699, 2147483648
    %v4730 = vxor.u32 %v4704, 2147483648
    %v4731 = vxor.u32 %v4707, 2147483648
    %v4732 = vxor.u32 %v4712, 2147483648
    %v4733 = vxor.u32 %v4715, 2147483648
    %v4734 = vmul.f32 %v4718, 1.442695
    %v4735 = vpow.pop %v4734
    %v4736 = vmul.f32 %v4719, 1.442695
    %v4737 = vpow.pop %v4736
    %v4738 = vmul.f32 %v4720, 1.442695
    %v4739 = vpow.pop %v4738
    %v4740 = vmul.f32 %v4721, 1.442695
    %v4741 = vpow.pop %v4740
    %v4742 = vmul.f32 %v4722, 1.442695
    %v4743 = vpow.pop %v4742
    %v4744 = vmul.f32 %v4723, 1.442695
    %v4745 = vpow.pop %v4744
    %v4746 = vmul.f32 %v4724, 1.442695
    %v4747 = vpow.pop %v4746
    %v4748 = vmul.f32 %v4725, 1.442695
    %v4749 = vpow.pop %v4748
    %v4750 = vmul.f32 %v4726, 1.442695
    %v4751 = vpow.pop %v4750
    %v4752 = vmul.f32 %v4727, 1.442695
    %v4753 = vpow.pop %v4752
    %v4754 = vmul.f32 %v4728, 1.442695
    %v4755 = vpow.pop %v4754
    %v4756 = vmul.f32 %v4729, 1.442695
    %v4757 = vpow.pop %v4756
    %v4758 = vmul.f32 %v4730, 1.442695
    %v4759 = vpow.pop %v4758
    %v4760 = vmul.f32 %v4731, 1.442695
    %v4761 = vpow.pop %v4760
    %v4762 = vmul.f32 %v4732, 1.442695
    %v4763 = vpow.pop %v4762
    %v4764 = vmul.f32 %v4733, 1.442695
    %v4765 = vpow.pop %v4764
    %v4766 = vadd.f32 %v4735, 1.0
    %v4767 = vadd.f32 %v4737, 1.0
    %v4768 = vadd.f32 %v4739, 1.0
    %v4769 = vadd.f32 %v4741, 1.0
    %v4770 = vadd.f32 %v4743, 1.0
    %v4771 = vadd.f32 %v4745, 1.0
    %v4772 = vadd.f32 %v4747, 1.0
    %v4773 = vadd.f32 %v4749, 1.0
    %v4774 = vadd.f32 %v4751, 1.0
    %v4775 = vadd.f32 %v4753, 1.0
    %v4776 = vadd.f32 %v4755, 1.0
    %v4777 = vadd.f32 %v4757, 1.0
    %v4778 = vadd.f32 %v4759, 1.0
    %v4779 = vadd.f32 %v4761, 1.0
    %v4780 = vadd.f32 %v4763, 1.0
    %v4781 = vadd.f32 %v4765, 1.0
    %v4782 = vrcp.pop %v4766
    %v4783 = vmul.f32 1.0, %v4782
    %v4784 = vrcp.pop %v4767
    %v4785 = vmul.f32 1.0, %v4784
    %v4786 = vrcp.pop %v4768
    %v4787 = vmul.f32 1.0, %v4786
    %v4788 = vrcp.pop %v4769
    %v4789 = vmul.f32 1.0, %v4788
    %v4790 = vrcp.pop %v4770
    %v4791 = vmul.f32 1.0, %v4790
    %v4792 = vrcp.pop %v4771
    %v4793 = vmul.f32 1.0, %v4792
    %v4794 = vrcp.pop %v4772
    %v4795 = vmul.f32 1.0, %v4794
    %v4796 = vrcp.pop %v4773
    %v4797 = vmul.f32 1.0, %v4796
    %v4798 = vrcp.pop %v4774
    %v4799 = vmul.f32 1.0, %v4798
    %v4800 = vrcp.pop %v4775
    %v4801 = vmul.f32 1.0, %v4800
    %v4802 = vrcp.pop %v4776
    %v4803 = vmul.f32 1.0, %v4802
    %v4804 = vrcp.pop %v4777
    %v4805 = vmul.f32 1.0, %v4804
    %v4806 = vrcp.pop %v4778
    %v4807 = vmul.f32 1.0, %v4806
    %v4808 = vrcp.pop %v4779
    %v4809 = vmul.f32 1.0, %v4808
    %v4810 = vrcp.pop %v4780
    %v4811 = vmul.f32 1.0, %v4810
    %v4812 = vrcp.pop %v4781
    %v4813 = vmul.f32 1.0, %v4812
    %v4814 = vmul.f32 %v4656, %v4783
    %v4815 = vmul.f32 %v4659, %v4785
    %v4816 = vmul.f32 %v4664, %v4787
    %v4817 = vmul.f32 %v4667, %v4789
    %v4818 = vmul.f32 %v4672, %v4791
    %v4819 = vmul.f32 %v4675, %v4793
    %v4820 = vmul.f32 %v4680, %v4795
    %v4821 = vmul.f32 %v4683, %v4797
    %v4822 = vmul.f32 %v4688, %v4799
    %v4823 = vmul.f32 %v4691, %v4801
    %v4824 = vmul.f32 %v4696, %v4803
    %v4825 = vmul.f32 %v4699, %v4805
    %v4826 = vmul.f32 %v4704, %v4807
    %v4827 = vmul.f32 %v4707, %v4809
    %v4828 = vmul.f32 %v4712, %v4811
    %v4829 = vmul.f32 %v4715, %v4813
    %v4830 = vld [vmem:[%s5] sm:$0x77]
    %v4832 = vcombine.high %v4830, %v4830
    %v4834 = vpack.c.bf16 %v4830, %v4830
    %v4835 = vpack.c.bf16 %v4832, %v4832
    %v4836 = vpack.c.bf16 %v4815, %v4814
    %v4837 = vpack.c.bf16 %v4817, %v4816
    %v4838 = vpack.c.bf16 %v4819, %v4818
    %v4839 = vpack.c.bf16 %v4821, %v4820
    %v4840 = vpack.c.bf16 %v4823, %v4822
    %v4841 = vpack.c.bf16 %v4825, %v4824
    %v4842 = vpack.c.bf16 %v4827, %v4826
    %v4843 = vpack.c.bf16 %v4829, %v4828
    %v4845 = vsel %vm2475, %v4835, 0
    %4847 = vmatprep.subr.bf16.mxu0 0
    %4848 = vmatpush1.bf16.msra.mxu0 %v4836
    %4849 = vmatprep.subr.bf16.mxu0 0
    %4850 = vmatpush1.bf16.msra.mxu0 %v4837
    %4851 = vmatprep.subr.bf16.mxu0 0
    %4852 = vmatpush1.bf16.msra.mxu0 %v4838
    %4853 = vmatprep.subr.bf16.mxu0 0
    %4854 = vmatpush1.bf16.msra.mxu0 %v4839
    %4855 = vmatprep.subr.bf16.mxu0 0
    %4856 = vmatpush1.bf16.msra.mxu0 %v4840
    %4857 = vmatprep.subr.bf16.mxu0 0
    %4858 = vmatpush1.bf16.msra.mxu0 %v4841
    %4859 = vmatprep.subr.bf16.mxu0 0
    %4860 = vmatpush1.bf16.msra.mxu0 %v4842
    %4861 = vmatprep.subr.bf16.mxu0 0
    %4862 = vmatpush1.bf16.msra.mxu0 %v4843
    %4863 = vmatprep.subr.bf16.mxu0 0
    %4864 = vmatpush1.bf16.msra.mxu0 %v267
    %4865 = vmatprep.subr.bf16.mxu0 0
    %4866 = vmatpush1.bf16.msra.mxu0 0
    %4867 = vmatprep.subr.bf16.mxu0 0
    %4868 = vmatpush1.bf16.msra.mxu0 0
    %4869 = vmatprep.subr.bf16.mxu0 0
    %4870 = vmatpush1.bf16.msra.mxu0 0
    %4871 = vmatprep.subr.bf16.mxu0 0
    %4872 = vmatpush1.bf16.msra.mxu0 0
    %4873 = vmatprep.subr.bf16.mxu0 0
    %4874 = vmatpush1.bf16.msra.mxu0 0
    %4875 = vmatprep.subr.bf16.mxu0 0
    %4876 = vmatpush1.bf16.msra.mxu0 0
    %4877 = vmatprep.subr.bf16.mxu0 0
    %4878 = vmatpush1.bf16.msra.mxu0 0
    %4879 = vmatprep.mubr.bf16.mxu0 %v4845
    %4880 = vmatmul.mubr.bf16.gmra.mrb[0].mxu0 %v4834
    %v4881 = vpop.f32.mrb[0].mxu0
    %v4882 = vadd.f32 0.0, %v4881
    %v4883 = vpop.f32.mrb[0].mxu0
    %v4884 = vpop.f32.mrb[0].mxu0
    %v4885 = vpop.f32.mrb[0].mxu0
    %4886 = vdwg.mxu0
    %v4887 = vmul.f32 %v4882, %v577
    %v4888 = vmul.f32 %v4882, %v597
    %v4890 = vrot.slane %v4888, 1
    %v4892 = vadd.f32 %v4887, %v4890
    %v4894 = vrot.slane %v613, 7
    %v4896 = vmul.f32 %v4882, %v4894
    %v4898 = vrot.slane %v4896, 2
    %v4900 = vadd.f32 %v4892, %v4898
    %v4902 = vrot.slane %v581, 1
    %v4904 = vmul.f32 %v4882, %v4902
    %v4905 = vrot.slane %v601, 1
    %v4907 = vmul.f32 %v4882, %v4905
    %v4909 = vrot.slane %v4907, 1
    %v4911 = vadd.f32 %v4904, %v4909
    %v4912 = vmul.f32 %v4882, %v622
    %v4914 = vrot.slane %v4912, 2
    %v4916 = vadd.f32 %v4911, %v4914
    %v4918 = vrot.slane %v584, 2
    %v4920 = vmul.f32 %v4882, %v4918
    %v4921 = vmul.f32 %v4882, %v606
    %v4923 = vrot.slane %v4921, 1
    %v4925 = vadd.f32 %v4920, %v4923
    %v4927 = vrot.slane %v631, 6
    %v4929 = vmul.f32 %v4882, %v4927
    %v4931 = vrot.slane %v4929, 2
    %v4933 = vadd.f32 %v4925, %v4931
    %v4935 = vrot.slane %v4916, 7
    %v4938 = vrot.slane %v4933, 6
    %v4940 = vsel %vm263, %v4900, %v4935
    %v4941 = vsel %vm4288, %v4940, %v4938
    %v4942 = vpack.c.bf16 %v4941, %v4941
    %v4943 = vsel %vm215, 1, 0
    %v4944 = vsel %vm216, 1, 0
    %v4945 = vsel %vm217, 1, 0
    %v4946 = vsel %vm218, 1, 0
    %v4947 = vsel %vm219, 1, 0
    %v4948 = vsel %vm220, 1, 0
    %v4949 = vsel %vm221, 1, 0
    %v4950 = vsel %vm222, 1, 0
    %v4951 = vsel %vm223, 1, 0
    %v4952 = vsel %vm224, 1, 0
    %v4953 = vsel %vm225, 1, 0
    %v4954 = vsel %vm226, 1, 0
    %v4955 = vsel %vm227, 1, 0
    %v4956 = vsel %vm228, 1, 0
    %v4957 = vsel %vm229, 1, 0
    %v4958 = vsel %vm230, 1, 0
    %v4959 = vcvt.s32.f32 %v4943
    %v4960 = vcvt.s32.f32 %v4944
    %v4961 = vcvt.s32.f32 %v4945
    %v4962 = vcvt.s32.f32 %v4946
    %v4963 = vcvt.s32.f32 %v4947
    %v4964 = vcvt.s32.f32 %v4948
    %v4965 = vcvt.s32.f32 %v4949
    %v4966 = vcvt.s32.f32 %v4950
    %v4967 = vcvt.s32.f32 %v4951
    %v4968 = vcvt.s32.f32 %v4952
    %v4969 = vcvt.s32.f32 %v4953
    %v4970 = vcvt.s32.f32 %v4954
    %v4971 = vcvt.s32.f32 %v4955
    %v4972 = vcvt.s32.f32 %v4956
    %v4973 = vcvt.s32.f32 %v4957
    %v4974 = vcvt.s32.f32 %v4958
    %v4975 = vpack.c.bf16 %v4960, %v4959
    %v4976 = vpack.c.bf16 %v4962, %v4961
    %v4977 = vpack.c.bf16 %v4964, %v4963
    %v4978 = vpack.c.bf16 %v4966, %v4965
    %v4979 = vpack.c.bf16 %v4968, %v4967
    %v4980 = vpack.c.bf16 %v4970, %v4969
    %v4981 = vpack.c.bf16 %v4972, %v4971
    %v4982 = vpack.c.bf16 %v4974, %v4973
    %4983 = vmatprep.subr.bf16.mxu0 0
    %4984 = vmatpush1.bf16.msra.mxu0 %v4975
    %4985 = vmatprep.subr.bf16.mxu0 0
    %4986 = vmatpush1.bf16.msra.mxu0 %v4976
    %4987 = vmatprep.subr.bf16.mxu0 0
    %4988 = vmatpush1.bf16.msra.mxu0 %v4977
    %4989 = vmatprep.subr.bf16.mxu0 0
    %4990 = vmatpush1.bf16.msra.mxu0 %v4978
    %4991 = vmatprep.subr.bf16.mxu0 0
    %4992 = vmatpush1.bf16.msra.mxu0 %v4979
    %4993 = vmatprep.subr.bf16.mxu0 0
    %4994 = vmatpush1.bf16.msra.mxu0 %v4980
    %4995 = vmatprep.subr.bf16.mxu0 0
    %4996 = vmatpush1.bf16.msra.mxu0 %v4981
    %4997 = vmatprep.subr.bf16.mxu0 0
    %4998 = vmatpush1.bf16.msra.mxu0 %v4982
    %4999 = vmatprep.subr.bf16.mxu0 0
    %5000 = vmatpush1.bf16.msra.mxu0 0
    %5001 = vmatprep.subr.bf16.mxu0 0
    %5002 = vmatpush1.bf16.msra.mxu0 0
    %5003 = vmatprep.subr.bf16.mxu0 0
    %5004 = vmatpush1.bf16.msra.mxu0 0
    %5005 = vmatprep.subr.bf16.mxu0 0
    %5006 = vmatpush1.bf16.msra.mxu0 0
    %5007 = vmatprep.subr.bf16.mxu0 0
    %5008 = vmatpush1.bf16.msra.mxu0 0
    %5009 = vmatprep.subr.bf16.mxu0 0
    %5010 = vmatpush1.bf16.msra.mxu0 0
    %5011 = vmatprep.subr.bf16.mxu0 0
    %5012 = vmatpush1.bf16.msra.mxu0 0
    %5013 = vmatprep.subr.bf16.mxu0 0
    %5014 = vmatpush1.bf16.msra.mxu0 0
    %5015 = vmatprep.mubr.bf16.mxu0 0
    %5016 = vmatmul.mubr.bf16.gmra.mrb[0].mxu0 %v4942
    %v5017 = vpop.f32.mrb[0].mxu0
    %v5018 = vadd.f32 0.0, %v5017
    %v5019 = vpop.f32.mrb[0].mxu0
    %v5020 = vpop.f32.mrb[0].mxu0
    %v5021 = vpop.f32.mrb[0].mxu0
    %5022 = vdwg.mxu0
    %v5023 = vsub.f32 %v5018, %v31
    %v5024 = vmul.f32 %v5023, %v5023
    %v5026 = vrot.slane %v5024, 1
    %v5028 = vadd.f32 %v5024, %v5026
    %v5029 = vrot.slane %v5024, 2
    %v5031 = vadd.f32 %v5028, %v5029
    %v5033 = vrot.slane %v32, 1
    %v5035 = vmul.f32 %v5031, %v5033
    %v5036 = vlaneseq
    %v5037 = vshrl.u32 %v5036, 7
    %v5038 = vsub.s32 0, %v5037
    %v5039 = vrot.slane %v5035, %v5038
    %v5040 = vmul.f32 %v238, %v5039
    %v5041 = vsel %vm4288, %v5040, 0.0
    %5042 = vadd.xlane.f32.xlu0 %v5041
    %v5043 = vpop.xlane.xlu0 %5042
    %v5044 = vsel %vm4288, %v238, 0.0
    %5045 = vadd.xlane.f32.xlu0 %v5044
    %v5046 = vpop.xlane.xlu0 %5045
    %v5047 = vmax.f32 %v5046, 1.0
    %v5048 = vrcp.pop %v5047
    %v5049 = vmul.f32 %v5043, %v5048
    %v5050 = vsel %vm4288, %v5049, 0.0
    %v5051 = vrot.slane %v5050, 4
    %v5052 = vadd.f32 %v5050, %v5051
    %v5053 = vrot.slane %v5052, 2
    %v5054 = vadd.f32 %v5052, %v5053
    %v5055 = vrot.slane %v5054, 1
    %v5056 = vadd.f32 %v5054, %v5055
    %v5057 = vmul.f32 %v5056, 0.5
    %vm5058 = vcmask 0
    %5059 = vst.msk [vmem:[#allocation2] sm:$0x1] %vm5058, %v5057
    // Predicated region
    $region26: #{sde_model_forward.1} parent=1 // pred_check
      _
    $region27: #{sde_model_forward.1} parent=1 // pred_check_branch
      %5061 = sbr.rel (0) target = $region29
    $region28: #{sde_model_forward.1} parent=1 // pred_region
      %s5063 = ssub.s32 16, 16
      %5064 = vsyncadd [#allocation3], %s5063
      %s5066 = sshll.u32 [#allocation2], 4
      %s5067 = int_to_ptr.vmem [resolvable:$true] %s5066
      %5069 = dma.vmem_to_hbm [thread:$0]  %s5067, 16, %s6, [#allocation3]
    $region29: #{sde_model_forward.1} parent=1 // pred_fallthru
      _
    // Predicated region
    $region30: #{sde_model_forward.1} parent=1 // pred_check
      _
    $region31: #{sde_model_forward.1} parent=1 // pred_check_branch
      %5071 = sbr.rel (0) target = $region33
    $region32: #{sde_model_forward.1} parent=1 // pred_region
      %5072 = dma.done [#allocation3], 16
    $region33: #{sde_model_forward.1} parent=1 // pred_fallthru
      _
    %5073 = vsyncpa [#allocation3], 1

</llo_original>
